<compile_context>
chip_gen: v5e
topology: v5e:2x2
jax: 0.10.0
libtpu: 0.0.40
codegen_flags: <defaults>
</compile_context>

<pallas_src>
import functools

import jax
import jax.numpy as jnp
from jax.experimental import pallas as pl
from jax.experimental.pallas import tpu as pltpu

_BN_EPS = 1e-5


# ---------------------------------------------------------------------------
# The single fused kernel
# ---------------------------------------------------------------------------
def _vae_kernel(p1_ref, w1_ref, b1_ref, w2_ref, b2_ref,
                wh_ref, bh_ref, eps_ref, w3_ref, b3_ref,
                wd1_ref, bd1_ref, g1_ref, be1_ref,
                wd2_ref, bd2_ref, g2_ref, be2_ref,
                w3m_ref, b3d_ref,
                head_ref, dec_ref,
                acc_ref, *, n):
    f32 = jnp.float32

    # ---------------- encoder: conv1(1->32,k3,s2)+ReLU then conv2(32->64,k3,s2)
    # p1_ref[t] holds the conv1 input patches evaluated at the positions that
    # conv2 tap t = (kh2,kw2) needs; rows are ordered (spatial s, batch n).
    h2 = None
    for t in range(9):
        a = jnp.dot(p1_ref[t], w1_ref[...], preferred_element_type=f32)
        a = jnp.maximum(a + b1_ref[...], 0.0)                       # (4n, 32)
        c = jnp.dot(a, w2_ref[t], preferred_element_type=f32)       # (4n, 64)
        h2 = c if h2 is None else h2 + c
    h2 = jnp.maximum(h2 + b2_ref[...], 0.0)                         # (4n, 64)

    # ---------------- fc1|fc2 fused into one 128-lane head + sampling + fc3
    head = None
    for s in range(4):
        c = jnp.dot(h2[s * n:(s + 1) * n, :], wh_ref[s],
                    preferred_element_type=f32)                     # (n, 128)
        head = c if head is None else head + c
    head = head + bh_ref[...]
    head_ref[...] = head                                            # [mu | logvar]
    mu = head[:, 0:64]
    logvar = head[:, 64:128]
    z = eps_ref[...] * jnp.exp(0.5 * logvar) + mu                   # (n, 64)
    h3 = jnp.dot(z, w3_ref[...], preferred_element_type=f32) + b3_ref[...]  # (n,196)

    # ---------------- dconv1: ConvT(196->128,k4,s1) on 1x1 input == linear map
    # result layout: rows = (kh, n)  -> 4n rows, cols = (kw, co) -> 512 lanes
    d1 = jnp.concatenate(
        [jnp.dot(h3, wd1_ref[i], preferred_element_type=f32) for i in range(4)],
        axis=0) + bd1_ref[...]                                      # (4n, 512)

    # BatchNorm(128, batch stats, biased var) + ReLU as a fused single-pass epilogue
    inv1 = 1.0 / (16 * n)                                           # N*4*4 elems / ch
    s1 = jnp.sum(d1, axis=0, keepdims=True)                         # (1, 512)
    q1 = jnp.sum(d1 * d1, axis=0, keepdims=True)
    s1 = s1[:, 0:128] + s1[:, 128:256] + s1[:, 256:384] + s1[:, 384:512]
    q1 = q1[:, 0:128] + q1[:, 128:256] + q1[:, 256:384] + q1[:, 384:512]
    mean1 = s1 * inv1
    var1 = q1 * inv1 - mean1 * mean1
    sc1 = g1_ref[...] * jax.lax.rsqrt(var1 + _BN_EPS)
    sh1 = be1_ref[...] - mean1 * sc1
    sc1 = jnp.concatenate([sc1] * 4, axis=1)                        # (1, 512)
    sh1 = jnp.concatenate([sh1] * 4, axis=1)
    d1 = jnp.maximum(d1 * sc1 + sh1, 0.0)                           # (4n, 512)

    # ---------------- dconv2: ConvT(128->32,k4,s1), 4x4 -> 7x7, as 4 shifted
    # matmuls (width scatter folded into the block-banded weights wd2[kh]).
    # accumulator layout: rows = (out_row i, n) -> 7n rows, cols = (out_col j, co)
    acc_ref[...] = jnp.zeros((7 * n, 224), f32)
    for kh in range(4):
        contrib = jnp.dot(d1, wd2_ref[kh], preferred_element_type=f32)  # (4n, 224)
        rows = pl.ds(kh * n, 4 * n)
        acc_ref[rows, :] = acc_ref[rows, :] + contrib
    d2 = acc_ref[...] + bd2_ref[...]                                # (7n, 224)

    # BatchNorm(32, batch stats) + ReLU
    inv2 = 1.0 / (49 * n)                                           # N*7*7 elems / ch
    s2 = jnp.sum(d2, axis=0, keepdims=True)                         # (1, 224)
    q2 = jnp.sum(d2 * d2, axis=0, keepdims=True)
    s2c = s2[:, 0:32]
    q2c = q2[:, 0:32]
    for j in range(1, 7):
        s2c = s2c + s2[:, 32 * j:32 * (j + 1)]
        q2c = q2c + q2[:, 32 * j:32 * (j + 1)]
    mean2 = s2c * inv2
    var2 = q2c * inv2 - mean2 * mean2
    sc2 = g2_ref[...] * jax.lax.rsqrt(var2 + _BN_EPS)
    sh2 = be2_ref[...] - mean2 * sc2
    sc2 = jnp.concatenate([sc2] * 7, axis=1)                        # (1, 224)
    sh2 = jnp.concatenate([sh2] * 7, axis=1)
    d2 = jnp.maximum(d2 * sc2 + sh2, 0.0)                           # (7n, 224)

    # ---------------- dconv3: ConvT(32->1,k2,s2) + sigmoid (block-diag matmul)
    dec = jnp.dot(d2, w3m_ref[...], preferred_element_type=f32) + b3d_ref[...]
    dec_ref[...] = jax.nn.sigmoid(dec)                              # (7n, 28)


def _full_spec(shape):
    nd = len(shape)
    return pl.BlockSpec(tuple(shape), lambda i, _nd=nd: (0,) * _nd)


# ---------------------------------------------------------------------------
# One-time weight preprocessing (hoisted out of the per-call hot path)
# ---------------------------------------------------------------------------
def prepare_params(params):
    prep = {}
    # encoder convs -> im2col matmul form
    prep["w1m"] = jnp.transpose(params["conv1_w"], (2, 3, 1, 0)).reshape(9, 32)
    prep["b1"] = params["conv1_b"].reshape(1, 32)
    prep["w2m"] = jnp.transpose(params["conv2_w"], (2, 3, 1, 0)).reshape(9, 32, 64)
    prep["b2"] = params["conv2_b"].reshape(1, 64)
    # fc1 & fc2 concatenated into one (256,128) weight, then split per spatial s
    wcat = jnp.concatenate([params["fc1_w"].T, params["fc2_w"].T], axis=1)  # (256,128)
    prep["wh"] = jnp.transpose(wcat.reshape(64, 4, 128), (1, 0, 2))         # (4,64,128)
    prep["bh"] = jnp.concatenate([params["fc1_b"], params["fc2_b"]]).reshape(1, 128)
    prep["fc3T"] = params["fc3_w"].T                                        # (64,196)
    prep["b3"] = params["fc3_b"].reshape(1, 196)
    # dconv1: per-output-row (kh) weight slabs, cols ordered (kw, co)
    prep["wd1"] = jnp.transpose(params["dconv1_w"], (2, 0, 3, 1)).reshape(4, 196, 512)
    prep["bd1"] = jnp.tile(params["dconv1_b"].reshape(1, 128), (1, 4))      # (1,512)
    prep["g1"] = params["bn1_gamma"].reshape(1, 128)
    prep["be1"] = params["bn1_beta"].reshape(1, 128)
    # dconv2: 4 kh-tap block-banded weights, rows=(kw_in,ci), cols=(out_col j,co)
    w = params["dconv2_w"]                                  # (128, 32, 4, 4)
    jprime = jnp.arange(4)[:, None]
    jout = jnp.arange(7)[None, :]
    kw = jout - jprime                                      # (4, 7)
    valid = ((kw >= 0) & (kw <= 3)).astype(jnp.float32)
    wt = w[:, :, :, jnp.clip(kw, 0, 3)]                     # (128,32,4,4,7)
    wt = wt * valid[None, None, None, :, :]
    prep["wd2"] = jnp.transpose(wt, (2, 3, 0, 4, 1)).reshape(4, 512, 224)
    prep["bd2"] = jnp.tile(params["dconv2_b"].reshape(1, 32), (1, 7))       # (1,224)
    prep["g2"] = params["bn2_gamma"].reshape(1, 32)
    prep["be2"] = params["bn2_beta"].reshape(1, 32)
    # dconv3: block-diagonal depth-to-space matmul
    w3 = params["dconv3_w"][:, 0].reshape(32, 4)            # (co, di*2+dj)
    prep["w3m"] = jnp.einsum("jk,cq->jckq", jnp.eye(7, dtype=jnp.float32),
                             w3).reshape(224, 28)
    prep["b3d"] = jnp.full((1, 28), params["dconv3_b"][0], jnp.float32)
    return {k: jnp.asarray(v, jnp.float32) for k, v in prep.items()}


# ---------------------------------------------------------------------------
# Forward pass (single pallas_call + tiny JAX glue on the raw input / output)
# ---------------------------------------------------------------------------
def vae_pallas_forward(prep, x_nchw, eps_noise):
    N = x_nchw.shape[0]

    # Input-dependent glue (tiny): conv1 patches gathered at the positions
    # needed by each conv2 tap.  P1[t2, s*N+n, t1] = x[n,0, 4i+2kh2+kh1, 4j+2kw2+kw1]
    t2 = jnp.arange(9)
    kh2, kw2 = t2 // 3, t2 % 3
    s = jnp.arange(4)
    si, sj = s // 2, s % 2
    t1 = jnp.arange(9)
    kh1, kw1 = t1 // 3, t1 % 3
    hidx = 4 * si[None, :, None] + 2 * kh2[:, None, None] + kh1[None, None, :]
    widx = 4 * sj[None, :, None] + 2 * kw2[:, None, None] + kw1[None, None, :]
    p1 = x_nchw[:, 0][:, hidx, widx]                        # (N, 9, 4, 9)
    p1 = jnp.transpose(p1, (1, 2, 0, 3)).reshape(9, 4 * N, 9)

    operands = (p1, prep["w1m"], prep["b1"], prep["w2m"], prep["b2"],
                prep["wh"], prep["bh"], eps_noise, prep["fc3T"], prep["b3"],
                prep["wd1"], prep["bd1"], prep["g1"], prep["be1"],
                prep["wd2"], prep["bd2"], prep["g2"], prep["be2"],
                prep["w3m"], prep["b3d"])

    head, dec = pl.pallas_call(
        functools.partial(_vae_kernel, n=N),
        out_shape=(jax.ShapeDtypeStruct((N, 128), jnp.float32),
                   jax.ShapeDtypeStruct((7 * N, 28), jnp.float32)),
        grid=(1,),
        in_specs=[_full_spec(a.shape) for a in operands],
        out_specs=(_full_spec((N, 128)), _full_spec((7 * N, 28))),
        scratch_shapes=[pltpu.VMEM((7 * N, 224), jnp.float32)],
        compiler_params=pltpu.CompilerParams(
            dimension_semantics=("arbitrary",)),
    )(*operands)

    mu = head[:, :64]
    logvar = head[:, 64:]
    # dec rows = (i, n), cols = (j, di, dj)  -> NCHW (N, 1, 14, 14)
    dec = dec.reshape(7, N, 7, 2, 2)
    dec = jnp.transpose(dec, (1, 0, 3, 2, 4)).reshape(N, 14, 14)
    return dec[:, None, :, :], mu, logvar


# ---------------------------------------------------------------------------
# Pure-JAX reference (same math as the PyTorch module) for self-validation
# ---------------------------------------------------------------------------
def _reference_forward(params, x_nchw, eps_noise):
    N = x_nchw.shape[0]

    def im2col(x_nhwc, k, stride):
        n, h, w, c = x_nhwc.shape
        oh = (h - k) // stride + 1
        ow = (w - k) // stride + 1
        ih = (jnp.arange(oh) * stride)[:, None] + jnp.arange(k)[None, :]
        iw = (jnp.arange(ow) * stride)[:, None] + jnp.arange(k)[None, :]
        p = x_nhwc[:, ih][:, :, :, iw]
        p = jnp.transpose(p, (0, 1, 3, 2, 4, 5))
        return p.reshape(n * oh * ow, k * k * c), oh, ow

    def bn(rows, g, b, eps=_BN_EPS):
        m = jnp.mean(rows, axis=0, keepdims=True)
        v = jnp.mean((rows - m) ** 2, axis=0, keepdims=True)
        return (rows - m) * jax.lax.rsqrt(v + eps) * g + b

    x = jnp.transpose(x_nchw, (0, 2, 3, 1))
    p1, oh1, ow1 = im2col(x, 3, 2)
    w1m = jnp.transpose(params["conv1_w"], (2, 3, 1, 0)).reshape(9, 32)
    h1 = jnp.maximum(p1 @ w1m + params["conv1_b"], 0.0).reshape(N, oh1, ow1, 32)
    p2, oh2, ow2 = im2col(h1, 3, 2)
    w2m = jnp.transpose(params["conv2_w"], (2, 3, 1, 0)).reshape(288, 64)
    h2 = jnp.maximum(p2 @ w2m + params["conv2_b"], 0.0).reshape(N, oh2, ow2, 64)
    flat = jnp.transpose(h2, (0, 3, 1, 2)).reshape(N, 256)
    mu = flat @ params["fc1_w"].T + params["fc1_b"]
    logvar = flat @ params["fc2_w"].T + params["fc2_b"]
    z = eps_noise * jnp.exp(0.5 * logvar) + mu
    h3 = z @ params["fc3_w"].T + params["fc3_b"]

    wt1 = params["dconv1_w"].reshape(196, 128 * 16)
    d1 = (h3 @ wt1 + jnp.repeat(params["dconv1_b"], 16)).reshape(N, 128, 4, 4)
    d1 = jnp.transpose(d1, (0, 2, 3, 1)).reshape(N * 16, 128)
    d1 = jnp.maximum(bn(d1, params["bn1_gamma"], params["bn1_beta"]), 0.0)
    d1 = d1.reshape(N, 4, 4, 128)
    d1p = jnp.pad(d1, ((0, 0), (3, 3), (3, 3), (0, 0)))
    p3, _, _ = im2col(d1p, 4, 1)
    wt2 = jnp.transpose(params["dconv2_w"][:, :, ::-1, ::-1],
                        (2, 3, 0, 1)).reshape(2048, 32)
    d2 = p3 @ wt2 + params["dconv2_b"]
    d2 = jnp.maximum(bn(d2, params["bn2_gamma"], params["bn2_beta"]), 0.0)
    wt3 = params["dconv3_w"].reshape(32, 4)
    d3 = jax.nn.sigmoid(d2 @ wt3 + jnp.repeat(params["dconv3_b"], 4))
    d3 = d3.reshape(N, 7, 7, 2, 2)
    d3 = jnp.transpose(d3, (0, 1, 3, 2, 4)).reshape(N, 14, 14)
    return d3[:, None, :, :], mu, logvar


# ---------------------------------------------------------------------------
# Parameters (deterministic synthetic init, PyTorch-like uniform bounds)
# ---------------------------------------------------------------------------
def init_params(key):
    ks = jax.random.split(key, 16)

    def u(k, shape, fan_in):
        bound = 1.0 / float(fan_in) ** 0.5
        return jax.random.uniform(k, shape, jnp.float32, -bound, bound)

    return {
        "conv1_w": u(ks[0], (32, 1, 3, 3), 9),
        "conv1_b": u(ks[1], (32,), 9),
        "conv2_w": u(ks[2], (64, 32, 3, 3), 288),
        "conv2_b": u(ks[3], (64,), 288),
        "fc1_w": u(ks[4], (64, 256), 256),
        "fc1_b": u(ks[5], (64,), 256),
        "fc2_w": u(ks[6], (64, 256), 256),
        "fc2_b": u(ks[7], (64,), 256),
        "fc3_w": u(ks[8], (196, 64), 64),
        "fc3_b": u(ks[9], (196,), 64),
        "dconv1_w": u(ks[10], (196, 128, 4, 4), 196 * 16),
        "dconv1_b": u(ks[11], (128,), 196 * 16),
        "dconv2_w": u(ks[12], (128, 32, 4, 4), 128 * 16),
        "dconv2_b": u(ks[13], (32,), 128 * 16),
        "dconv3_w": u(ks[14], (32, 1, 2, 2), 32 * 4),
        "dconv3_b": u(ks[15], (1,), 32 * 4),
        "bn1_gamma": jnp.ones((128,), jnp.float32),
        "bn1_beta": jnp.zeros((128,), jnp.float32),
        "bn2_gamma": jnp.ones((32,), jnp.float32),
        "bn2_beta": jnp.zeros((32,), jnp.float32),
    }


# ---------------------------------------------------------------------------
if __name__ == "__main__":
    key = jax.random.PRNGKey(0)
    pkey, xkey, ekey = jax.random.split(key, 3)

    params = init_params(pkey)
    prep = prepare_params(params)          # one-time weight prep (off hot path)

    # 12x12 single-channel input -> encoder flatten is exactly 64*2*2 = 256
    x = jax.random.uniform(xkey, (2, 1, 12, 12), jnp.float32)
    eps_noise = jax.random.normal(ekey, (2, 64), jnp.float32)

    fwd = jax.jit(vae_pallas_forward)
    decoded, mu, logvar = fwd(prep, x, eps_noise)
    jax.block_until_ready((decoded, mu, logvar))

    assert decoded.shape == (2, 1, 14, 14)
    assert mu.shape == (2, 64) and logvar.shape == (2, 64)
    assert bool(jnp.all(decoded >= 0.0) & jnp.all(decoded <= 1.0))

    # numeric check against a pure-JAX reference of the PyTorch module
    ref_dec, ref_mu, ref_lv = jax.jit(_reference_forward)(params, x, eps_noise)
    assert bool(jnp.allclose(mu, ref_mu, atol=2e-3, rtol=2e-3))
    assert bool(jnp.allclose(logvar, ref_lv, atol=2e-3, rtol=2e-3))
    assert bool(jnp.allclose(decoded, ref_dec, atol=2e-3, rtol=2e-3))

    print("KERNEL_OK")
</pallas_src>

<mosaic_0001>
module attributes {stable_mosaic.version = 11 : i64} {
  func.func @_vae_kernel(%arg0: i32, %arg1: memref<9x8x9xf32, #tpu.memory_space<vmem>>, %arg2: memref<9x32xf32, #tpu.memory_space<vmem>>, %arg3: memref<1x32xf32, #tpu.memory_space<vmem>>, %arg4: memref<9x32x64xf32, #tpu.memory_space<vmem>>, %arg5: memref<1x64xf32, #tpu.memory_space<vmem>>, %arg6: memref<4x64x128xf32, #tpu.memory_space<vmem>>, %arg7: memref<1x128xf32, #tpu.memory_space<vmem>>, %arg8: memref<2x64xf32, #tpu.memory_space<vmem>>, %arg9: memref<64x196xf32, #tpu.memory_space<vmem>>, %arg10: memref<1x196xf32, #tpu.memory_space<vmem>>, %arg11: memref<4x196x512xf32, #tpu.memory_space<vmem>>, %arg12: memref<1x512xf32, #tpu.memory_space<vmem>>, %arg13: memref<1x128xf32, #tpu.memory_space<vmem>>, %arg14: memref<1x128xf32, #tpu.memory_space<vmem>>, %arg15: memref<4x512x224xf32, #tpu.memory_space<vmem>>, %arg16: memref<1x224xf32, #tpu.memory_space<vmem>>, %arg17: memref<1x32xf32, #tpu.memory_space<vmem>>, %arg18: memref<1x32xf32, #tpu.memory_space<vmem>>, %arg19: memref<224x28xf32, #tpu.memory_space<vmem>>, %arg20: memref<1x28xf32, #tpu.memory_space<vmem>>, %arg21: memref<2x128xf32, #tpu.memory_space<vmem>>, %arg22: memref<14x28xf32, #tpu.memory_space<vmem>>, %arg23: memref<14x224xf32, #tpu.memory_space<vmem>>) attributes {dimension_semantics = [#tpu.dimension_semantics<arbitrary>], iteration_bounds = array<i64: 1>, scalar_prefetch = 0 : i64, scratch_operands = 1 : i64, tpu.core_type = #tpu.core_type<tc>, window_params = [{pipeline_mode = #tpu.pipeline_mode<synchronous>, transform_indices = @transform_0, window_bounds = array<i64: 9, 8, 9>}, {pipeline_mode = #tpu.pipeline_mode<synchronous>, transform_indices = @transform_1, window_bounds = array<i64: 9, 32>}, {pipeline_mode = #tpu.pipeline_mode<synchronous>, transform_indices = @transform_2, window_bounds = array<i64: 1, 32>}, {pipeline_mode = #tpu.pipeline_mode<synchronous>, transform_indices = @transform_3, window_bounds = array<i64: 9, 32, 64>}, {pipeline_mode = #tpu.pipeline_mode<synchronous>, transform_indices = @transform_4, window_bounds = array<i64: 1, 64>}, {pipeline_mode = #tpu.pipeline_mode<synchronous>, transform_indices = @transform_5, window_bounds = array<i64: 4, 64, 128>}, {pipeline_mode = #tpu.pipeline_mode<synchronous>, transform_indices = @transform_6, window_bounds = array<i64: 1, 128>}, {pipeline_mode = #tpu.pipeline_mode<synchronous>, transform_indices = @transform_7, window_bounds = array<i64: 2, 64>}, {pipeline_mode = #tpu.pipeline_mode<synchronous>, transform_indices = @transform_8, window_bounds = array<i64: 64, 196>}, {pipeline_mode = #tpu.pipeline_mode<synchronous>, transform_indices = @transform_9, window_bounds = array<i64: 1, 196>}, {pipeline_mode = #tpu.pipeline_mode<synchronous>, transform_indices = @transform_10, window_bounds = array<i64: 4, 196, 512>}, {pipeline_mode = #tpu.pipeline_mode<synchronous>, transform_indices = @transform_11, window_bounds = array<i64: 1, 512>}, {pipeline_mode = #tpu.pipeline_mode<synchronous>, transform_indices = @transform_12, window_bounds = array<i64: 1, 128>}, {pipeline_mode = #tpu.pipeline_mode<synchronous>, transform_indices = @transform_13, window_bounds = array<i64: 1, 128>}, {pipeline_mode = #tpu.pipeline_mode<synchronous>, transform_indices = @transform_14, window_bounds = array<i64: 4, 512, 224>}, {pipeline_mode = #tpu.pipeline_mode<synchronous>, transform_indices = @transform_15, window_bounds = array<i64: 1, 224>}, {pipeline_mode = #tpu.pipeline_mode<synchronous>, transform_indices = @transform_16, window_bounds = array<i64: 1, 32>}, {pipeline_mode = #tpu.pipeline_mode<synchronous>, transform_indices = @transform_17, window_bounds = array<i64: 1, 32>}, {pipeline_mode = #tpu.pipeline_mode<synchronous>, transform_indices = @transform_18, window_bounds = array<i64: 224, 28>}, {pipeline_mode = #tpu.pipeline_mode<synchronous>, transform_indices = @transform_19, window_bounds = array<i64: 1, 28>}, {pipeline_mode = #tpu.pipeline_mode<synchronous>, transform_indices = @transform_20, window_bounds = array<i64: 2, 128>}, {pipeline_mode = #tpu.pipeline_mode<synchronous>, transform_indices = @transform_21, window_bounds = array<i64: 14, 28>}]} {
    %c0 = arith.constant 0 : index
    %c0_0 = arith.constant 0 : index
    %c0_1 = arith.constant 0 : index
    %0 = vector.load %arg1[%c0, %c0_0, %c0_1] : memref<9x8x9xf32, #tpu.memory_space<vmem>>, vector<1x8x9xf32>
    %1 = vector.shape_cast %0 : vector<1x8x9xf32> to vector<8x9xf32>
    %c0_2 = arith.constant 0 : index
    %c0_3 = arith.constant 0 : index
    %2 = vector.load %arg2[%c0_2, %c0_3] : memref<9x32xf32, #tpu.memory_space<vmem>>, vector<9x32xf32>
    %cst = arith.constant dense<0.000000e+00> : vector<8x32xf32>
    %3 = tpu.matmul %1, %2, %cst {dimension_numbers = #tpu.dot_dimension_numbers<[1], [0], [0], [1], [0, 0, 1, 1], [], []>} : vector<8x9xf32>, vector<9x32xf32>, vector<8x32xf32> -> vector<8x32xf32>
    %c0_4 = arith.constant 0 : index
    %c0_5 = arith.constant 0 : index
    %4 = vector.load %arg3[%c0_4, %c0_5] : memref<1x32xf32, #tpu.memory_space<vmem>>, vector<1x32xf32>
    %5 = vector.broadcast %4 : vector<1x32xf32> to vector<8x32xf32>
    %6 = arith.addf %3, %5 : vector<8x32xf32>
    %cst_6 = arith.constant 0.000000e+00 : f32
    %7 = vector.broadcast %cst_6 : f32 to vector<8x32xf32>
    %8 = arith.maximumf %6, %7 : vector<8x32xf32>
    %c0_7 = arith.constant 0 : index
    %c0_8 = arith.constant 0 : index
    %c0_9 = arith.constant 0 : index
    %9 = vector.load %arg4[%c0_7, %c0_8, %c0_9] : memref<9x32x64xf32, #tpu.memory_space<vmem>>, vector<1x32x64xf32>
    %10 = vector.shape_cast %9 : vector<1x32x64xf32> to vector<32x64xf32>
    %cst_10 = arith.constant dense<0.000000e+00> : vector<8x64xf32>
    %11 = tpu.matmul %8, %10, %cst_10 {dimension_numbers = #tpu.dot_dimension_numbers<[1], [0], [0], [1], [0, 0, 1, 1], [], []>} : vector<8x32xf32>, vector<32x64xf32>, vector<8x64xf32> -> vector<8x64xf32>
    %c1 = arith.constant 1 : index
    %c0_11 = arith.constant 0 : index
    %c0_12 = arith.constant 0 : index
    %12 = vector.load %arg1[%c1, %c0_11, %c0_12] : memref<9x8x9xf32, #tpu.memory_space<vmem>>, vector<1x8x9xf32>
    %13 = vector.shape_cast %12 : vector<1x8x9xf32> to vector<8x9xf32>
    %c0_13 = arith.constant 0 : index
    %c0_14 = arith.constant 0 : index
    %14 = vector.load %arg2[%c0_13, %c0_14] : memref<9x32xf32, #tpu.memory_space<vmem>>, vector<9x32xf32>
    %cst_15 = arith.constant dense<0.000000e+00> : vector<8x32xf32>
    %15 = tpu.matmul %13, %14, %cst_15 {dimension_numbers = #tpu.dot_dimension_numbers<[1], [0], [0], [1], [0, 0, 1, 1], [], []>} : vector<8x9xf32>, vector<9x32xf32>, vector<8x32xf32> -> vector<8x32xf32>
    %c0_16 = arith.constant 0 : index
    %c0_17 = arith.constant 0 : index
    %16 = vector.load %arg3[%c0_16, %c0_17] : memref<1x32xf32, #tpu.memory_space<vmem>>, vector<1x32xf32>
    %17 = vector.broadcast %16 : vector<1x32xf32> to vector<8x32xf32>
    %18 = arith.addf %15, %17 : vector<8x32xf32>
    %cst_18 = arith.constant 0.000000e+00 : f32
    %19 = vector.broadcast %cst_18 : f32 to vector<8x32xf32>
    %20 = arith.maximumf %18, %19 : vector<8x32xf32>
    %c1_19 = arith.constant 1 : index
    %c0_20 = arith.constant 0 : index
    %c0_21 = arith.constant 0 : index
    %21 = vector.load %arg4[%c1_19, %c0_20, %c0_21] : memref<9x32x64xf32, #tpu.memory_space<vmem>>, vector<1x32x64xf32>
    %22 = vector.shape_cast %21 : vector<1x32x64xf32> to vector<32x64xf32>
    %cst_22 = arith.constant dense<0.000000e+00> : vector<8x64xf32>
    %23 = tpu.matmul %20, %22, %cst_22 {dimension_numbers = #tpu.dot_dimension_numbers<[1], [0], [0], [1], [0, 0, 1, 1], [], []>} : vector<8x32xf32>, vector<32x64xf32>, vector<8x64xf32> -> vector<8x64xf32>
    %24 = arith.addf %11, %23 : vector<8x64xf32>
    %c2 = arith.constant 2 : index
    %c0_23 = arith.constant 0 : index
    %c0_24 = arith.constant 0 : index
    %25 = vector.load %arg1[%c2, %c0_23, %c0_24] : memref<9x8x9xf32, #tpu.memory_space<vmem>>, vector<1x8x9xf32>
    %26 = vector.shape_cast %25 : vector<1x8x9xf32> to vector<8x9xf32>
    %c0_25 = arith.constant 0 : index
    %c0_26 = arith.constant 0 : index
    %27 = vector.load %arg2[%c0_25, %c0_26] : memref<9x32xf32, #tpu.memory_space<vmem>>, vector<9x32xf32>
    %cst_27 = arith.constant dense<0.000000e+00> : vector<8x32xf32>
    %28 = tpu.matmul %26, %27, %cst_27 {dimension_numbers = #tpu.dot_dimension_numbers<[1], [0], [0], [1], [0, 0, 1, 1], [], []>} : vector<8x9xf32>, vector<9x32xf32>, vector<8x32xf32> -> vector<8x32xf32>
    %c0_28 = arith.constant 0 : index
    %c0_29 = arith.constant 0 : index
    %29 = vector.load %arg3[%c0_28, %c0_29] : memref<1x32xf32, #tpu.memory_space<vmem>>, vector<1x32xf32>
    %30 = vector.broadcast %29 : vector<1x32xf32> to vector<8x32xf32>
    %31 = arith.addf %28, %30 : vector<8x32xf32>
    %cst_30 = arith.constant 0.000000e+00 : f32
    %32 = vector.broadcast %cst_30 : f32 to vector<8x32xf32>
    %33 = arith.maximumf %31, %32 : vector<8x32xf32>
    %c2_31 = arith.constant 2 : index
    %c0_32 = arith.constant 0 : index
    %c0_33 = arith.constant 0 : index
    %34 = vector.load %arg4[%c2_31, %c0_32, %c0_33] : memref<9x32x64xf32, #tpu.memory_space<vmem>>, vector<1x32x64xf32>
    %35 = vector.shape_cast %34 : vector<1x32x64xf32> to vector<32x64xf32>
    %cst_34 = arith.constant dense<0.000000e+00> : vector<8x64xf32>
    %36 = tpu.matmul %33, %35, %cst_34 {dimension_numbers = #tpu.dot_dimension_numbers<[1], [0], [0], [1], [0, 0, 1, 1], [], []>} : vector<8x32xf32>, vector<32x64xf32>, vector<8x64xf32> -> vector<8x64xf32>
    %37 = arith.addf %24, %36 : vector<8x64xf32>
    %c3 = arith.constant 3 : index
    %c0_35 = arith.constant 0 : index
    %c0_36 = arith.constant 0 : index
    %38 = vector.load %arg1[%c3, %c0_35, %c0_36] : memref<9x8x9xf32, #tpu.memory_space<vmem>>, vector<1x8x9xf32>
    %39 = vector.shape_cast %38 : vector<1x8x9xf32> to vector<8x9xf32>
    %c0_37 = arith.constant 0 : index
    %c0_38 = arith.constant 0 : index
    %40 = vector.load %arg2[%c0_37, %c0_38] : memref<9x32xf32, #tpu.memory_space<vmem>>, vector<9x32xf32>
    %cst_39 = arith.constant dense<0.000000e+00> : vector<8x32xf32>
    %41 = tpu.matmul %39, %40, %cst_39 {dimension_numbers = #tpu.dot_dimension_numbers<[1], [0], [0], [1], [0, 0, 1, 1], [], []>} : vector<8x9xf32>, vector<9x32xf32>, vector<8x32xf32> -> vector<8x32xf32>
    %c0_40 = arith.constant 0 : index
    %c0_41 = arith.constant 0 : index
    %42 = vector.load %arg3[%c0_40, %c0_41] : memref<1x32xf32, #tpu.memory_space<vmem>>, vector<1x32xf32>
    %43 = vector.broadcast %42 : vector<1x32xf32> to vector<8x32xf32>
    %44 = arith.addf %41, %43 : vector<8x32xf32>
    %cst_42 = arith.constant 0.000000e+00 : f32
    %45 = vector.broadcast %cst_42 : f32 to vector<8x32xf32>
    %46 = arith.maximumf %44, %45 : vector<8x32xf32>
    %c3_43 = arith.constant 3 : index
    %c0_44 = arith.constant 0 : index
    %c0_45 = arith.constant 0 : index
    %47 = vector.load %arg4[%c3_43, %c0_44, %c0_45] : memref<9x32x64xf32, #tpu.memory_space<vmem>>, vector<1x32x64xf32>
    %48 = vector.shape_cast %47 : vector<1x32x64xf32> to vector<32x64xf32>
    %cst_46 = arith.constant dense<0.000000e+00> : vector<8x64xf32>
    %49 = tpu.matmul %46, %48, %cst_46 {dimension_numbers = #tpu.dot_dimension_numbers<[1], [0], [0], [1], [0, 0, 1, 1], [], []>} : vector<8x32xf32>, vector<32x64xf32>, vector<8x64xf32> -> vector<8x64xf32>
    %50 = arith.addf %37, %49 : vector<8x64xf32>
    %c4 = arith.constant 4 : index
    %c0_47 = arith.constant 0 : index
    %c0_48 = arith.constant 0 : index
    %51 = vector.load %arg1[%c4, %c0_47, %c0_48] : memref<9x8x9xf32, #tpu.memory_space<vmem>>, vector<1x8x9xf32>
    %52 = vector.shape_cast %51 : vector<1x8x9xf32> to vector<8x9xf32>
    %c0_49 = arith.constant 0 : index
    %c0_50 = arith.constant 0 : index
    %53 = vector.load %arg2[%c0_49, %c0_50] : memref<9x32xf32, #tpu.memory_space<vmem>>, vector<9x32xf32>
    %cst_51 = arith.constant dense<0.000000e+00> : vector<8x32xf32>
    %54 = tpu.matmul %52, %53, %cst_51 {dimension_numbers = #tpu.dot_dimension_numbers<[1], [0], [0], [1], [0, 0, 1, 1], [], []>} : vector<8x9xf32>, vector<9x32xf32>, vector<8x32xf32> -> vector<8x32xf32>
    %c0_52 = arith.constant 0 : index
    %c0_53 = arith.constant 0 : index
    %55 = vector.load %arg3[%c0_52, %c0_53] : memref<1x32xf32, #tpu.memory_space<vmem>>, vector<1x32xf32>
    %56 = vector.broadcast %55 : vector<1x32xf32> to vector<8x32xf32>
    %57 = arith.addf %54, %56 : vector<8x32xf32>
    %cst_54 = arith.constant 0.000000e+00 : f32
    %58 = vector.broadcast %cst_54 : f32 to vector<8x32xf32>
    %59 = arith.maximumf %57, %58 : vector<8x32xf32>
    %c4_55 = arith.constant 4 : index
    %c0_56 = arith.constant 0 : index
    %c0_57 = arith.constant 0 : index
    %60 = vector.load %arg4[%c4_55, %c0_56, %c0_57] : memref<9x32x64xf32, #tpu.memory_space<vmem>>, vector<1x32x64xf32>
    %61 = vector.shape_cast %60 : vector<1x32x64xf32> to vector<32x64xf32>
    %cst_58 = arith.constant dense<0.000000e+00> : vector<8x64xf32>
    %62 = tpu.matmul %59, %61, %cst_58 {dimension_numbers = #tpu.dot_dimension_numbers<[1], [0], [0], [1], [0, 0, 1, 1], [], []>} : vector<8x32xf32>, vector<32x64xf32>, vector<8x64xf32> -> vector<8x64xf32>
    %63 = arith.addf %50, %62 : vector<8x64xf32>
    %c5 = arith.constant 5 : index
    %c0_59 = arith.constant 0 : index
    %c0_60 = arith.constant 0 : index
    %64 = vector.load %arg1[%c5, %c0_59, %c0_60] : memref<9x8x9xf32, #tpu.memory_space<vmem>>, vector<1x8x9xf32>
    %65 = vector.shape_cast %64 : vector<1x8x9xf32> to vector<8x9xf32>
    %c0_61 = arith.constant 0 : index
    %c0_62 = arith.constant 0 : index
    %66 = vector.load %arg2[%c0_61, %c0_62] : memref<9x32xf32, #tpu.memory_space<vmem>>, vector<9x32xf32>
    %cst_63 = arith.constant dense<0.000000e+00> : vector<8x32xf32>
    %67 = tpu.matmul %65, %66, %cst_63 {dimension_numbers = #tpu.dot_dimension_numbers<[1], [0], [0], [1], [0, 0, 1, 1], [], []>} : vector<8x9xf32>, vector<9x32xf32>, vector<8x32xf32> -> vector<8x32xf32>
    %c0_64 = arith.constant 0 : index
    %c0_65 = arith.constant 0 : index
    %68 = vector.load %arg3[%c0_64, %c0_65] : memref<1x32xf32, #tpu.memory_space<vmem>>, vector<1x32xf32>
    %69 = vector.broadcast %68 : vector<1x32xf32> to vector<8x32xf32>
    %70 = arith.addf %67, %69 : vector<8x32xf32>
    %cst_66 = arith.constant 0.000000e+00 : f32
    %71 = vector.broadcast %cst_66 : f32 to vector<8x32xf32>
    %72 = arith.maximumf %70, %71 : vector<8x32xf32>
    %c5_67 = arith.constant 5 : index
    %c0_68 = arith.constant 0 : index
    %c0_69 = arith.constant 0 : index
    %73 = vector.load %arg4[%c5_67, %c0_68, %c0_69] : memref<9x32x64xf32, #tpu.memory_space<vmem>>, vector<1x32x64xf32>
    %74 = vector.shape_cast %73 : vector<1x32x64xf32> to vector<32x64xf32>
    %cst_70 = arith.constant dense<0.000000e+00> : vector<8x64xf32>
    %75 = tpu.matmul %72, %74, %cst_70 {dimension_numbers = #tpu.dot_dimension_numbers<[1], [0], [0], [1], [0, 0, 1, 1], [], []>} : vector<8x32xf32>, vector<32x64xf32>, vector<8x64xf32> -> vector<8x64xf32>
    %76 = arith.addf %63, %75 : vector<8x64xf32>
    %c6 = arith.constant 6 : index
    %c0_71 = arith.constant 0 : index
    %c0_72 = arith.constant 0 : index
    %77 = vector.load %arg1[%c6, %c0_71, %c0_72] : memref<9x8x9xf32, #tpu.memory_space<vmem>>, vector<1x8x9xf32>
    %78 = vector.shape_cast %77 : vector<1x8x9xf32> to vector<8x9xf32>
    %c0_73 = arith.constant 0 : index
    %c0_74 = arith.constant 0 : index
    %79 = vector.load %arg2[%c0_73, %c0_74] : memref<9x32xf32, #tpu.memory_space<vmem>>, vector<9x32xf32>
    %cst_75 = arith.constant dense<0.000000e+00> : vector<8x32xf32>
    %80 = tpu.matmul %78, %79, %cst_75 {dimension_numbers = #tpu.dot_dimension_numbers<[1], [0], [0], [1], [0, 0, 1, 1], [], []>} : vector<8x9xf32>, vector<9x32xf32>, vector<8x32xf32> -> vector<8x32xf32>
    %c0_76 = arith.constant 0 : index
    %c0_77 = arith.constant 0 : index
    %81 = vector.load %arg3[%c0_76, %c0_77] : memref<1x32xf32, #tpu.memory_space<vmem>>, vector<1x32xf32>
    %82 = vector.broadcast %81 : vector<1x32xf32> to vector<8x32xf32>
    %83 = arith.addf %80, %82 : vector<8x32xf32>
    %cst_78 = arith.constant 0.000000e+00 : f32
    %84 = vector.broadcast %cst_78 : f32 to vector<8x32xf32>
    %85 = arith.maximumf %83, %84 : vector<8x32xf32>
    %c6_79 = arith.constant 6 : index
    %c0_80 = arith.constant 0 : index
    %c0_81 = arith.constant 0 : index
    %86 = vector.load %arg4[%c6_79, %c0_80, %c0_81] : memref<9x32x64xf32, #tpu.memory_space<vmem>>, vector<1x32x64xf32>
    %87 = vector.shape_cast %86 : vector<1x32x64xf32> to vector<32x64xf32>
    %cst_82 = arith.constant dense<0.000000e+00> : vector<8x64xf32>
    %88 = tpu.matmul %85, %87, %cst_82 {dimension_numbers = #tpu.dot_dimension_numbers<[1], [0], [0], [1], [0, 0, 1, 1], [], []>} : vector<8x32xf32>, vector<32x64xf32>, vector<8x64xf32> -> vector<8x64xf32>
    %89 = arith.addf %76, %88 : vector<8x64xf32>
    %c7 = arith.constant 7 : index
    %c0_83 = arith.constant 0 : index
    %c0_84 = arith.constant 0 : index
    %90 = vector.load %arg1[%c7, %c0_83, %c0_84] : memref<9x8x9xf32, #tpu.memory_space<vmem>>, vector<1x8x9xf32>
    %91 = vector.shape_cast %90 : vector<1x8x9xf32> to vector<8x9xf32>
    %c0_85 = arith.constant 0 : index
    %c0_86 = arith.constant 0 : index
    %92 = vector.load %arg2[%c0_85, %c0_86] : memref<9x32xf32, #tpu.memory_space<vmem>>, vector<9x32xf32>
    %cst_87 = arith.constant dense<0.000000e+00> : vector<8x32xf32>
    %93 = tpu.matmul %91, %92, %cst_87 {dimension_numbers = #tpu.dot_dimension_numbers<[1], [0], [0], [1], [0, 0, 1, 1], [], []>} : vector<8x9xf32>, vector<9x32xf32>, vector<8x32xf32> -> vector<8x32xf32>
    %c0_88 = arith.constant 0 : index
    %c0_89 = arith.constant 0 : index
    %94 = vector.load %arg3[%c0_88, %c0_89] : memref<1x32xf32, #tpu.memory_space<vmem>>, vector<1x32xf32>
    %95 = vector.broadcast %94 : vector<1x32xf32> to vector<8x32xf32>
    %96 = arith.addf %93, %95 : vector<8x32xf32>
    %cst_90 = arith.constant 0.000000e+00 : f32
    %97 = vector.broadcast %cst_90 : f32 to vector<8x32xf32>
    %98 = arith.maximumf %96, %97 : vector<8x32xf32>
    %c7_91 = arith.constant 7 : index
    %c0_92 = arith.constant 0 : index
    %c0_93 = arith.constant 0 : index
    %99 = vector.load %arg4[%c7_91, %c0_92, %c0_93] : memref<9x32x64xf32, #tpu.memory_space<vmem>>, vector<1x32x64xf32>
    %100 = vector.shape_cast %99 : vector<1x32x64xf32> to vector<32x64xf32>
    %cst_94 = arith.constant dense<0.000000e+00> : vector<8x64xf32>
    %101 = tpu.matmul %98, %100, %cst_94 {dimension_numbers = #tpu.dot_dimension_numbers<[1], [0], [0], [1], [0, 0, 1, 1], [], []>} : vector<8x32xf32>, vector<32x64xf32>, vector<8x64xf32> -> vector<8x64xf32>
    %102 = arith.addf %89, %101 : vector<8x64xf32>
    %c8 = arith.constant 8 : index
    %c0_95 = arith.constant 0 : index
    %c0_96 = arith.constant 0 : index
    %103 = vector.load %arg1[%c8, %c0_95, %c0_96] : memref<9x8x9xf32, #tpu.memory_space<vmem>>, vector<1x8x9xf32>
    %104 = vector.shape_cast %103 : vector<1x8x9xf32> to vector<8x9xf32>
    %c0_97 = arith.constant 0 : index
    %c0_98 = arith.constant 0 : index
    %105 = vector.load %arg2[%c0_97, %c0_98] : memref<9x32xf32, #tpu.memory_space<vmem>>, vector<9x32xf32>
    %cst_99 = arith.constant dense<0.000000e+00> : vector<8x32xf32>
    %106 = tpu.matmul %104, %105, %cst_99 {dimension_numbers = #tpu.dot_dimension_numbers<[1], [0], [0], [1], [0, 0, 1, 1], [], []>} : vector<8x9xf32>, vector<9x32xf32>, vector<8x32xf32> -> vector<8x32xf32>
    %c0_100 = arith.constant 0 : index
    %c0_101 = arith.constant 0 : index
    %107 = vector.load %arg3[%c0_100, %c0_101] : memref<1x32xf32, #tpu.memory_space<vmem>>, vector<1x32xf32>
    %108 = vector.broadcast %107 : vector<1x32xf32> to vector<8x32xf32>
    %109 = arith.addf %106, %108 : vector<8x32xf32>
    %cst_102 = arith.constant 0.000000e+00 : f32
    %110 = vector.broadcast %cst_102 : f32 to vector<8x32xf32>
    %111 = arith.maximumf %109, %110 : vector<8x32xf32>
    %c8_103 = arith.constant 8 : index
    %c0_104 = arith.constant 0 : index
    %c0_105 = arith.constant 0 : index
    %112 = vector.load %arg4[%c8_103, %c0_104, %c0_105] : memref<9x32x64xf32, #tpu.memory_space<vmem>>, vector<1x32x64xf32>
    %113 = vector.shape_cast %112 : vector<1x32x64xf32> to vector<32x64xf32>
    %cst_106 = arith.constant dense<0.000000e+00> : vector<8x64xf32>
    %114 = tpu.matmul %111, %113, %cst_106 {dimension_numbers = #tpu.dot_dimension_numbers<[1], [0], [0], [1], [0, 0, 1, 1], [], []>} : vector<8x32xf32>, vector<32x64xf32>, vector<8x64xf32> -> vector<8x64xf32>
    %115 = arith.addf %102, %114 : vector<8x64xf32>
    %c0_107 = arith.constant 0 : index
    %c0_108 = arith.constant 0 : index
    %116 = vector.load %arg5[%c0_107, %c0_108] : memref<1x64xf32, #tpu.memory_space<vmem>>, vector<1x64xf32>
    %117 = vector.broadcast %116 : vector<1x64xf32> to vector<8x64xf32>
    %118 = arith.addf %115, %117 : vector<8x64xf32>
    %cst_109 = arith.constant 0.000000e+00 : f32
    %119 = vector.broadcast %cst_109 : f32 to vector<8x64xf32>
    %120 = arith.maximumf %118, %119 : vector<8x64xf32>
    %121 = vector.extract_strided_slice %120 {offsets = [0, 0], sizes = [2, 64], strides = [1, 1]} : vector<8x64xf32> to vector<2x64xf32>
    %c0_110 = arith.constant 0 : index
    %c0_111 = arith.constant 0 : index
    %c0_112 = arith.constant 0 : index
    %122 = vector.load %arg6[%c0_110, %c0_111, %c0_112] : memref<4x64x128xf32, #tpu.memory_space<vmem>>, vector<1x64x128xf32>
    %123 = vector.shape_cast %122 : vector<1x64x128xf32> to vector<64x128xf32>
    %cst_113 = arith.constant dense<0.000000e+00> : vector<2x128xf32>
    %124 = tpu.matmul %121, %123, %cst_113 {dimension_numbers = #tpu.dot_dimension_numbers<[1], [0], [0], [1], [0, 0, 1, 1], [], []>} : vector<2x64xf32>, vector<64x128xf32>, vector<2x128xf32> -> vector<2x128xf32>
    %125 = vector.extract_strided_slice %120 {offsets = [2, 0], sizes = [2, 64], strides = [1, 1]} : vector<8x64xf32> to vector<2x64xf32>
    %c1_114 = arith.constant 1 : index
    %c0_115 = arith.constant 0 : index
    %c0_116 = arith.constant 0 : index
    %126 = vector.load %arg6[%c1_114, %c0_115, %c0_116] : memref<4x64x128xf32, #tpu.memory_space<vmem>>, vector<1x64x128xf32>
    %127 = vector.shape_cast %126 : vector<1x64x128xf32> to vector<64x128xf32>
    %cst_117 = arith.constant dense<0.000000e+00> : vector<2x128xf32>
    %128 = tpu.matmul %125, %127, %cst_117 {dimension_numbers = #tpu.dot_dimension_numbers<[1], [0], [0], [1], [0, 0, 1, 1], [], []>} : vector<2x64xf32>, vector<64x128xf32>, vector<2x128xf32> -> vector<2x128xf32>
    %129 = arith.addf %124, %128 : vector<2x128xf32>
    %130 = vector.extract_strided_slice %120 {offsets = [4, 0], sizes = [2, 64], strides = [1, 1]} : vector<8x64xf32> to vector<2x64xf32>
    %c2_118 = arith.constant 2 : index
    %c0_119 = arith.constant 0 : index
    %c0_120 = arith.constant 0 : index
    %131 = vector.load %arg6[%c2_118, %c0_119, %c0_120] : memref<4x64x128xf32, #tpu.memory_space<vmem>>, vector<1x64x128xf32>
    %132 = vector.shape_cast %131 : vector<1x64x128xf32> to vector<64x128xf32>
    %cst_121 = arith.constant dense<0.000000e+00> : vector<2x128xf32>
    %133 = tpu.matmul %130, %132, %cst_121 {dimension_numbers = #tpu.dot_dimension_numbers<[1], [0], [0], [1], [0, 0, 1, 1], [], []>} : vector<2x64xf32>, vector<64x128xf32>, vector<2x128xf32> -> vector<2x128xf32>
    %134 = arith.addf %129, %133 : vector<2x128xf32>
    %135 = vector.extract_strided_slice %120 {offsets = [6, 0], sizes = [2, 64], strides = [1, 1]} : vector<8x64xf32> to vector<2x64xf32>
    %c3_122 = arith.constant 3 : index
    %c0_123 = arith.constant 0 : index
    %c0_124 = arith.constant 0 : index
    %136 = vector.load %arg6[%c3_122, %c0_123, %c0_124] : memref<4x64x128xf32, #tpu.memory_space<vmem>>, vector<1x64x128xf32>
    %137 = vector.shape_cast %136 : vector<1x64x128xf32> to vector<64x128xf32>
    %cst_125 = arith.constant dense<0.000000e+00> : vector<2x128xf32>
    %138 = tpu.matmul %135, %137, %cst_125 {dimension_numbers = #tpu.dot_dimension_numbers<[1], [0], [0], [1], [0, 0, 1, 1], [], []>} : vector<2x64xf32>, vector<64x128xf32>, vector<2x128xf32> -> vector<2x128xf32>
    %139 = arith.addf %134, %138 : vector<2x128xf32>
    %c0_126 = arith.constant 0 : index
    %c0_127 = arith.constant 0 : index
    %140 = vector.load %arg7[%c0_126, %c0_127] : memref<1x128xf32, #tpu.memory_space<vmem>>, vector<1x128xf32>
    %141 = vector.broadcast %140 : vector<1x128xf32> to vector<2x128xf32>
    %142 = arith.addf %139, %141 : vector<2x128xf32>
    %c0_128 = arith.constant 0 : index
    %c0_129 = arith.constant 0 : index
    %143 = vector.load %arg21[%c0_128, %c0_129] : memref<2x128xf32, #tpu.memory_space<vmem>>, vector<2x128xf32>
    tpu.vector_store %arg21[%c0_128, %c0_129], %142 {strides = array<i32>} : memref<2x128xf32, #tpu.memory_space<vmem>>, vector<2x128xf32>,
    %144 = vector.extract_strided_slice %142 {offsets = [0, 0], sizes = [2, 64], strides = [1, 1]} : vector<2x128xf32> to vector<2x64xf32>
    %145 = vector.extract_strided_slice %142 {offsets = [0, 64], sizes = [2, 64], strides = [1, 1]} : vector<2x128xf32> to vector<2x64xf32>
    %c0_130 = arith.constant 0 : index
    %c0_131 = arith.constant 0 : index
    %146 = vector.load %arg8[%c0_130, %c0_131] : memref<2x64xf32, #tpu.memory_space<vmem>>, vector<2x64xf32>
    %cst_132 = arith.constant 5.000000e-01 : f32
    %147 = vector.broadcast %cst_132 : f32 to vector<2x64xf32>
    %148 = arith.mulf %147, %145 : vector<2x64xf32>
    %149 = math.exp %148 : vector<2x64xf32>
    %150 = arith.mulf %146, %149 : vector<2x64xf32>
    %151 = arith.addf %150, %144 : vector<2x64xf32>
    %c0_133 = arith.constant 0 : index
    %c0_134 = arith.constant 0 : index
    %152 = vector.load %arg9[%c0_133, %c0_134] : memref<64x196xf32, #tpu.memory_space<vmem>>, vector<64x196xf32>
    %cst_135 = arith.constant dense<0.000000e+00> : vector<2x196xf32>
    %153 = tpu.matmul %151, %152, %cst_135 {dimension_numbers = #tpu.dot_dimension_numbers<[1], [0], [0], [1], [0, 0, 1, 1], [], []>} : vector<2x64xf32>, vector<64x196xf32>, vector<2x196xf32> -> vector<2x196xf32>
    %c0_136 = arith.constant 0 : index
    %c0_137 = arith.constant 0 : index
    %154 = vector.load %arg10[%c0_136, %c0_137] : memref<1x196xf32, #tpu.memory_space<vmem>>, vector<1x196xf32>
    %155 = vector.broadcast %154 : vector<1x196xf32> to vector<2x196xf32>
    %156 = arith.addf %153, %155 : vector<2x196xf32>
    %c0_138 = arith.constant 0 : index
    %c0_139 = arith.constant 0 : index
    %c0_140 = arith.constant 0 : index
    %157 = vector.load %arg11[%c0_138, %c0_139, %c0_140] : memref<4x196x512xf32, #tpu.memory_space<vmem>>, vector<1x196x512xf32>
    %158 = vector.shape_cast %157 : vector<1x196x512xf32> to vector<196x512xf32>
    %cst_141 = arith.constant dense<0.000000e+00> : vector<2x512xf32>
    %159 = tpu.matmul %156, %158, %cst_141 {dimension_numbers = #tpu.dot_dimension_numbers<[1], [0], [0], [1], [0, 0, 1, 1], [], []>} : vector<2x196xf32>, vector<196x512xf32>, vector<2x512xf32> -> vector<2x512xf32>
    %c1_142 = arith.constant 1 : index
    %c0_143 = arith.constant 0 : index
    %c0_144 = arith.constant 0 : index
    %160 = vector.load %arg11[%c1_142, %c0_143, %c0_144] : memref<4x196x512xf32, #tpu.memory_space<vmem>>, vector<1x196x512xf32>
    %161 = vector.shape_cast %160 : vector<1x196x512xf32> to vector<196x512xf32>
    %cst_145 = arith.constant dense<0.000000e+00> : vector<2x512xf32>
    %162 = tpu.matmul %156, %161, %cst_145 {dimension_numbers = #tpu.dot_dimension_numbers<[1], [0], [0], [1], [0, 0, 1, 1], [], []>} : vector<2x196xf32>, vector<196x512xf32>, vector<2x512xf32> -> vector<2x512xf32>
    %c2_146 = arith.constant 2 : index
    %c0_147 = arith.constant 0 : index
    %c0_148 = arith.constant 0 : index
    %163 = vector.load %arg11[%c2_146, %c0_147, %c0_148] : memref<4x196x512xf32, #tpu.memory_space<vmem>>, vector<1x196x512xf32>
    %164 = vector.shape_cast %163 : vector<1x196x512xf32> to vector<196x512xf32>
    %cst_149 = arith.constant dense<0.000000e+00> : vector<2x512xf32>
    %165 = tpu.matmul %156, %164, %cst_149 {dimension_numbers = #tpu.dot_dimension_numbers<[1], [0], [0], [1], [0, 0, 1, 1], [], []>} : vector<2x196xf32>, vector<196x512xf32>, vector<2x512xf32> -> vector<2x512xf32>
    %c3_150 = arith.constant 3 : index
    %c0_151 = arith.constant 0 : index
    %c0_152 = arith.constant 0 : index
    %166 = vector.load %arg11[%c3_150, %c0_151, %c0_152] : memref<4x196x512xf32, #tpu.memory_space<vmem>>, vector<1x196x512xf32>
    %167 = vector.shape_cast %166 : vector<1x196x512xf32> to vector<196x512xf32>
    %cst_153 = arith.constant dense<0.000000e+00> : vector<2x512xf32>
    %168 = tpu.matmul %156, %167, %cst_153 {dimension_numbers = #tpu.dot_dimension_numbers<[1], [0], [0], [1], [0, 0, 1, 1], [], []>} : vector<2x196xf32>, vector<196x512xf32>, vector<2x512xf32> -> vector<2x512xf32>
    %169 = tpu.concatenate %159, %162, %165, %168 in 0 : vector<2x512xf32>, vector<2x512xf32>, vector<2x512xf32>, vector<2x512xf32> -> vector<8x512xf32>
    %c0_154 = arith.constant 0 : index
    %c0_155 = arith.constant 0 : index
    %170 = vector.load %arg12[%c0_154, %c0_155] : memref<1x512xf32, #tpu.memory_space<vmem>>, vector<1x512xf32>
    %171 = vector.broadcast %170 : vector<1x512xf32> to vector<8x512xf32>
    %172 = arith.addf %169, %171 : vector<8x512xf32>
    %cst_156 = arith.constant dense<0.000000e+00> : vector<512xf32>
    %173 = vector.multi_reduction <add>, %172, %cst_156 [0] : vector<8x512xf32> to vector<512xf32>
    %174 = vector.shape_cast %173 : vector<512xf32> to vector<1x512xf32>
    %175 = arith.mulf %172, %172 : vector<8x512xf32>
    %cst_157 = arith.constant dense<0.000000e+00> : vector<512xf32>
    %176 = vector.multi_reduction <add>, %175, %cst_157 [0] : vector<8x512xf32> to vector<512xf32>
    %177 = vector.shape_cast %176 : vector<512xf32> to vector<1x512xf32>
    %178 = vector.extract_strided_slice %174 {offsets = [0, 0], sizes = [1, 128], strides = [1, 1]} : vector<1x512xf32> to vector<1x128xf32>
    %179 = vector.extract_strided_slice %174 {offsets = [0, 128], sizes = [1, 128], strides = [1, 1]} : vector<1x512xf32> to vector<1x128xf32>
    %180 = arith.addf %178, %179 : vector<1x128xf32>
    %181 = vector.extract_strided_slice %174 {offsets = [0, 256], sizes = [1, 128], strides = [1, 1]} : vector<1x512xf32> to vector<1x128xf32>
    %182 = arith.addf %180, %181 : vector<1x128xf32>
    %183 = vector.extract_strided_slice %174 {offsets = [0, 384], sizes = [1, 128], strides = [1, 1]} : vector<1x512xf32> to vector<1x128xf32>
    %184 = arith.addf %182, %183 : vector<1x128xf32>
    %185 = vector.extract_strided_slice %177 {offsets = [0, 0], sizes = [1, 128], strides = [1, 1]} : vector<1x512xf32> to vector<1x128xf32>
    %186 = vector.extract_strided_slice %177 {offsets = [0, 128], sizes = [1, 128], strides = [1, 1]} : vector<1x512xf32> to vector<1x128xf32>
    %187 = arith.addf %185, %186 : vector<1x128xf32>
    %188 = vector.extract_strided_slice %177 {offsets = [0, 256], sizes = [1, 128], strides = [1, 1]} : vector<1x512xf32> to vector<1x128xf32>
    %189 = arith.addf %187, %188 : vector<1x128xf32>
    %190 = vector.extract_strided_slice %177 {offsets = [0, 384], sizes = [1, 128], strides = [1, 1]} : vector<1x512xf32> to vector<1x128xf32>
    %191 = arith.addf %189, %190 : vector<1x128xf32>
    %cst_158 = arith.constant 3.125000e-02 : f32
    %192 = vector.broadcast %cst_158 : f32 to vector<1x128xf32>
    %193 = arith.mulf %184, %192 : vector<1x128xf32>
    %cst_159 = arith.constant 3.125000e-02 : f32
    %194 = vector.broadcast %cst_159 : f32 to vector<1x128xf32>
    %195 = arith.mulf %191, %194 : vector<1x128xf32>
    %196 = arith.mulf %193, %193 : vector<1x128xf32>
    %197 = arith.subf %195, %196 : vector<1x128xf32>
    %c0_160 = arith.constant 0 : index
    %c0_161 = arith.constant 0 : index
    %198 = vector.load %arg13[%c0_160, %c0_161] : memref<1x128xf32, #tpu.memory_space<vmem>>, vector<1x128xf32>
    %cst_162 = arith.constant 9.99999974E-6 : f32
    %199 = vector.broadcast %cst_162 : f32 to vector<1x128xf32>
    %200 = arith.addf %197, %199 : vector<1x128xf32>
    %201 = math.rsqrt %200 : vector<1x128xf32>
    %202 = arith.mulf %198, %201 : vector<1x128xf32>
    %c0_163 = arith.constant 0 : index
    %c0_164 = arith.constant 0 : index
    %203 = vector.load %arg14[%c0_163, %c0_164] : memref<1x128xf32, #tpu.memory_space<vmem>>, vector<1x128xf32>
    %204 = arith.mulf %193, %202 : vector<1x128xf32>
    %205 = arith.subf %203, %204 : vector<1x128xf32>
    %206 = tpu.concatenate %202, %202, %202, %202 in 1 : vector<1x128xf32>, vector<1x128xf32>, vector<1x128xf32>, vector<1x128xf32> -> vector<1x512xf32>
    %207 = tpu.concatenate %205, %205, %205, %205 in 1 : vector<1x128xf32>, vector<1x128xf32>, vector<1x128xf32>, vector<1x128xf32> -> vector<1x512xf32>
    %208 = vector.broadcast %206 : vector<1x512xf32> to vector<8x512xf32>
    %209 = arith.mulf %172, %208 : vector<8x512xf32>
    %210 = vector.broadcast %207 : vector<1x512xf32> to vector<8x512xf32>
    %211 = arith.addf %209, %210 : vector<8x512xf32>
    %cst_165 = arith.constant 0.000000e+00 : f32
    %212 = vector.broadcast %cst_165 : f32 to vector<8x512xf32>
    %213 = arith.maximumf %211, %212 : vector<8x512xf32>
    %cst_166 = arith.constant 0.000000e+00 : f32
    %214 = vector.broadcast %cst_166 : f32 to vector<14x224xf32>
    %c0_167 = arith.constant 0 : index
    %c0_168 = arith.constant 0 : index
    %215 = vector.load %arg23[%c0_167, %c0_168] : memref<14x224xf32, #tpu.memory_space<vmem>>, vector<14x224xf32>
    tpu.vector_store %arg23[%c0_167, %c0_168], %214 {strides = array<i32>} : memref<14x224xf32, #tpu.memory_space<vmem>>, vector<14x224xf32>,
    %c0_169 = arith.constant 0 : index
    %c0_170 = arith.constant 0 : index
    %c0_171 = arith.constant 0 : index
    %216 = vector.load %arg15[%c0_169, %c0_170, %c0_171] : memref<4x512x224xf32, #tpu.memory_space<vmem>>, vector<1x512x224xf32>
    %217 = vector.shape_cast %216 : vector<1x512x224xf32> to vector<512x224xf32>
    %cst_172 = arith.constant dense<0.000000e+00> : vector<8x224xf32>
    %218 = tpu.matmul %213, %217, %cst_172 {dimension_numbers = #tpu.dot_dimension_numbers<[1], [0], [0], [1], [0, 0, 1, 1], [], []>} : vector<8x512xf32>, vector<512x224xf32>, vector<8x224xf32> -> vector<8x224xf32>
    %c0_173 = arith.constant 0 : index
    %c0_174 = arith.constant 0 : index
    %219 = vector.load %arg23[%c0_173, %c0_174] : memref<14x224xf32, #tpu.memory_space<vmem>>, vector<8x224xf32>
    %220 = arith.addf %219, %218 : vector<8x224xf32>
    %c0_175 = arith.constant 0 : index
    %c0_176 = arith.constant 0 : index
    %221 = vector.load %arg23[%c0_175, %c0_176] : memref<14x224xf32, #tpu.memory_space<vmem>>, vector<8x224xf32>
    tpu.vector_store %arg23[%c0_175, %c0_176], %220 {strides = array<i32>} : memref<14x224xf32, #tpu.memory_space<vmem>>, vector<8x224xf32>,
    %c1_177 = arith.constant 1 : index
    %c0_178 = arith.constant 0 : index
    %c0_179 = arith.constant 0 : index
    %222 = vector.load %arg15[%c1_177, %c0_178, %c0_179] : memref<4x512x224xf32, #tpu.memory_space<vmem>>, vector<1x512x224xf32>
    %223 = vector.shape_cast %222 : vector<1x512x224xf32> to vector<512x224xf32>
    %cst_180 = arith.constant dense<0.000000e+00> : vector<8x224xf32>
    %224 = tpu.matmul %213, %223, %cst_180 {dimension_numbers = #tpu.dot_dimension_numbers<[1], [0], [0], [1], [0, 0, 1, 1], [], []>} : vector<8x512xf32>, vector<512x224xf32>, vector<8x224xf32> -> vector<8x224xf32>
    %c2_181 = arith.constant 2 : index
    %c0_182 = arith.constant 0 : index
    %225 = vector.load %arg23[%c2_181, %c0_182] : memref<14x224xf32, #tpu.memory_space<vmem>>, vector<8x224xf32>
    %226 = arith.addf %225, %224 : vector<8x224xf32>
    %c2_183 = arith.constant 2 : index
    %c0_184 = arith.constant 0 : index
    %227 = vector.load %arg23[%c2_183, %c0_184] : memref<14x224xf32, #tpu.memory_space<vmem>>, vector<8x224xf32>
    tpu.vector_store %arg23[%c2_183, %c0_184], %226 {strides = array<i32>} : memref<14x224xf32, #tpu.memory_space<vmem>>, vector<8x224xf32>,
    %c2_185 = arith.constant 2 : index
    %c0_186 = arith.constant 0 : index
    %c0_187 = arith.constant 0 : index
    %228 = vector.load %arg15[%c2_185, %c0_186, %c0_187] : memref<4x512x224xf32, #tpu.memory_space<vmem>>, vector<1x512x224xf32>
    %229 = vector.shape_cast %228 : vector<1x512x224xf32> to vector<512x224xf32>
    %cst_188 = arith.constant dense<0.000000e+00> : vector<8x224xf32>
    %230 = tpu.matmul %213, %229, %cst_188 {dimension_numbers = #tpu.dot_dimension_numbers<[1], [0], [0], [1], [0, 0, 1, 1], [], []>} : vector<8x512xf32>, vector<512x224xf32>, vector<8x224xf32> -> vector<8x224xf32>
    %c4_189 = arith.constant 4 : index
    %c0_190 = arith.constant 0 : index
    %231 = vector.load %arg23[%c4_189, %c0_190] : memref<14x224xf32, #tpu.memory_space<vmem>>, vector<8x224xf32>
    %232 = arith.addf %231, %230 : vector<8x224xf32>
    %c4_191 = arith.constant 4 : index
    %c0_192 = arith.constant 0 : index
    %233 = vector.load %arg23[%c4_191, %c0_192] : memref<14x224xf32, #tpu.memory_space<vmem>>, vector<8x224xf32>
    tpu.vector_store %arg23[%c4_191, %c0_192], %232 {strides = array<i32>} : memref<14x224xf32, #tpu.memory_space<vmem>>, vector<8x224xf32>,
    %c3_193 = arith.constant 3 : index
    %c0_194 = arith.constant 0 : index
    %c0_195 = arith.constant 0 : index
    %234 = vector.load %arg15[%c3_193, %c0_194, %c0_195] : memref<4x512x224xf32, #tpu.memory_space<vmem>>, vector<1x512x224xf32>
    %235 = vector.shape_cast %234 : vector<1x512x224xf32> to vector<512x224xf32>
    %cst_196 = arith.constant dense<0.000000e+00> : vector<8x224xf32>
    %236 = tpu.matmul %213, %235, %cst_196 {dimension_numbers = #tpu.dot_dimension_numbers<[1], [0], [0], [1], [0, 0, 1, 1], [], []>} : vector<8x512xf32>, vector<512x224xf32>, vector<8x224xf32> -> vector<8x224xf32>
    %c6_197 = arith.constant 6 : index
    %c0_198 = arith.constant 0 : index
    %237 = vector.load %arg23[%c6_197, %c0_198] : memref<14x224xf32, #tpu.memory_space<vmem>>, vector<8x224xf32>
    %238 = arith.addf %237, %236 : vector<8x224xf32>
    %c6_199 = arith.constant 6 : index
    %c0_200 = arith.constant 0 : index
    %239 = vector.load %arg23[%c6_199, %c0_200] : memref<14x224xf32, #tpu.memory_space<vmem>>, vector<8x224xf32>
    tpu.vector_store %arg23[%c6_199, %c0_200], %238 {strides = array<i32>} : memref<14x224xf32, #tpu.memory_space<vmem>>, vector<8x224xf32>,
    %c0_201 = arith.constant 0 : index
    %c0_202 = arith.constant 0 : index
    %240 = vector.load %arg23[%c0_201, %c0_202] : memref<14x224xf32, #tpu.memory_space<vmem>>, vector<14x224xf32>
    %c0_203 = arith.constant 0 : index
    %c0_204 = arith.constant 0 : index
    %241 = vector.load %arg16[%c0_203, %c0_204] : memref<1x224xf32, #tpu.memory_space<vmem>>, vector<1x224xf32>
    %242 = vector.broadcast %241 : vector<1x224xf32> to vector<14x224xf32>
    %243 = arith.addf %240, %242 : vector<14x224xf32>
    %cst_205 = arith.constant dense<0.000000e+00> : vector<224xf32>
    %244 = vector.multi_reduction <add>, %243, %cst_205 [0] : vector<14x224xf32> to vector<224xf32>
    %245 = vector.shape_cast %244 : vector<224xf32> to vector<1x224xf32>
    %246 = arith.mulf %243, %243 : vector<14x224xf32>
    %cst_206 = arith.constant dense<0.000000e+00> : vector<224xf32>
    %247 = vector.multi_reduction <add>, %246, %cst_206 [0] : vector<14x224xf32> to vector<224xf32>
    %248 = vector.shape_cast %247 : vector<224xf32> to vector<1x224xf32>
    %249 = vector.extract_strided_slice %245 {offsets = [0, 0], sizes = [1, 32], strides = [1, 1]} : vector<1x224xf32> to vector<1x32xf32>
    %250 = vector.extract_strided_slice %248 {offsets = [0, 0], sizes = [1, 32], strides = [1, 1]} : vector<1x224xf32> to vector<1x32xf32>
    %251 = vector.extract_strided_slice %245 {offsets = [0, 32], sizes = [1, 32], strides = [1, 1]} : vector<1x224xf32> to vector<1x32xf32>
    %252 = arith.addf %249, %251 : vector<1x32xf32>
    %253 = vector.extract_strided_slice %248 {offsets = [0, 32], sizes = [1, 32], strides = [1, 1]} : vector<1x224xf32> to vector<1x32xf32>
    %254 = arith.addf %250, %253 : vector<1x32xf32>
    %255 = vector.extract_strided_slice %245 {offsets = [0, 64], sizes = [1, 32], strides = [1, 1]} : vector<1x224xf32> to vector<1x32xf32>
    %256 = arith.addf %252, %255 : vector<1x32xf32>
    %257 = vector.extract_strided_slice %248 {offsets = [0, 64], sizes = [1, 32], strides = [1, 1]} : vector<1x224xf32> to vector<1x32xf32>
    %258 = arith.addf %254, %257 : vector<1x32xf32>
    %259 = vector.extract_strided_slice %245 {offsets = [0, 96], sizes = [1, 32], strides = [1, 1]} : vector<1x224xf32> to vector<1x32xf32>
    %260 = arith.addf %256, %259 : vector<1x32xf32>
    %261 = vector.extract_strided_slice %248 {offsets = [0, 96], sizes = [1, 32], strides = [1, 1]} : vector<1x224xf32> to vector<1x32xf32>
    %262 = arith.addf %258, %261 : vector<1x32xf32>
    %263 = vector.extract_strided_slice %245 {offsets = [0, 128], sizes = [1, 32], strides = [1, 1]} : vector<1x224xf32> to vector<1x32xf32>
    %264 = arith.addf %260, %263 : vector<1x32xf32>
    %265 = vector.extract_strided_slice %248 {offsets = [0, 128], sizes = [1, 32], strides = [1, 1]} : vector<1x224xf32> to vector<1x32xf32>
    %266 = arith.addf %262, %265 : vector<1x32xf32>
    %267 = vector.extract_strided_slice %245 {offsets = [0, 160], sizes = [1, 32], strides = [1, 1]} : vector<1x224xf32> to vector<1x32xf32>
    %268 = arith.addf %264, %267 : vector<1x32xf32>
    %269 = vector.extract_strided_slice %248 {offsets = [0, 160], sizes = [1, 32], strides = [1, 1]} : vector<1x224xf32> to vector<1x32xf32>
    %270 = arith.addf %266, %269 : vector<1x32xf32>
    %271 = vector.extract_strided_slice %245 {offsets = [0, 192], sizes = [1, 32], strides = [1, 1]} : vector<1x224xf32> to vector<1x32xf32>
    %272 = arith.addf %268, %271 : vector<1x32xf32>
    %273 = vector.extract_strided_slice %248 {offsets = [0, 192], sizes = [1, 32], strides = [1, 1]} : vector<1x224xf32> to vector<1x32xf32>
    %274 = arith.addf %270, %273 : vector<1x32xf32>
    %cst_207 = arith.constant 0.0102040814 : f32
    %275 = vector.broadcast %cst_207 : f32 to vector<1x32xf32>
    %276 = arith.mulf %272, %275 : vector<1x32xf32>
    %cst_208 = arith.constant 0.0102040814 : f32
    %277 = vector.broadcast %cst_208 : f32 to vector<1x32xf32>
    %278 = arith.mulf %274, %277 : vector<1x32xf32>
    %279 = arith.mulf %276, %276 : vector<1x32xf32>
    %280 = arith.subf %278, %279 : vector<1x32xf32>
    %c0_209 = arith.constant 0 : index
    %c0_210 = arith.constant 0 : index
    %281 = vector.load %arg17[%c0_209, %c0_210] : memref<1x32xf32, #tpu.memory_space<vmem>>, vector<1x32xf32>
    %cst_211 = arith.constant 9.99999974E-6 : f32
    %282 = vector.broadcast %cst_211 : f32 to vector<1x32xf32>
    %283 = arith.addf %280, %282 : vector<1x32xf32>
    %284 = math.rsqrt %283 : vector<1x32xf32>
    %285 = arith.mulf %281, %284 : vector<1x32xf32>
    %c0_212 = arith.constant 0 : index
    %c0_213 = arith.constant 0 : index
    %286 = vector.load %arg18[%c0_212, %c0_213] : memref<1x32xf32, #tpu.memory_space<vmem>>, vector<1x32xf32>
    %287 = arith.mulf %276, %285 : vector<1x32xf32>
    %288 = arith.subf %286, %287 : vector<1x32xf32>
    %289 = tpu.concatenate %285, %285, %285, %285, %285, %285, %285 in 1 : vector<1x32xf32>, vector<1x32xf32>, vector<1x32xf32>, vector<1x32xf32>, vector<1x32xf32>, vector<1x32xf32>, vector<1x32xf32> -> vector<1x224xf32>
    %290 = tpu.concatenate %288, %288, %288, %288, %288, %288, %288 in 1 : vector<1x32xf32>, vector<1x32xf32>, vector<1x32xf32>, vector<1x32xf32>, vector<1x32xf32>, vector<1x32xf32>, vector<1x32xf32> -> vector<1x224xf32>
    %291 = vector.broadcast %289 : vector<1x224xf32> to vector<14x224xf32>
    %292 = arith.mulf %243, %291 : vector<14x224xf32>
    %293 = vector.broadcast %290 : vector<1x224xf32> to vector<14x224xf32>
    %294 = arith.addf %292, %293 : vector<14x224xf32>
    %cst_214 = arith.constant 0.000000e+00 : f32
    %295 = vector.broadcast %cst_214 : f32 to vector<14x224xf32>
    %296 = arith.maximumf %294, %295 : vector<14x224xf32>
    %c0_215 = arith.constant 0 : index
    %c0_216 = arith.constant 0 : index
    %297 = vector.load %arg19[%c0_215, %c0_216] : memref<224x28xf32, #tpu.memory_space<vmem>>, vector<224x28xf32>
    %cst_217 = arith.constant dense<0.000000e+00> : vector<14x28xf32>
    %298 = tpu.matmul %296, %297, %cst_217 {dimension_numbers = #tpu.dot_dimension_numbers<[1], [0], [0], [1], [0, 0, 1, 1], [], []>} : vector<14x224xf32>, vector<224x28xf32>, vector<14x28xf32> -> vector<14x28xf32>
    %c0_218 = arith.constant 0 : index
    %c0_219 = arith.constant 0 : index
    %299 = vector.load %arg20[%c0_218, %c0_219] : memref<1x28xf32, #tpu.memory_space<vmem>>, vector<1x28xf32>
    %300 = vector.broadcast %299 : vector<1x28xf32> to vector<14x28xf32>
    %301 = arith.addf %298, %300 : vector<14x28xf32>
    %302 = arith.negf %301 : vector<14x28xf32>
    %303 = math.exp %302 : vector<14x28xf32>
    %cst_220 = arith.constant 1.000000e+00 : f32
    %304 = vector.broadcast %cst_220 : f32 to vector<14x28xf32>
    %305 = arith.addf %304, %303 : vector<14x28xf32>
    %306 = arith.divf %304, %305 : vector<14x28xf32>
    %c0_221 = arith.constant 0 : index
    %c0_222 = arith.constant 0 : index
    %307 = vector.load %arg22[%c0_221, %c0_222] : memref<14x28xf32, #tpu.memory_space<vmem>>, vector<14x28xf32>
    tpu.vector_store %arg22[%c0_221, %c0_222], %306 {strides = array<i32>} : memref<14x28xf32, #tpu.memory_space<vmem>>, vector<14x28xf32>,
    return
  }
  func.func @transform_0(%arg0: i32) -> (i32, i32, i32) {
    %c0_i32 = arith.constant 0 : i32
    %c0_i32_0 = arith.constant 0 : i32
    %c0_i32_1 = arith.constant 0 : i32
    %c0_i32_2 = arith.constant 0 : i32
    return %c0_i32, %c0_i32_0, %c0_i32_1 : i32, i32, i32
  }
  func.func @transform_1(%arg0: i32) -> (i32, i32) {
    %c0_i32 = arith.constant 0 : i32
    %c0_i32_0 = arith.constant 0 : i32
    %c0_i32_1 = arith.constant 0 : i32
    return %c0_i32, %c0_i32_0 : i32, i32
  }
  func.func @transform_2(%arg0: i32) -> (i32, i32) {
    %c0_i32 = arith.constant 0 : i32
    %c0_i32_0 = arith.constant 0 : i32
    %c0_i32_1 = arith.constant 0 : i32
    return %c0_i32, %c0_i32_0 : i32, i32
  }
  func.func @transform_3(%arg0: i32) -> (i32, i32, i32) {
    %c0_i32 = arith.constant 0 : i32
    %c0_i32_0 = arith.constant 0 : i32
    %c0_i32_1 = arith.constant 0 : i32
    %c0_i32_2 = arith.constant 0 : i32
    return %c0_i32, %c0_i32_0, %c0_i32_1 : i32, i32, i32
  }
  func.func @transform_4(%arg0: i32) -> (i32, i32) {
    %c0_i32 = arith.constant 0 : i32
    %c0_i32_0 = arith.constant 0 : i32
    %c0_i32_1 = arith.constant 0 : i32
    return %c0_i32, %c0_i32_0 : i32, i32
  }
  func.func @transform_5(%arg0: i32) -> (i32, i32, i32) {
    %c0_i32 = arith.constant 0 : i32
    %c0_i32_0 = arith.constant 0 : i32
    %c0_i32_1 = arith.constant 0 : i32
    %c0_i32_2 = arith.constant 0 : i32
    return %c0_i32, %c0_i32_0, %c0_i32_1 : i32, i32, i32
  }
  func.func @transform_6(%arg0: i32) -> (i32, i32) {
    %c0_i32 = arith.constant 0 : i32
    %c0_i32_0 = arith.constant 0 : i32
    %c0_i32_1 = arith.constant 0 : i32
    return %c0_i32, %c0_i32_0 : i32, i32
  }
  func.func @transform_7(%arg0: i32) -> (i32, i32) {
    %c0_i32 = arith.constant 0 : i32
    %c0_i32_0 = arith.constant 0 : i32
    %c0_i32_1 = arith.constant 0 : i32
    return %c0_i32, %c0_i32_0 : i32, i32
  }
  func.func @transform_8(%arg0: i32) -> (i32, i32) {
    %c0_i32 = arith.constant 0 : i32
    %c0_i32_0 = arith.constant 0 : i32
    %c0_i32_1 = arith.constant 0 : i32
    return %c0_i32, %c0_i32_0 : i32, i32
  }
  func.func @transform_9(%arg0: i32) -> (i32, i32) {
    %c0_i32 = arith.constant 0 : i32
    %c0_i32_0 = arith.constant 0 : i32
    %c0_i32_1 = arith.constant 0 : i32
    return %c0_i32, %c0_i32_0 : i32, i32
  }
  func.func @transform_10(%arg0: i32) -> (i32, i32, i32) {
    %c0_i32 = arith.constant 0 : i32
    %c0_i32_0 = arith.constant 0 : i32
    %c0_i32_1 = arith.constant 0 : i32
    %c0_i32_2 = arith.constant 0 : i32
    return %c0_i32, %c0_i32_0, %c0_i32_1 : i32, i32, i32
  }
  func.func @transform_11(%arg0: i32) -> (i32, i32) {
    %c0_i32 = arith.constant 0 : i32
    %c0_i32_0 = arith.constant 0 : i32
    %c0_i32_1 = arith.constant 0 : i32
    return %c0_i32, %c0_i32_0 : i32, i32
  }
  func.func @transform_12(%arg0: i32) -> (i32, i32) {
    %c0_i32 = arith.constant 0 : i32
    %c0_i32_0 = arith.constant 0 : i32
    %c0_i32_1 = arith.constant 0 : i32
    return %c0_i32, %c0_i32_0 : i32, i32
  }
  func.func @transform_13(%arg0: i32) -> (i32, i32) {
    %c0_i32 = arith.constant 0 : i32
    %c0_i32_0 = arith.constant 0 : i32
    %c0_i32_1 = arith.constant 0 : i32
    return %c0_i32, %c0_i32_0 : i32, i32
  }
  func.func @transform_14(%arg0: i32) -> (i32, i32, i32) {
    %c0_i32 = arith.constant 0 : i32
    %c0_i32_0 = arith.constant 0 : i32
    %c0_i32_1 = arith.constant 0 : i32
    %c0_i32_2 = arith.constant 0 : i32
    return %c0_i32, %c0_i32_0, %c0_i32_1 : i32, i32, i32
  }
  func.func @transform_15(%arg0: i32) -> (i32, i32) {
    %c0_i32 = arith.constant 0 : i32
    %c0_i32_0 = arith.constant 0 : i32
    %c0_i32_1 = arith.constant 0 : i32
    return %c0_i32, %c0_i32_0 : i32, i32
  }
  func.func @transform_16(%arg0: i32) -> (i32, i32) {
    %c0_i32 = arith.constant 0 : i32
    %c0_i32_0 = arith.constant 0 : i32
    %c0_i32_1 = arith.constant 0 : i32
    return %c0_i32, %c0_i32_0 : i32, i32
  }
  func.func @transform_17(%arg0: i32) -> (i32, i32) {
    %c0_i32 = arith.constant 0 : i32
    %c0_i32_0 = arith.constant 0 : i32
    %c0_i32_1 = arith.constant 0 : i32
    return %c0_i32, %c0_i32_0 : i32, i32
  }
  func.func @transform_18(%arg0: i32) -> (i32, i32) {
    %c0_i32 = arith.constant 0 : i32
    %c0_i32_0 = arith.constant 0 : i32
    %c0_i32_1 = arith.constant 0 : i32
    return %c0_i32, %c0_i32_0 : i32, i32
  }
  func.func @transform_19(%arg0: i32) -> (i32, i32) {
    %c0_i32 = arith.constant 0 : i32
    %c0_i32_0 = arith.constant 0 : i32
    %c0_i32_1 = arith.constant 0 : i32
    return %c0_i32, %c0_i32_0 : i32, i32
  }
  func.func @transform_20(%arg0: i32) -> (i32, i32) {
    %c0_i32 = arith.constant 0 : i32
    %c0_i32_0 = arith.constant 0 : i32
    %c0_i32_1 = arith.constant 0 : i32
    return %c0_i32, %c0_i32_0 : i32, i32
  }
  func.func @transform_21(%arg0: i32) -> (i32, i32) {
    %c0_i32 = arith.constant 0 : i32
    %c0_i32_0 = arith.constant 0 : i32
    %c0_i32_1 = arith.constant 0 : i32
    return %c0_i32, %c0_i32_0 : i32, i32
  }
}

</mosaic_0001>

<llo_original>
// kernel: vae_pallas_forward.1
$region0: #{vae_pallas_forward.1}
  #allocation0 [shape = 'u32[]', space=smem, size = 0x4, offset = 0x4, fixed_abs, tag = 'smem constant byte address 0x4 - core index']
  #allocation1 [shape = 'u32[72,128]{1,0:T(1,128)}', space=vmem, size = 0x9000, scoped, tag = 'internal scratch']
  #allocation2 [shape = 'f32[14,224]{1,0:T(8,128)}', space=vmem, size = 0x4000, scoped, tag = 'scratch operand']
  %s0 = inlined_call_operand.vmem [shape: f32[9,8,9], index: 0, kind: input, shape index: {}]
  %s1 = inlined_call_operand.vmem [shape: f32[9,32], index: 1, kind: input, shape index: {}]
  %s2 = inlined_call_operand.vmem [shape: f32[1,32], index: 2, kind: input, shape index: {}]
  %s3 = inlined_call_operand.vmem [shape: f32[9,32,64], index: 3, kind: input, shape index: {}]
  %s4 = inlined_call_operand.vmem [shape: f32[1,64], index: 4, kind: input, shape index: {}]
  %s5 = inlined_call_operand.vmem [shape: f32[4,64,128], index: 5, kind: input, shape index: {}]
  %s6 = inlined_call_operand.vmem [shape: f32[1,128], index: 6, kind: input, shape index: {}]
  %s7 = inlined_call_operand.vmem [shape: f32[2,64], index: 7, kind: input, shape index: {}]
  %s8 = inlined_call_operand.vmem [shape: f32[64,196], index: 8, kind: input, shape index: {}]
  %s9 = inlined_call_operand.vmem [shape: f32[1,196], index: 9, kind: input, shape index: {}]
  %s10 = inlined_call_operand.vmem [shape: f32[4,196,512], index: 10, kind: input, shape index: {}]
  %s11 = inlined_call_operand.vmem [shape: f32[1,512], index: 11, kind: input, shape index: {}]
  %s12 = inlined_call_operand.vmem [shape: f32[1,128], index: 12, kind: input, shape index: {}]
  %s13 = inlined_call_operand.vmem [shape: f32[1,128], index: 13, kind: input, shape index: {}]
  %s14 = inlined_call_operand.vmem [shape: f32[4,512,224], index: 14, kind: input, shape index: {}]
  %s15 = inlined_call_operand.vmem [shape: f32[1,224], index: 15, kind: input, shape index: {}]
  %s16 = inlined_call_operand.vmem [shape: f32[1,32], index: 16, kind: input, shape index: {}]
  %s17 = inlined_call_operand.vmem [shape: f32[1,32], index: 17, kind: input, shape index: {}]
  %s18 = inlined_call_operand.vmem [shape: f32[224,28], index: 18, kind: input, shape index: {}]
  %s19 = inlined_call_operand.vmem [shape: f32[1,28], index: 19, kind: input, shape index: {}]
  %s20 = inlined_call_operand.vmem [shape: f32[2,128], index: 20, kind: output, shape index: {0}]
  %s21 = inlined_call_operand.vmem [shape: f32[14,28], index: 21, kind: output, shape index: {1}]
  %22 = xla_tuple %s20, %s21
  %s23 = sld [smem:[#allocation0]]
  $region98: #{vae_pallas_forward.1} parent=0
    _
  %s25 = ssub.s32 1, %s23
  %s26 = scalar_select 0, %s25, %s23
  // Predicated region
  $region2: #{vae_pallas_forward.1} parent=0 // pred_check
    _
  $region3: #{vae_pallas_forward.1} parent=0 // pred_check_branch
    %28 = sbr.rel (0) target = $region5
  $region4: #{vae_pallas_forward.1} parent=0 // pred_region
    _
  $region5: #{vae_pallas_forward.1} parent=0 // pred_fallthru
    _
  // Predicated region
  $region6: #{vae_pallas_forward.1} parent=0 // pred_check
    _
  $region7: #{vae_pallas_forward.1} parent=0 // pred_check_branch
    %30 = sbr.rel (0) target = $region9
  $region8: #{vae_pallas_forward.1} parent=0 // pred_region
    _
  $region9: #{vae_pallas_forward.1} parent=0 // pred_fallthru
    _
  // Predicated region
  $region10: #{vae_pallas_forward.1} parent=0 // pred_check
    _
  $region11: #{vae_pallas_forward.1} parent=0 // pred_check_branch
    %32 = sbr.rel (0) target = $region13
  $region12: #{vae_pallas_forward.1} parent=0 // pred_region
    _
  $region13: #{vae_pallas_forward.1} parent=0 // pred_fallthru
    _
  // Predicated region
  $region14: #{vae_pallas_forward.1} parent=0 // pred_check
    _
  $region15: #{vae_pallas_forward.1} parent=0 // pred_check_branch
    %34 = sbr.rel (0) target = $region17
  $region16: #{vae_pallas_forward.1} parent=0 // pred_region
    _
  $region17: #{vae_pallas_forward.1} parent=0 // pred_fallthru
    _
  // Predicated region
  $region18: #{vae_pallas_forward.1} parent=0 // pred_check
    _
  $region19: #{vae_pallas_forward.1} parent=0 // pred_check_branch
    %36 = sbr.rel (0) target = $region21
  $region20: #{vae_pallas_forward.1} parent=0 // pred_region
    _
  $region21: #{vae_pallas_forward.1} parent=0 // pred_fallthru
    _
  // Predicated region
  $region22: #{vae_pallas_forward.1} parent=0 // pred_check
    _
  $region23: #{vae_pallas_forward.1} parent=0 // pred_check_branch
    %38 = sbr.rel (0) target = $region25
  $region24: #{vae_pallas_forward.1} parent=0 // pred_region
    _
  $region25: #{vae_pallas_forward.1} parent=0 // pred_fallthru
    _
  // Predicated region
  $region26: #{vae_pallas_forward.1} parent=0 // pred_check
    _
  $region27: #{vae_pallas_forward.1} parent=0 // pred_check_branch
    %40 = sbr.rel (0) target = $region29
  $region28: #{vae_pallas_forward.1} parent=0 // pred_region
    _
  $region29: #{vae_pallas_forward.1} parent=0 // pred_fallthru
    _
  // Predicated region
  $region30: #{vae_pallas_forward.1} parent=0 // pred_check
    _
  $region31: #{vae_pallas_forward.1} parent=0 // pred_check_branch
    %42 = sbr.rel (0) target = $region33
  $region32: #{vae_pallas_forward.1} parent=0 // pred_region
    _
  $region33: #{vae_pallas_forward.1} parent=0 // pred_fallthru
    _
  // Predicated region
  $region34: #{vae_pallas_forward.1} parent=0 // pred_check
    _
  $region35: #{vae_pallas_forward.1} parent=0 // pred_check_branch
    %44 = sbr.rel (0) target = $region37
  $region36: #{vae_pallas_forward.1} parent=0 // pred_region
    _
  $region37: #{vae_pallas_forward.1} parent=0 // pred_fallthru
    _
  // Predicated region
  $region38: #{vae_pallas_forward.1} parent=0 // pred_check
    _
  $region39: #{vae_pallas_forward.1} parent=0 // pred_check_branch
    %46 = sbr.rel (0) target = $region41
  $region40: #{vae_pallas_forward.1} parent=0 // pred_region
    _
  $region41: #{vae_pallas_forward.1} parent=0 // pred_fallthru
    _
  // Predicated region
  $region42: #{vae_pallas_forward.1} parent=0 // pred_check
    _
  $region43: #{vae_pallas_forward.1} parent=0 // pred_check_branch
    %48 = sbr.rel (0) target = $region45
  $region44: #{vae_pallas_forward.1} parent=0 // pred_region
    _
  $region45: #{vae_pallas_forward.1} parent=0 // pred_fallthru
    _
  // Predicated region
  $region46: #{vae_pallas_forward.1} parent=0 // pred_check
    _
  $region47: #{vae_pallas_forward.1} parent=0 // pred_check_branch
    %50 = sbr.rel (0) target = $region49
  $region48: #{vae_pallas_forward.1} parent=0 // pred_region
    _
  $region49: #{vae_pallas_forward.1} parent=0 // pred_fallthru
    _
  // Predicated region
  $region50: #{vae_pallas_forward.1} parent=0 // pred_check
    _
  $region51: #{vae_pallas_forward.1} parent=0 // pred_check_branch
    %52 = sbr.rel (0) target = $region53
  $region52: #{vae_pallas_forward.1} parent=0 // pred_region
    _
  $region53: #{vae_pallas_forward.1} parent=0 // pred_fallthru
    _
  // Predicated region
  $region54: #{vae_pallas_forward.1} parent=0 // pred_check
    _
  $region55: #{vae_pallas_forward.1} parent=0 // pred_check_branch
    %54 = sbr.rel (0) target = $region57
  $region56: #{vae_pallas_forward.1} parent=0 // pred_region
    _
  $region57: #{vae_pallas_forward.1} parent=0 // pred_fallthru
    _
  // Predicated region
  $region58: #{vae_pallas_forward.1} parent=0 // pred_check
    _
  $region59: #{vae_pallas_forward.1} parent=0 // pred_check_branch
    %56 = sbr.rel (0) target = $region61
  $region60: #{vae_pallas_forward.1} parent=0 // pred_region
    _
  $region61: #{vae_pallas_forward.1} parent=0 // pred_fallthru
    _
  // Predicated region
  $region62: #{vae_pallas_forward.1} parent=0 // pred_check
    _
  $region63: #{vae_pallas_forward.1} parent=0 // pred_check_branch
    %58 = sbr.rel (0) target = $region65
  $region64: #{vae_pallas_forward.1} parent=0 // pred_region
    _
  $region65: #{vae_pallas_forward.1} parent=0 // pred_fallthru
    _
  // Predicated region
  $region66: #{vae_pallas_forward.1} parent=0 // pred_check
    _
  $region67: #{vae_pallas_forward.1} parent=0 // pred_check_branch
    %60 = sbr.rel (0) target = $region69
  $region68: #{vae_pallas_forward.1} parent=0 // pred_region
    _
  $region69: #{vae_pallas_forward.1} parent=0 // pred_fallthru
    _
  // Predicated region
  $region70: #{vae_pallas_forward.1} parent=0 // pred_check
    _
  $region71: #{vae_pallas_forward.1} parent=0 // pred_check_branch
    %62 = sbr.rel (0) target = $region73
  $region72: #{vae_pallas_forward.1} parent=0 // pred_region
    _
  $region73: #{vae_pallas_forward.1} parent=0 // pred_fallthru
    _
  // Predicated region
  $region74: #{vae_pallas_forward.1} parent=0 // pred_check
    _
  $region75: #{vae_pallas_forward.1} parent=0 // pred_check_branch
    %64 = sbr.rel (0) target = $region77
  $region76: #{vae_pallas_forward.1} parent=0 // pred_region
    _
  $region77: #{vae_pallas_forward.1} parent=0 // pred_fallthru
    _
  // Predicated region
  $region78: #{vae_pallas_forward.1} parent=0 // pred_check
    _
  $region79: #{vae_pallas_forward.1} parent=0 // pred_check_branch
    %66 = sbr.rel (0) target = $region81
  $region80: #{vae_pallas_forward.1} parent=0 // pred_region
    _
  $region81: #{vae_pallas_forward.1} parent=0 // pred_fallthru
    _
  %v67 = vld [vmem:[%s0] sm:$0xff]
  %v68 = vld [vmem:[%s1] sm:$0xff]
  %v69 = vld [vmem:[%s1 + $0x8] sm:$0x1]
  %v70 = vld [vmem:[%s2] sm:$0x1]
  %v72 = vperm.slane %v70, 0
  %vm74 = vcmask 72704
  %v76 = vsel %vm74, %v67, 0
  %vm78 = vcmask 1040384
  %v80 = vsel %vm78, %v69, 0
  %82 = vmatpush.msra.mxu0 0.0
  %83 = vmatpush.msra.mxu0 0.0
  %84 = vmatpush.msra.mxu0 0.0
  %85 = vmatpush.msra.mxu0 0.0
  %86 = vmatpush.msra.mxu0 0.0
  %87 = vmatpush.msra.mxu0 0.0
  %88 = vmatpush.msra.mxu0 0.0
  %89 = vmatpush.msra.mxu0 0.0
  %90 = vmatpush.msra.mxu0 0.0
  %91 = vmatpush.msra.mxu0 0.0
  %92 = vmatpush.msra.mxu0 0.0
  %93 = vmatpush.msra.mxu0 0.0
  %94 = vmatpush.msra.mxu0 0.0
  %95 = vmatpush.msra.mxu0 0.0
  %96 = vmatpush.msra.mxu0 %v80
  %97 = vmatpush.msra.mxu0 %v68
  %98 = vmatmul.f32.gmra.mxu0 %v76
  %v99 = vpop.f32.mrf.mxu0
  %v100 = vadd.f32 %v72, %v99
  %101 = vdwg.mxu0
  %v102 = vmax.f32 %v100, 0.0
  %v103 = vld [vmem:[%s3] sm:$0xff]
  %v104 = vld [vmem:[%s3 + $0x8] sm:$0xff]
  %v105 = vld [vmem:[%s3 + $0x10] sm:$0xff]
  %v106 = vld [vmem:[%s3 + $0x18] sm:$0xff]
  %s107 = scalar_lea.vmem %s0, 8
  %v108 = vld [vmem:[%s107] sm:$0xff]
  %v110 = vsel %vm74, %v108, 0
  %112 = vmatpush.msra.mxu0 0.0
  %113 = vmatpush.msra.mxu0 0.0
  %114 = vmatpush.msra.mxu0 0.0
  %115 = vmatpush.msra.mxu0 0.0
  %116 = vmatpush.msra.mxu0 0.0
  %117 = vmatpush.msra.mxu0 0.0
  %118 = vmatpush.msra.mxu0 0.0
  %119 = vmatpush.msra.mxu0 0.0
  %120 = vmatpush.msra.mxu0 0.0
  %121 = vmatpush.msra.mxu0 0.0
  %122 = vmatpush.msra.mxu0 0.0
  %123 = vmatpush.msra.mxu0 0.0
  %124 = vmatpush.msra.mxu0 0.0
  %125 = vmatpush.msra.mxu0 0.0
  %126 = vmatpush.msra.mxu0 %v80
  %127 = vmatpush.msra.mxu0 %v68
  %128 = vmatmul.f32.gmra.mxu0 %v110
  %v129 = vpop.f32.mrf.mxu0
  %v130 = vadd.f32 %v72, %v129
  %131 = vdwg.mxu0
  %v132 = vmax.f32 %v130, 0.0
  %s133 = scalar_lea.vmem %s3, 32
  %v134 = vld [vmem:[%s133] sm:$0xff]
  %v135 = vld [vmem:[%s133 + $0x8] sm:$0xff]
  %v136 = vld [vmem:[%s133 + $0x10] sm:$0xff]
  %v137 = vld [vmem:[%s133 + $0x18] sm:$0xff]
  %vm138 = vcmask 261120
  %v140 = vsel %vm138, %v132, 0
  %142 = vmatpush.msra.mxu0 0.0
  %143 = vmatpush.msra.mxu0 0.0
  %144 = vmatpush.msra.mxu0 0.0
  %145 = vmatpush.msra.mxu0 0.0
  %146 = vmatpush.msra.mxu0 0.0
  %147 = vmatpush.msra.mxu0 0.0
  %148 = vmatpush.msra.mxu0 0.0
  %149 = vmatpush.msra.mxu0 0.0
  %150 = vmatpush.msra.mxu0 0.0
  %151 = vmatpush.msra.mxu0 0.0
  %152 = vmatpush.msra.mxu0 0.0
  %153 = vmatpush.msra.mxu0 0.0
  %154 = vmatpush.msra.mxu0 %v137
  %155 = vmatpush.msra.mxu0 %v136
  %156 = vmatpush.msra.mxu0 %v135
  %157 = vmatpush.msra.mxu0 %v134
  %158 = vmatmul.f32.gmra.mxu0 %v140
  %v159 = vpop.f32.mrf.mxu0
  %v160 = vadd.f32 0.0, %v159
  %161 = vdwg.mxu0
  %v163 = vsel %vm138, %v102, 0
  %165 = vmatpush.msra.mxu0 0.0
  %166 = vmatpush.msra.mxu0 0.0
  %167 = vmatpush.msra.mxu0 0.0
  %168 = vmatpush.msra.mxu0 0.0
  %169 = vmatpush.msra.mxu0 0.0
  %170 = vmatpush.msra.mxu0 0.0
  %171 = vmatpush.msra.mxu0 0.0
  %172 = vmatpush.msra.mxu0 0.0
  %173 = vmatpush.msra.mxu0 0.0
  %174 = vmatpush.msra.mxu0 0.0
  %175 = vmatpush.msra.mxu0 0.0
  %176 = vmatpush.msra.mxu0 0.0
  %177 = vmatpush.msra.mxu0 %v106
  %178 = vmatpush.msra.mxu0 %v105
  %179 = vmatpush.msra.mxu0 %v104
  %180 = vmatpush.msra.mxu0 %v103
  %181 = vmatmul.f32.gmra.mxu0 %v163
  %v182 = vpop.f32.mrf.mxu0
  %v183 = vadd.f32 %v160, %v182
  %184 = vdwg.mxu0
  %s185 = scalar_lea.vmem %s0, 16
  %v186 = vld [vmem:[%s185] sm:$0xff]
  %v188 = vsel %vm74, %v186, 0
  %190 = vmatpush.msra.mxu0 0.0
  %191 = vmatpush.msra.mxu0 0.0
  %192 = vmatpush.msra.mxu0 0.0
  %193 = vmatpush.msra.mxu0 0.0
  %194 = vmatpush.msra.mxu0 0.0
  %195 = vmatpush.msra.mxu0 0.0
  %196 = vmatpush.msra.mxu0 0.0
  %197 = vmatpush.msra.mxu0 0.0
  %198 = vmatpush.msra.mxu0 0.0
  %199 = vmatpush.msra.mxu0 0.0
  %200 = vmatpush.msra.mxu0 0.0
  %201 = vmatpush.msra.mxu0 0.0
  %202 = vmatpush.msra.mxu0 0.0
  %203 = vmatpush.msra.mxu0 0.0
  %204 = vmatpush.msra.mxu0 %v80
  %205 = vmatpush.msra.mxu0 %v68
  %206 = vmatmul.f32.gmra.mxu0 %v188
  %v207 = vpop.f32.mrf.mxu0
  %v208 = vadd.f32 %v72, %v207
  %209 = vdwg.mxu0
  %v210 = vmax.f32 %v208, 0.0
  %s211 = scalar_lea.vmem %s3, 64
  %v212 = vld [vmem:[%s211] sm:$0xff]
  %v213 = vld [vmem:[%s211 + $0x8] sm:$0xff]
  %v214 = vld [vmem:[%s211 + $0x10] sm:$0xff]
  %v215 = vld [vmem:[%s211 + $0x18] sm:$0xff]
  %v217 = vsel %vm138, %v210, 0
  %219 = vmatpush.msra.mxu0 0.0
  %220 = vmatpush.msra.mxu0 0.0
  %221 = vmatpush.msra.mxu0 0.0
  %222 = vmatpush.msra.mxu0 0.0
  %223 = vmatpush.msra.mxu0 0.0
  %224 = vmatpush.msra.mxu0 0.0
  %225 = vmatpush.msra.mxu0 0.0
  %226 = vmatpush.msra.mxu0 0.0
  %227 = vmatpush.msra.mxu0 0.0
  %228 = vmatpush.msra.mxu0 0.0
  %229 = vmatpush.msra.mxu0 0.0
  %230 = vmatpush.msra.mxu0 0.0
  %231 = vmatpush.msra.mxu0 %v215
  %232 = vmatpush.msra.mxu0 %v214
  %233 = vmatpush.msra.mxu0 %v213
  %234 = vmatpush.msra.mxu0 %v212
  %235 = vmatmul.f32.gmra.mxu0 %v217
  %v236 = vpop.f32.mrf.mxu0
  %v237 = vadd.f32 0.0, %v236
  %238 = vdwg.mxu0
  %v239 = vadd.f32 %v183, %v237
  %s240 = scalar_lea.vmem %s0, 24
  %v241 = vld [vmem:[%s240] sm:$0xff]
  %v243 = vsel %vm74, %v241, 0
  %245 = vmatpush.msra.mxu0 0.0
  %246 = vmatpush.msra.mxu0 0.0
  %247 = vmatpush.msra.mxu0 0.0
  %248 = vmatpush.msra.mxu0 0.0
  %249 = vmatpush.msra.mxu0 0.0
  %250 = vmatpush.msra.mxu0 0.0
  %251 = vmatpush.msra.mxu0 0.0
  %252 = vmatpush.msra.mxu0 0.0
  %253 = vmatpush.msra.mxu0 0.0
  %254 = vmatpush.msra.mxu0 0.0
  %255 = vmatpush.msra.mxu0 0.0
  %256 = vmatpush.msra.mxu0 0.0
  %257 = vmatpush.msra.mxu0 0.0
  %258 = vmatpush.msra.mxu0 0.0
  %259 = vmatpush.msra.mxu0 %v80
  %260 = vmatpush.msra.mxu0 %v68
  %261 = vmatmul.f32.gmra.mxu0 %v243
  %v262 = vpop.f32.mrf.mxu0
  %v263 = vadd.f32 %v72, %v262
  %264 = vdwg.mxu0
  %v265 = vmax.f32 %v263, 0.0
  %s266 = scalar_lea.vmem %s3, 96
  %v267 = vld [vmem:[%s266] sm:$0xff]
  %v268 = vld [vmem:[%s266 + $0x8] sm:$0xff]
  %v269 = vld [vmem:[%s266 + $0x10] sm:$0xff]
  %v270 = vld [vmem:[%s266 + $0x18] sm:$0xff]
  %v272 = vsel %vm138, %v265, 0
  %274 = vmatpush.msra.mxu0 0.0
  %275 = vmatpush.msra.mxu0 0.0
  %276 = vmatpush.msra.mxu0 0.0
  %277 = vmatpush.msra.mxu0 0.0
  %278 = vmatpush.msra.mxu0 0.0
  %279 = vmatpush.msra.mxu0 0.0
  %280 = vmatpush.msra.mxu0 0.0
  %281 = vmatpush.msra.mxu0 0.0
  %282 = vmatpush.msra.mxu0 0.0
  %283 = vmatpush.msra.mxu0 0.0
  %284 = vmatpush.msra.mxu0 0.0
  %285 = vmatpush.msra.mxu0 0.0
  %286 = vmatpush.msra.mxu0 %v270
  %287 = vmatpush.msra.mxu0 %v269
  %288 = vmatpush.msra.mxu0 %v268
  %289 = vmatpush.msra.mxu0 %v267
  %290 = vmatmul.f32.gmra.mxu0 %v272
  %v291 = vpop.f32.mrf.mxu0
  %v292 = vadd.f32 0.0, %v291
  %293 = vdwg.mxu0
  %v294 = vadd.f32 %v239, %v292
  %s295 = scalar_lea.vmem %s0, 32
  %v296 = vld [vmem:[%s295] sm:$0xff]
  %v298 = vsel %vm74, %v296, 0
  %300 = vmatpush.msra.mxu0 0.0
  %301 = vmatpush.msra.mxu0 0.0
  %302 = vmatpush.msra.mxu0 0.0
  %303 = vmatpush.msra.mxu0 0.0
  %304 = vmatpush.msra.mxu0 0.0
  %305 = vmatpush.msra.mxu0 0.0
  %306 = vmatpush.msra.mxu0 0.0
  %307 = vmatpush.msra.mxu0 0.0
  %308 = vmatpush.msra.mxu0 0.0
  %309 = vmatpush.msra.mxu0 0.0
  %310 = vmatpush.msra.mxu0 0.0
  %311 = vmatpush.msra.mxu0 0.0
  %312 = vmatpush.msra.mxu0 0.0
  %313 = vmatpush.msra.mxu0 0.0
  %314 = vmatpush.msra.mxu0 %v80
  %315 = vmatpush.msra.mxu0 %v68
  %316 = vmatmul.f32.gmra.mxu0 %v298
  %v317 = vpop.f32.mrf.mxu0
  %v318 = vadd.f32 %v72, %v317
  %319 = vdwg.mxu0
  %v320 = vmax.f32 %v318, 0.0
  %s321 = scalar_lea.vmem %s3, 128
  %v322 = vld [vmem:[%s321] sm:$0xff]
  %v323 = vld [vmem:[%s321 + $0x8] sm:$0xff]
  %v324 = vld [vmem:[%s321 + $0x10] sm:$0xff]
  %v325 = vld [vmem:[%s321 + $0x18] sm:$0xff]
  %v327 = vsel %vm138, %v320, 0
  %329 = vmatpush.msra.mxu0 0.0
  %330 = vmatpush.msra.mxu0 0.0
  %331 = vmatpush.msra.mxu0 0.0
  %332 = vmatpush.msra.mxu0 0.0
  %333 = vmatpush.msra.mxu0 0.0
  %334 = vmatpush.msra.mxu0 0.0
  %335 = vmatpush.msra.mxu0 0.0
  %336 = vmatpush.msra.mxu0 0.0
  %337 = vmatpush.msra.mxu0 0.0
  %338 = vmatpush.msra.mxu0 0.0
  %339 = vmatpush.msra.mxu0 0.0
  %340 = vmatpush.msra.mxu0 0.0
  %341 = vmatpush.msra.mxu0 %v325
  %342 = vmatpush.msra.mxu0 %v324
  %343 = vmatpush.msra.mxu0 %v323
  %344 = vmatpush.msra.mxu0 %v322
  %345 = vmatmul.f32.gmra.mxu0 %v327
  %v346 = vpop.f32.mrf.mxu0
  %v347 = vadd.f32 0.0, %v346
  %348 = vdwg.mxu0
  %v349 = vadd.f32 %v294, %v347
  %s350 = scalar_lea.vmem %s0, 40
  %v351 = vld [vmem:[%s350] sm:$0xff]
  %v353 = vsel %vm74, %v351, 0
  %355 = vmatpush.msra.mxu0 0.0
  %356 = vmatpush.msra.mxu0 0.0
  %357 = vmatpush.msra.mxu0 0.0
  %358 = vmatpush.msra.mxu0 0.0
  %359 = vmatpush.msra.mxu0 0.0
  %360 = vmatpush.msra.mxu0 0.0
  %361 = vmatpush.msra.mxu0 0.0
  %362 = vmatpush.msra.mxu0 0.0
  %363 = vmatpush.msra.mxu0 0.0
  %364 = vmatpush.msra.mxu0 0.0
  %365 = vmatpush.msra.mxu0 0.0
  %366 = vmatpush.msra.mxu0 0.0
  %367 = vmatpush.msra.mxu0 0.0
  %368 = vmatpush.msra.mxu0 0.0
  %369 = vmatpush.msra.mxu0 %v80
  %370 = vmatpush.msra.mxu0 %v68
  %371 = vmatmul.f32.gmra.mxu0 %v353
  %v372 = vpop.f32.mrf.mxu0
  %v373 = vadd.f32 %v72, %v372
  %374 = vdwg.mxu0
  %v375 = vmax.f32 %v373, 0.0
  %s376 = scalar_lea.vmem %s3, 160
  %v377 = vld [vmem:[%s376] sm:$0xff]
  %v378 = vld [vmem:[%s376 + $0x8] sm:$0xff]
  %v379 = vld [vmem:[%s376 + $0x10] sm:$0xff]
  %v380 = vld [vmem:[%s376 + $0x18] sm:$0xff]
  %v382 = vsel %vm138, %v375, 0
  %384 = vmatpush.msra.mxu0 0.0
  %385 = vmatpush.msra.mxu0 0.0
  %386 = vmatpush.msra.mxu0 0.0
  %387 = vmatpush.msra.mxu0 0.0
  %388 = vmatpush.msra.mxu0 0.0
  %389 = vmatpush.msra.mxu0 0.0
  %390 = vmatpush.msra.mxu0 0.0
  %391 = vmatpush.msra.mxu0 0.0
  %392 = vmatpush.msra.mxu0 0.0
  %393 = vmatpush.msra.mxu0 0.0
  %394 = vmatpush.msra.mxu0 0.0
  %395 = vmatpush.msra.mxu0 0.0
  %396 = vmatpush.msra.mxu0 %v380
  %397 = vmatpush.msra.mxu0 %v379
  %398 = vmatpush.msra.mxu0 %v378
  %399 = vmatpush.msra.mxu0 %v377
  %400 = vmatmul.f32.gmra.mxu0 %v382
  %v401 = vpop.f32.mrf.mxu0
  %v402 = vadd.f32 0.0, %v401
  %403 = vdwg.mxu0
  %v404 = vadd.f32 %v349, %v402
  %s405 = scalar_lea.vmem %s0, 48
  %v406 = vld [vmem:[%s405] sm:$0xff]
  %v408 = vsel %vm74, %v406, 0
  %410 = vmatpush.msra.mxu0 0.0
  %411 = vmatpush.msra.mxu0 0.0
  %412 = vmatpush.msra.mxu0 0.0
  %413 = vmatpush.msra.mxu0 0.0
  %414 = vmatpush.msra.mxu0 0.0
  %415 = vmatpush.msra.mxu0 0.0
  %416 = vmatpush.msra.mxu0 0.0
  %417 = vmatpush.msra.mxu0 0.0
  %418 = vmatpush.msra.mxu0 0.0
  %419 = vmatpush.msra.mxu0 0.0
  %420 = vmatpush.msra.mxu0 0.0
  %421 = vmatpush.msra.mxu0 0.0
  %422 = vmatpush.msra.mxu0 0.0
  %423 = vmatpush.msra.mxu0 0.0
  %424 = vmatpush.msra.mxu0 %v80
  %425 = vmatpush.msra.mxu0 %v68
  %426 = vmatmul.f32.gmra.mxu0 %v408
  %v427 = vpop.f32.mrf.mxu0
  %v428 = vadd.f32 %v72, %v427
  %429 = vdwg.mxu0
  %v430 = vmax.f32 %v428, 0.0
  %s431 = scalar_lea.vmem %s3, 192
  %v432 = vld [vmem:[%s431] sm:$0xff]
  %v433 = vld [vmem:[%s431 + $0x8] sm:$0xff]
  %v434 = vld [vmem:[%s431 + $0x10] sm:$0xff]
  %v435 = vld [vmem:[%s431 + $0x18] sm:$0xff]
  %v437 = vsel %vm138, %v430, 0
  %439 = vmatpush.msra.mxu0 0.0
  %440 = vmatpush.msra.mxu0 0.0
  %441 = vmatpush.msra.mxu0 0.0
  %442 = vmatpush.msra.mxu0 0.0
  %443 = vmatpush.msra.mxu0 0.0
  %444 = vmatpush.msra.mxu0 0.0
  %445 = vmatpush.msra.mxu0 0.0
  %446 = vmatpush.msra.mxu0 0.0
  %447 = vmatpush.msra.mxu0 0.0
  %448 = vmatpush.msra.mxu0 0.0
  %449 = vmatpush.msra.mxu0 0.0
  %450 = vmatpush.msra.mxu0 0.0
  %451 = vmatpush.msra.mxu0 %v435
  %452 = vmatpush.msra.mxu0 %v434
  %453 = vmatpush.msra.mxu0 %v433
  %454 = vmatpush.msra.mxu0 %v432
  %455 = vmatmul.f32.gmra.mxu0 %v437
  %v456 = vpop.f32.mrf.mxu0
  %v457 = vadd.f32 0.0, %v456
  %458 = vdwg.mxu0
  %v459 = vadd.f32 %v404, %v457
  %s460 = scalar_lea.vmem %s0, 56
  %v461 = vld [vmem:[%s460] sm:$0xff]
  %v463 = vsel %vm74, %v461, 0
  %465 = vmatpush.msra.mxu0 0.0
  %466 = vmatpush.msra.mxu0 0.0
  %467 = vmatpush.msra.mxu0 0.0
  %468 = vmatpush.msra.mxu0 0.0
  %469 = vmatpush.msra.mxu0 0.0
  %470 = vmatpush.msra.mxu0 0.0
  %471 = vmatpush.msra.mxu0 0.0
  %472 = vmatpush.msra.mxu0 0.0
  %473 = vmatpush.msra.mxu0 0.0
  %474 = vmatpush.msra.mxu0 0.0
  %475 = vmatpush.msra.mxu0 0.0
  %476 = vmatpush.msra.mxu0 0.0
  %477 = vmatpush.msra.mxu0 0.0
  %478 = vmatpush.msra.mxu0 0.0
  %479 = vmatpush.msra.mxu0 %v80
  %480 = vmatpush.msra.mxu0 %v68
  %481 = vmatmul.f32.gmra.mxu0 %v463
  %v482 = vpop.f32.mrf.mxu0
  %v483 = vadd.f32 %v72, %v482
  %484 = vdwg.mxu0
  %v485 = vmax.f32 %v483, 0.0
  %s486 = scalar_lea.vmem %s3, 224
  %v487 = vld [vmem:[%s486] sm:$0xff]
  %v488 = vld [vmem:[%s486 + $0x8] sm:$0xff]
  %v489 = vld [vmem:[%s486 + $0x10] sm:$0xff]
  %v490 = vld [vmem:[%s486 + $0x18] sm:$0xff]
  %v492 = vsel %vm138, %v485, 0
  %494 = vmatpush.msra.mxu0 0.0
  %495 = vmatpush.msra.mxu0 0.0
  %496 = vmatpush.msra.mxu0 0.0
  %497 = vmatpush.msra.mxu0 0.0
  %498 = vmatpush.msra.mxu0 0.0
  %499 = vmatpush.msra.mxu0 0.0
  %500 = vmatpush.msra.mxu0 0.0
  %501 = vmatpush.msra.mxu0 0.0
  %502 = vmatpush.msra.mxu0 0.0
  %503 = vmatpush.msra.mxu0 0.0
  %504 = vmatpush.msra.mxu0 0.0
  %505 = vmatpush.msra.mxu0 0.0
  %506 = vmatpush.msra.mxu0 %v490
  %507 = vmatpush.msra.mxu0 %v489
  %508 = vmatpush.msra.mxu0 %v488
  %509 = vmatpush.msra.mxu0 %v487
  %510 = vmatmul.f32.gmra.mxu0 %v492
  %v511 = vpop.f32.mrf.mxu0
  %v512 = vadd.f32 0.0, %v511
  %513 = vdwg.mxu0
  %v514 = vadd.f32 %v459, %v512
  %s515 = scalar_lea.vmem %s0, 64
  %v516 = vld [vmem:[%s515] sm:$0xff]
  %v518 = vsel %vm74, %v516, 0
  %520 = vmatpush.msra.mxu0 0.0
  %521 = vmatpush.msra.mxu0 0.0
  %522 = vmatpush.msra.mxu0 0.0
  %523 = vmatpush.msra.mxu0 0.0
  %524 = vmatpush.msra.mxu0 0.0
  %525 = vmatpush.msra.mxu0 0.0
  %526 = vmatpush.msra.mxu0 0.0
  %527 = vmatpush.msra.mxu0 0.0
  %528 = vmatpush.msra.mxu0 0.0
  %529 = vmatpush.msra.mxu0 0.0
  %530 = vmatpush.msra.mxu0 0.0
  %531 = vmatpush.msra.mxu0 0.0
  %532 = vmatpush.msra.mxu0 0.0
  %533 = vmatpush.msra.mxu0 0.0
  %534 = vmatpush.msra.mxu0 %v80
  %535 = vmatpush.msra.mxu0 %v68
  %536 = vmatmul.f32.gmra.mxu0 %v518
  %v537 = vpop.f32.mrf.mxu0
  %v538 = vadd.f32 %v72, %v537
  %539 = vdwg.mxu0
  %v540 = vmax.f32 %v538, 0.0
  %s541 = scalar_lea.vmem %s3, 256
  %v542 = vld [vmem:[%s541] sm:$0xff]
  %v543 = vld [vmem:[%s541 + $0x8] sm:$0xff]
  %v544 = vld [vmem:[%s541 + $0x10] sm:$0xff]
  %v545 = vld [vmem:[%s541 + $0x18] sm:$0xff]
  %v547 = vsel %vm138, %v540, 0
  %549 = vmatpush.msra.mxu0 0.0
  %550 = vmatpush.msra.mxu0 0.0
  %551 = vmatpush.msra.mxu0 0.0
  %552 = vmatpush.msra.mxu0 0.0
  %553 = vmatpush.msra.mxu0 0.0
  %554 = vmatpush.msra.mxu0 0.0
  %555 = vmatpush.msra.mxu0 0.0
  %556 = vmatpush.msra.mxu0 0.0
  %557 = vmatpush.msra.mxu0 0.0
  %558 = vmatpush.msra.mxu0 0.0
  %559 = vmatpush.msra.mxu0 0.0
  %560 = vmatpush.msra.mxu0 0.0
  %561 = vmatpush.msra.mxu0 %v545
  %562 = vmatpush.msra.mxu0 %v544
  %563 = vmatpush.msra.mxu0 %v543
  %564 = vmatpush.msra.mxu0 %v542
  %565 = vmatmul.f32.gmra.mxu0 %v547
  %v566 = vpop.f32.mrf.mxu0
  %v567 = vadd.f32 0.0, %v566
  %568 = vdwg.mxu0
  %v569 = vadd.f32 %v514, %v567
  %v570 = vld [vmem:[%s4] sm:$0x1]
  %v572 = vperm.slane %v570, 0
  %v574 = vadd.f32 %v569, %v572
  %v575 = vmax.f32 %v574, 0.0
  %v576 = vld [vmem:[%s5] sm:$0xff]
  %v577 = vld [vmem:[%s5 + $0x8] sm:$0xff]
  %v578 = vld [vmem:[%s5 + $0x10] sm:$0xff]
  %v579 = vld [vmem:[%s5 + $0x18] sm:$0xff]
  %v580 = vld [vmem:[%s5 + $0x20] sm:$0xff]
  %v581 = vld [vmem:[%s5 + $0x28] sm:$0xff]
  %v582 = vld [vmem:[%s5 + $0x30] sm:$0xff]
  %v583 = vld [vmem:[%s5 + $0x38] sm:$0xff]
  %s584 = scalar_lea.vmem %s5, 64
  %v585 = vld [vmem:[%s584] sm:$0xff]
  %v586 = vld [vmem:[%s584 + $0x8] sm:$0xff]
  %v587 = vld [vmem:[%s584 + $0x10] sm:$0xff]
  %v588 = vld [vmem:[%s584 + $0x18] sm:$0xff]
  %v589 = vld [vmem:[%s584 + $0x20] sm:$0xff]
  %v590 = vld [vmem:[%s584 + $0x28] sm:$0xff]
  %v591 = vld [vmem:[%s584 + $0x30] sm:$0xff]
  %v592 = vld [vmem:[%s584 + $0x38] sm:$0xff]
  %v594 = vrot.slane %v575, 2
  %vm595 = vcmask 523264
  %v596 = vsel %vm595, %v594, 0
  %598 = vmatpush.msra.mxu0 0.0
  %599 = vmatpush.msra.mxu0 0.0
  %600 = vmatpush.msra.mxu0 0.0
  %601 = vmatpush.msra.mxu0 0.0
  %602 = vmatpush.msra.mxu0 0.0
  %603 = vmatpush.msra.mxu0 0.0
  %604 = vmatpush.msra.mxu0 0.0
  %605 = vmatpush.msra.mxu0 0.0
  %606 = vmatpush.msra.mxu0 %v592
  %607 = vmatpush.msra.mxu0 %v591
  %608 = vmatpush.msra.mxu0 %v590
  %609 = vmatpush.msra.mxu0 %v589
  %610 = vmatpush.msra.mxu0 %v588
  %611 = vmatpush.msra.mxu0 %v587
  %612 = vmatpush.msra.mxu0 %v586
  %613 = vmatpush.msra.mxu0 %v585
  %614 = vmatmul.f32.gmra.mxu0 %v596
  %v615 = vpop.f32.mrf.mxu0
  %v616 = vadd.f32 0.0, %v615
  %617 = vdwg.mxu0
  %v618 = vsel %vm595, %v575, 0
  %620 = vmatpush.msra.mxu0 0.0
  %621 = vmatpush.msra.mxu0 0.0
  %622 = vmatpush.msra.mxu0 0.0
  %623 = vmatpush.msra.mxu0 0.0
  %624 = vmatpush.msra.mxu0 0.0
  %625 = vmatpush.msra.mxu0 0.0
  %626 = vmatpush.msra.mxu0 0.0
  %627 = vmatpush.msra.mxu0 0.0
  %628 = vmatpush.msra.mxu0 %v583
  %629 = vmatpush.msra.mxu0 %v582
  %630 = vmatpush.msra.mxu0 %v581
  %631 = vmatpush.msra.mxu0 %v580
  %632 = vmatpush.msra.mxu0 %v579
  %633 = vmatpush.msra.mxu0 %v578
  %634 = vmatpush.msra.mxu0 %v577
  %635 = vmatpush.msra.mxu0 %v576
  %636 = vmatmul.f32.gmra.mxu0 %v618
  %v637 = vpop.f32.mrf.mxu0
  %v638 = vadd.f32 %v616, %v637
  %639 = vdwg.mxu0
  %s640 = scalar_lea.vmem %s5, 128
  %v641 = vld [vmem:[%s640] sm:$0xff]
  %v642 = vld [vmem:[%s640 + $0x8] sm:$0xff]
  %v643 = vld [vmem:[%s640 + $0x10] sm:$0xff]
  %v644 = vld [vmem:[%s640 + $0x18] sm:$0xff]
  %v645 = vld [vmem:[%s640 + $0x20] sm:$0xff]
  %v646 = vld [vmem:[%s640 + $0x28] sm:$0xff]
  %v647 = vld [vmem:[%s640 + $0x30] sm:$0xff]
  %v648 = vld [vmem:[%s640 + $0x38] sm:$0xff]
  %v649 = vrot.slane %v575, 4
  %v650 = vsel %vm595, %v649, 0
  %652 = vmatpush.msra.mxu0 0.0
  %653 = vmatpush.msra.mxu0 0.0
  %654 = vmatpush.msra.mxu0 0.0
  %655 = vmatpush.msra.mxu0 0.0
  %656 = vmatpush.msra.mxu0 0.0
  %657 = vmatpush.msra.mxu0 0.0
  %658 = vmatpush.msra.mxu0 0.0
  %659 = vmatpush.msra.mxu0 0.0
  %660 = vmatpush.msra.mxu0 %v648
  %661 = vmatpush.msra.mxu0 %v647
  %662 = vmatpush.msra.mxu0 %v646
  %663 = vmatpush.msra.mxu0 %v645
  %664 = vmatpush.msra.mxu0 %v644
  %665 = vmatpush.msra.mxu0 %v643
  %666 = vmatpush.msra.mxu0 %v642
  %667 = vmatpush.msra.mxu0 %v641
  %668 = vmatmul.f32.gmra.mxu0 %v650
  %v669 = vpop.f32.mrf.mxu0
  %v670 = vadd.f32 0.0, %v669
  %671 = vdwg.mxu0
  %v672 = vadd.f32 %v638, %v670
  %s673 = scalar_lea.vmem %s5, 192
  %v674 = vld [vmem:[%s673] sm:$0xff]
  %v675 = vld [vmem:[%s673 + $0x8] sm:$0xff]
  %v676 = vld [vmem:[%s673 + $0x10] sm:$0xff]
  %v677 = vld [vmem:[%s673 + $0x18] sm:$0xff]
  %v678 = vld [vmem:[%s673 + $0x20] sm:$0xff]
  %v679 = vld [vmem:[%s673 + $0x28] sm:$0xff]
  %v680 = vld [vmem:[%s673 + $0x30] sm:$0xff]
  %v681 = vld [vmem:[%s673 + $0x38] sm:$0xff]
  %v682 = vrot.slane %v575, 6
  %v683 = vsel %vm595, %v682, 0
  %685 = vmatpush.msra.mxu0 0.0
  %686 = vmatpush.msra.mxu0 0.0
  %687 = vmatpush.msra.mxu0 0.0
  %688 = vmatpush.msra.mxu0 0.0
  %689 = vmatpush.msra.mxu0 0.0
  %690 = vmatpush.msra.mxu0 0.0
  %691 = vmatpush.msra.mxu0 0.0
  %692 = vmatpush.msra.mxu0 0.0
  %693 = vmatpush.msra.mxu0 %v681
  %694 = vmatpush.msra.mxu0 %v680
  %695 = vmatpush.msra.mxu0 %v679
  %696 = vmatpush.msra.mxu0 %v678
  %697 = vmatpush.msra.mxu0 %v677
  %698 = vmatpush.msra.mxu0 %v676
  %699 = vmatpush.msra.mxu0 %v675
  %700 = vmatpush.msra.mxu0 %v674
  %701 = vmatmul.f32.gmra.mxu0 %v683
  %v702 = vpop.f32.mrf.mxu0
  %v703 = vadd.f32 0.0, %v702
  %704 = vdwg.mxu0
  %v705 = vadd.f32 %v672, %v703
  %v706 = vld [vmem:[%s6] sm:$0x1]
  %v708 = vperm.slane %v706, 0
  %v710 = vadd.f32 %v705, %v708
  %711 = vst [vmem:[%s20] sm:$0x3] %v710
  %v712 = vld [vmem:[%s7] sm:$0x3]
  %v713 = vmul.f32 %v710, 0.5
  %v714 = vmul.f32 %v713, 1.442695
  %v715 = vpow.pop %v714
  %717 = vrot.lane.b32.xlu0 %v715, 64
  %v718 = vpop.permute.xlu0 %717
  %v720 = vmul.f32 %v712, %v718
  %v721 = vadd.f32 %v720, %v710
  %v722 = vld [vmem:[%s8] sm:$0xff]
  %v723 = vld [vmem:[%s8 + $0x8] sm:$0xff]
  %v724 = vld [vmem:[%s8 + $0x10] sm:$0xff]
  %v725 = vld [vmem:[%s8 + $0x18] sm:$0xff]
  %v726 = vld [vmem:[%s8 + $0x20] sm:$0xff]
  %v727 = vld [vmem:[%s8 + $0x28] sm:$0xff]
  %v728 = vld [vmem:[%s8 + $0x30] sm:$0xff]
  %v729 = vld [vmem:[%s8 + $0x38] sm:$0xff]
  %v730 = vld [vmem:[%s8 + $0x40] sm:$0xff]
  %v731 = vld [vmem:[%s8 + $0x48] sm:$0xff]
  %v732 = vld [vmem:[%s8 + $0x50] sm:$0xff]
  %v733 = vld [vmem:[%s8 + $0x58] sm:$0xff]
  %v734 = vld [vmem:[%s8 + $0x60] sm:$0xff]
  %v735 = vld [vmem:[%s8 + $0x68] sm:$0xff]
  %v736 = vld [vmem:[%s8 + $0x70] sm:$0xff]
  %v737 = vld [vmem:[%s8 + $0x78] sm:$0xff]
  %v738 = vld [vmem:[%s9] sm:$0x3]
  %v740 = vperm.slane %v738, 0
  %v741 = vperm.slane %v738, 1
  %v745 = vsel %vm595, %v721, 0
  %747 = vmatpush.msra.mxu0 0.0
  %748 = vmatpush.msra.mxu0 0.0
  %749 = vmatpush.msra.mxu0 0.0
  %750 = vmatpush.msra.mxu0 0.0
  %751 = vmatpush.msra.mxu0 0.0
  %752 = vmatpush.msra.mxu0 0.0
  %753 = vmatpush.msra.mxu0 0.0
  %754 = vmatpush.msra.mxu0 0.0
  %755 = vmatpush.msra.mxu0 %v736
  %756 = vmatpush.msra.mxu0 %v734
  %757 = vmatpush.msra.mxu0 %v732
  %758 = vmatpush.msra.mxu0 %v730
  %759 = vmatpush.msra.mxu0 %v728
  %760 = vmatpush.msra.mxu0 %v726
  %761 = vmatpush.msra.mxu0 %v724
  %762 = vmatpush.msra.mxu0 %v722
  %763 = vmatmul.f32.gmra.mxu0 %v745
  %v764 = vpop.f32.mrf.mxu0
  %v765 = vadd.f32 %v740, %v764
  %766 = vdwg.mxu0
  %767 = vmatpush.msra.mxu0 0.0
  %768 = vmatpush.msra.mxu0 0.0
  %769 = vmatpush.msra.mxu0 0.0
  %770 = vmatpush.msra.mxu0 0.0
  %771 = vmatpush.msra.mxu0 0.0
  %772 = vmatpush.msra.mxu0 0.0
  %773 = vmatpush.msra.mxu0 0.0
  %774 = vmatpush.msra.mxu0 0.0
  %775 = vmatpush.msra.mxu0 %v737
  %776 = vmatpush.msra.mxu0 %v735
  %777 = vmatpush.msra.mxu0 %v733
  %778 = vmatpush.msra.mxu0 %v731
  %779 = vmatpush.msra.mxu0 %v729
  %780 = vmatpush.msra.mxu0 %v727
  %781 = vmatpush.msra.mxu0 %v725
  %782 = vmatpush.msra.mxu0 %v723
  %783 = vmatmul.f32.gmra.mxu0 %v745
  %v784 = vpop.f32.mrf.mxu0
  %v785 = vadd.f32 %v741, %v784
  %786 = vdwg.mxu0
  %v787 = vld [vmem:[%s10] sm:$0xff]
  %v788 = vld [vmem:[%s10 + $0x8] sm:$0xff]
  %v789 = vld [vmem:[%s10 + $0x10] sm:$0xff]
  %v790 = vld [vmem:[%s10 + $0x18] sm:$0xff]
  %v791 = vld [vmem:[%s10 + $0x20] sm:$0xff]
  %v792 = vld [vmem:[%s10 + $0x28] sm:$0xff]
  %v793 = vld [vmem:[%s10 + $0x30] sm:$0xff]
  %v794 = vld [vmem:[%s10 + $0x38] sm:$0xff]
  %v795 = vld [vmem:[%s10 + $0x40] sm:$0xff]
  %v796 = vld [vmem:[%s10 + $0x48] sm:$0xff]
  %v797 = vld [vmem:[%s10 + $0x50] sm:$0xff]
  %v798 = vld [vmem:[%s10 + $0x58] sm:$0xff]
  %v799 = vld [vmem:[%s10 + $0x60] sm:$0xff]
  %v800 = vld [vmem:[%s10 + $0x68] sm:$0xff]
  %v801 = vld [vmem:[%s10 + $0x70] sm:$0xff]
  %v802 = vld [vmem:[%s10 + $0x78] sm:$0xff]
  %v803 = vld [vmem:[%s10 + $0x80] sm:$0xff]
  %v804 = vld [vmem:[%s10 + $0x88] sm:$0xff]
  %v805 = vld [vmem:[%s10 + $0x90] sm:$0xff]
  %v806 = vld [vmem:[%s10 + $0x98] sm:$0xff]
  %v807 = vld [vmem:[%s10 + $0xa0] sm:$0xff]
  %v808 = vld [vmem:[%s10 + $0xa8] sm:$0xff]
  %v809 = vld [vmem:[%s10 + $0xb0] sm:$0xff]
  %v810 = vld [vmem:[%s10 + $0xb8] sm:$0xff]
  %v811 = vld [vmem:[%s10 + $0xc0] sm:$0xff]
  %v812 = vld [vmem:[%s10 + $0xc8] sm:$0xff]
  %v813 = vld [vmem:[%s10 + $0xd0] sm:$0xff]
  %v814 = vld [vmem:[%s10 + $0xd8] sm:$0xff]
  %v815 = vld [vmem:[%s10 + $0xe0] sm:$0xff]
  %v816 = vld [vmem:[%s10 + $0xe8] sm:$0xff]
  %v817 = vld [vmem:[%s10 + $0xf0] sm:$0xff]
  %v818 = vld [vmem:[%s10 + $0xf8] sm:$0xff]
  %v819 = vld [vmem:[%s10 + $0x100] sm:$0xff]
  %v820 = vld [vmem:[%s10 + $0x108] sm:$0xff]
  %v821 = vld [vmem:[%s10 + $0x110] sm:$0xff]
  %v822 = vld [vmem:[%s10 + $0x118] sm:$0xff]
  %v823 = vld [vmem:[%s10 + $0x120] sm:$0xff]
  %v824 = vld [vmem:[%s10 + $0x128] sm:$0xff]
  %v825 = vld [vmem:[%s10 + $0x130] sm:$0xff]
  %v826 = vld [vmem:[%s10 + $0x138] sm:$0xff]
  %v827 = vld [vmem:[%s10 + $0x140] sm:$0xff]
  %v828 = vld [vmem:[%s10 + $0x148] sm:$0xff]
  %v829 = vld [vmem:[%s10 + $0x150] sm:$0xff]
  %v830 = vld [vmem:[%s10 + $0x158] sm:$0xff]
  %v831 = vld [vmem:[%s10 + $0x160] sm:$0xff]
  %v832 = vld [vmem:[%s10 + $0x168] sm:$0xff]
  %v833 = vld [vmem:[%s10 + $0x170] sm:$0xff]
  %v834 = vld [vmem:[%s10 + $0x178] sm:$0xff]
  %v835 = vld [vmem:[%s10 + $0x180] sm:$0xff]
  %v836 = vld [vmem:[%s10 + $0x188] sm:$0xff]
  %v837 = vld [vmem:[%s10 + $0x190] sm:$0xff]
  %v838 = vld [vmem:[%s10 + $0x198] sm:$0xff]
  %v839 = vld [vmem:[%s10 + $0x1a0] sm:$0xff]
  %v840 = vld [vmem:[%s10 + $0x1a8] sm:$0xff]
  %v841 = vld [vmem:[%s10 + $0x1b0] sm:$0xff]
  %v842 = vld [vmem:[%s10 + $0x1b8] sm:$0xff]
  %v843 = vld [vmem:[%s10 + $0x1c0] sm:$0xff]
  %v844 = vld [vmem:[%s10 + $0x1c8] sm:$0xff]
  %v845 = vld [vmem:[%s10 + $0x1d0] sm:$0xff]
  %v846 = vld [vmem:[%s10 + $0x1d8] sm:$0xff]
  %v847 = vld [vmem:[%s10 + $0x1e0] sm:$0xff]
  %v848 = vld [vmem:[%s10 + $0x1e8] sm:$0xff]
  %v849 = vld [vmem:[%s10 + $0x1f0] sm:$0xff]
  %v850 = vld [vmem:[%s10 + $0x1f8] sm:$0xff]
  %v851 = vld [vmem:[%s10 + $0x200] sm:$0xff]
  %v852 = vld [vmem:[%s10 + $0x208] sm:$0xff]
  %v853 = vld [vmem:[%s10 + $0x210] sm:$0xff]
  %v854 = vld [vmem:[%s10 + $0x218] sm:$0xff]
  %v855 = vld [vmem:[%s10 + $0x220] sm:$0xff]
  %v856 = vld [vmem:[%s10 + $0x228] sm:$0xff]
  %v857 = vld [vmem:[%s10 + $0x230] sm:$0xff]
  %v858 = vld [vmem:[%s10 + $0x238] sm:$0xff]
  %v859 = vld [vmem:[%s10 + $0x240] sm:$0xff]
  %v860 = vld [vmem:[%s10 + $0x248] sm:$0xff]
  %v861 = vld [vmem:[%s10 + $0x250] sm:$0xff]
  %v862 = vld [vmem:[%s10 + $0x258] sm:$0xff]
  %v863 = vld [vmem:[%s10 + $0x260] sm:$0xff]
  %v864 = vld [vmem:[%s10 + $0x268] sm:$0xff]
  %v865 = vld [vmem:[%s10 + $0x270] sm:$0xff]
  %v866 = vld [vmem:[%s10 + $0x278] sm:$0xff]
  %v867 = vld [vmem:[%s10 + $0x280] sm:$0xff]
  %v868 = vld [vmem:[%s10 + $0x288] sm:$0xff]
  %v869 = vld [vmem:[%s10 + $0x290] sm:$0xff]
  %v870 = vld [vmem:[%s10 + $0x298] sm:$0xff]
  %v871 = vld [vmem:[%s10 + $0x2a0] sm:$0xff]
  %v872 = vld [vmem:[%s10 + $0x2a8] sm:$0xff]
  %v873 = vld [vmem:[%s10 + $0x2b0] sm:$0xff]
  %v874 = vld [vmem:[%s10 + $0x2b8] sm:$0xff]
  %v875 = vld [vmem:[%s10 + $0x2c0] sm:$0xff]
  %v876 = vld [vmem:[%s10 + $0x2c8] sm:$0xff]
  %v877 = vld [vmem:[%s10 + $0x2d0] sm:$0xff]
  %v878 = vld [vmem:[%s10 + $0x2d8] sm:$0xff]
  %v879 = vld [vmem:[%s10 + $0x2e0] sm:$0xff]
  %v880 = vld [vmem:[%s10 + $0x2e8] sm:$0xff]
  %v881 = vld [vmem:[%s10 + $0x2f0] sm:$0xff]
  %v882 = vld [vmem:[%s10 + $0x2f8] sm:$0xff]
  %v883 = vld [vmem:[%s10 + $0x300] sm:$0xf]
  %v884 = vld [vmem:[%s10 + $0x308] sm:$0xf]
  %v885 = vld [vmem:[%s10 + $0x310] sm:$0xf]
  %v886 = vld [vmem:[%s10 + $0x318] sm:$0xf]
  %vm887 = vcmask 556032
  %v889 = vsel %vm887, %v785, 0
  %vm891 = vcmask 1043456
  %v893 = vsel %vm891, %v883, 0
  %v896 = vsel %vm891, %v884, 0
  %v899 = vsel %vm891, %v885, 0
  %v902 = vsel %vm891, %v886, 0
  %904 = vmatpush.msra.mxu0 %v847
  %905 = vmatpush.msra.mxu0 %v843
  %906 = vmatpush.msra.mxu0 %v839
  %907 = vmatpush.msra.mxu0 %v835
  %908 = vmatpush.msra.mxu0 %v831
  %909 = vmatpush.msra.mxu0 %v827
  %910 = vmatpush.msra.mxu0 %v823
  %911 = vmatpush.msra.mxu0 %v819
  %912 = vmatpush.msra.mxu0 %v815
  %913 = vmatpush.msra.mxu0 %v811
  %914 = vmatpush.msra.mxu0 %v807
  %915 = vmatpush.msra.mxu0 %v803
  %916 = vmatpush.msra.mxu0 %v799
  %917 = vmatpush.msra.mxu0 %v795
  %918 = vmatpush.msra.mxu0 %v791
  %919 = vmatpush.msra.mxu0 %v787
  %920 = vmatmul.f32.gmra.mxu0 %v765
  %v921 = vpop.f32.mrf.mxu0
  %v922 = vadd.f32 0.0, %v921
  %923 = vdwg.mxu0
  %924 = vmatpush.msra.mxu0 0.0
  %925 = vmatpush.msra.mxu0 0.0
  %926 = vmatpush.msra.mxu0 0.0
  %927 = vmatpush.msra.mxu0 0.0
  %928 = vmatpush.msra.mxu0 0.0
  %929 = vmatpush.msra.mxu0 0.0
  %930 = vmatpush.msra.mxu0 0.0
  %931 = vmatpush.msra.mxu0 %v893
  %932 = vmatpush.msra.mxu0 %v879
  %933 = vmatpush.msra.mxu0 %v875
  %934 = vmatpush.msra.mxu0 %v871
  %935 = vmatpush.msra.mxu0 %v867
  %936 = vmatpush.msra.mxu0 %v863
  %937 = vmatpush.msra.mxu0 %v859
  %938 = vmatpush.msra.mxu0 %v855
  %939 = vmatpush.msra.mxu0 %v851
  %940 = vmatmul.f32.gmra.mxu0 %v889
  %v941 = vpop.f32.mrf.mxu0
  %v942 = vadd.f32 %v922, %v941
  %943 = vdwg.mxu0
  %944 = vmatpush.msra.mxu0 %v848
  %945 = vmatpush.msra.mxu0 %v844
  %946 = vmatpush.msra.mxu0 %v840
  %947 = vmatpush.msra.mxu0 %v836
  %948 = vmatpush.msra.mxu0 %v832
  %949 = vmatpush.msra.mxu0 %v828
  %950 = vmatpush.msra.mxu0 %v824
  %951 = vmatpush.msra.mxu0 %v820
  %952 = vmatpush.msra.mxu0 %v816
  %953 = vmatpush.msra.mxu0 %v812
  %954 = vmatpush.msra.mxu0 %v808
  %955 = vmatpush.msra.mxu0 %v804
  %956 = vmatpush.msra.mxu0 %v800
  %957 = vmatpush.msra.mxu0 %v796
  %958 = vmatpush.msra.mxu0 %v792
  %959 = vmatpush.msra.mxu0 %v788
  %960 = vmatmul.f32.gmra.mxu0 %v765
  %v961 = vpop.f32.mrf.mxu0
  %v962 = vadd.f32 0.0, %v961
  %963 = vdwg.mxu0
  %964 = vmatpush.msra.mxu0 0.0
  %965 = vmatpush.msra.mxu0 0.0
  %966 = vmatpush.msra.mxu0 0.0
  %967 = vmatpush.msra.mxu0 0.0
  %968 = vmatpush.msra.mxu0 0.0
  %969 = vmatpush.msra.mxu0 0.0
  %970 = vmatpush.msra.mxu0 0.0
  %971 = vmatpush.msra.mxu0 %v896
  %972 = vmatpush.msra.mxu0 %v880
  %973 = vmatpush.msra.mxu0 %v876
  %974 = vmatpush.msra.mxu0 %v872
  %975 = vmatpush.msra.mxu0 %v868
  %976 = vmatpush.msra.mxu0 %v864
  %977 = vmatpush.msra.mxu0 %v860
  %978 = vmatpush.msra.mxu0 %v856
  %979 = vmatpush.msra.mxu0 %v852
  %980 = vmatmul.f32.gmra.mxu0 %v889
  %v981 = vpop.f32.mrf.mxu0
  %v982 = vadd.f32 %v962, %v981
  %983 = vdwg.mxu0
  %984 = vmatpush.msra.mxu0 %v849
  %985 = vmatpush.msra.mxu0 %v845
  %986 = vmatpush.msra.mxu0 %v841
  %987 = vmatpush.msra.mxu0 %v837
  %988 = vmatpush.msra.mxu0 %v833
  %989 = vmatpush.msra.mxu0 %v829
  %990 = vmatpush.msra.mxu0 %v825
  %991 = vmatpush.msra.mxu0 %v821
  %992 = vmatpush.msra.mxu0 %v817
  %993 = vmatpush.msra.mxu0 %v813
  %994 = vmatpush.msra.mxu0 %v809
  %995 = vmatpush.msra.mxu0 %v805
  %996 = vmatpush.msra.mxu0 %v801
  %997 = vmatpush.msra.mxu0 %v797
  %998 = vmatpush.msra.mxu0 %v793
  %999 = vmatpush.msra.mxu0 %v789
  %1000 = vmatmul.f32.gmra.mxu0 %v765
  %v1001 = vpop.f32.mrf.mxu0
  %v1002 = vadd.f32 0.0, %v1001
  %1003 = vdwg.mxu0
  %1004 = vmatpush.msra.mxu0 0.0
  %1005 = vmatpush.msra.mxu0 0.0
  %1006 = vmatpush.msra.mxu0 0.0
  %1007 = vmatpush.msra.mxu0 0.0
  %1008 = vmatpush.msra.mxu0 0.0
  %1009 = vmatpush.msra.mxu0 0.0
  %1010 = vmatpush.msra.mxu0 0.0
  %1011 = vmatpush.msra.mxu0 %v899
  %1012 = vmatpush.msra.mxu0 %v881
  %1013 = vmatpush.msra.mxu0 %v877
  %1014 = vmatpush.msra.mxu0 %v873
  %1015 = vmatpush.msra.mxu0 %v869
  %1016 = vmatpush.msra.mxu0 %v865
  %1017 = vmatpush.msra.mxu0 %v861
  %1018 = vmatpush.msra.mxu0 %v857
  %1019 = vmatpush.msra.mxu0 %v853
  %1020 = vmatmul.f32.gmra.mxu0 %v889
  %v1021 = vpop.f32.mrf.mxu0
  %v1022 = vadd.f32 %v1002, %v1021
  %1023 = vdwg.mxu0
  %1024 = vmatpush.msra.mxu0 %v850
  %1025 = vmatpush.msra.mxu0 %v846
  %1026 = vmatpush.msra.mxu0 %v842
  %1027 = vmatpush.msra.mxu0 %v838
  %1028 = vmatpush.msra.mxu0 %v834
  %1029 = vmatpush.msra.mxu0 %v830
  %1030 = vmatpush.msra.mxu0 %v826
  %1031 = vmatpush.msra.mxu0 %v822
  %1032 = vmatpush.msra.mxu0 %v818
  %1033 = vmatpush.msra.mxu0 %v814
  %1034 = vmatpush.msra.mxu0 %v810
  %1035 = vmatpush.msra.mxu0 %v806
  %1036 = vmatpush.msra.mxu0 %v802
  %1037 = vmatpush.msra.mxu0 %v798
  %1038 = vmatpush.msra.mxu0 %v794
  %1039 = vmatpush.msra.mxu0 %v790
  %1040 = vmatmul.f32.gmra.mxu0 %v765
  %v1041 = vpop.f32.mrf.mxu0
  %v1042 = vadd.f32 0.0, %v1041
  %1043 = vdwg.mxu0
  %1044 = vmatpush.msra.mxu0 0.0
  %1045 = vmatpush.msra.mxu0 0.0
  %1046 = vmatpush.msra.mxu0 0.0
  %1047 = vmatpush.msra.mxu0 0.0
  %1048 = vmatpush.msra.mxu0 0.0
  %1049 = vmatpush.msra.mxu0 0.0
  %1050 = vmatpush.msra.mxu0 0.0
  %1051 = vmatpush.msra.mxu0 %v902
  %1052 = vmatpush.msra.mxu0 %v882
  %1053 = vmatpush.msra.mxu0 %v878
  %1054 = vmatpush.msra.mxu0 %v874
  %1055 = vmatpush.msra.mxu0 %v870
  %1056 = vmatpush.msra.mxu0 %v866
  %1057 = vmatpush.msra.mxu0 %v862
  %1058 = vmatpush.msra.mxu0 %v858
  %1059 = vmatpush.msra.mxu0 %v854
  %1060 = vmatmul.f32.gmra.mxu0 %v889
  %v1061 = vpop.f32.mrf.mxu0
  %v1062 = vadd.f32 %v1042, %v1061
  %1063 = vdwg.mxu0
  %s1064 = scalar_lea.vmem %s10, 800
  %v1065 = vld [vmem:[%s1064] sm:$0xff]
  %v1066 = vld [vmem:[%s1064 + $0x8] sm:$0xff]
  %v1067 = vld [vmem:[%s1064 + $0x10] sm:$0xff]
  %v1068 = vld [vmem:[%s1064 + $0x18] sm:$0xff]
  %v1069 = vld [vmem:[%s1064 + $0x20] sm:$0xff]
  %v1070 = vld [vmem:[%s1064 + $0x28] sm:$0xff]
  %v1071 = vld [vmem:[%s1064 + $0x30] sm:$0xff]
  %v1072 = vld [vmem:[%s1064 + $0x38] sm:$0xff]
  %v1073 = vld [vmem:[%s1064 + $0x40] sm:$0xff]
  %v1074 = vld [vmem:[%s1064 + $0x48] sm:$0xff]
  %v1075 = vld [vmem:[%s1064 + $0x50] sm:$0xff]
  %v1076 = vld [vmem:[%s1064 + $0x58] sm:$0xff]
  %v1077 = vld [vmem:[%s1064 + $0x60] sm:$0xff]
  %v1078 = vld [vmem:[%s1064 + $0x68] sm:$0xff]
  %v1079 = vld [vmem:[%s1064 + $0x70] sm:$0xff]
  %v1080 = vld [vmem:[%s1064 + $0x78] sm:$0xff]
  %v1081 = vld [vmem:[%s1064 + $0x80] sm:$0xff]
  %v1082 = vld [vmem:[%s1064 + $0x88] sm:$0xff]
  %v1083 = vld [vmem:[%s1064 + $0x90] sm:$0xff]
  %v1084 = vld [vmem:[%s1064 + $0x98] sm:$0xff]
  %v1085 = vld [vmem:[%s1064 + $0xa0] sm:$0xff]
  %v1086 = vld [vmem:[%s1064 + $0xa8] sm:$0xff]
  %v1087 = vld [vmem:[%s1064 + $0xb0] sm:$0xff]
  %v1088 = vld [vmem:[%s1064 + $0xb8] sm:$0xff]
  %v1089 = vld [vmem:[%s1064 + $0xc0] sm:$0xff]
  %v1090 = vld [vmem:[%s1064 + $0xc8] sm:$0xff]
  %v1091 = vld [vmem:[%s1064 + $0xd0] sm:$0xff]
  %v1092 = vld [vmem:[%s1064 + $0xd8] sm:$0xff]
  %v1093 = vld [vmem:[%s1064 + $0xe0] sm:$0xff]
  %v1094 = vld [vmem:[%s1064 + $0xe8] sm:$0xff]
  %v1095 = vld [vmem:[%s1064 + $0xf0] sm:$0xff]
  %v1096 = vld [vmem:[%s1064 + $0xf8] sm:$0xff]
  %v1097 = vld [vmem:[%s1064 + $0x100] sm:$0xff]
  %v1098 = vld [vmem:[%s1064 + $0x108] sm:$0xff]
  %v1099 = vld [vmem:[%s1064 + $0x110] sm:$0xff]
  %v1100 = vld [vmem:[%s1064 + $0x118] sm:$0xff]
  %v1101 = vld [vmem:[%s1064 + $0x120] sm:$0xff]
  %v1102 = vld [vmem:[%s1064 + $0x128] sm:$0xff]
  %v1103 = vld [vmem:[%s1064 + $0x130] sm:$0xff]
  %v1104 = vld [vmem:[%s1064 + $0x138] sm:$0xff]
  %v1105 = vld [vmem:[%s1064 + $0x140] sm:$0xff]
  %v1106 = vld [vmem:[%s1064 + $0x148] sm:$0xff]
  %v1107 = vld [vmem:[%s1064 + $0x150] sm:$0xff]
  %v1108 = vld [vmem:[%s1064 + $0x158] sm:$0xff]
  %v1109 = vld [vmem:[%s1064 + $0x160] sm:$0xff]
  %v1110 = vld [vmem:[%s1064 + $0x168] sm:$0xff]
  %v1111 = vld [vmem:[%s1064 + $0x170] sm:$0xff]
  %v1112 = vld [vmem:[%s1064 + $0x178] sm:$0xff]
  %v1113 = vld [vmem:[%s1064 + $0x180] sm:$0xff]
  %v1114 = vld [vmem:[%s1064 + $0x188] sm:$0xff]
  %v1115 = vld [vmem:[%s1064 + $0x190] sm:$0xff]
  %v1116 = vld [vmem:[%s1064 + $0x198] sm:$0xff]
  %v1117 = vld [vmem:[%s1064 + $0x1a0] sm:$0xff]
  %v1118 = vld [vmem:[%s1064 + $0x1a8] sm:$0xff]
  %v1119 = vld [vmem:[%s1064 + $0x1b0] sm:$0xff]
  %v1120 = vld [vmem:[%s1064 + $0x1b8] sm:$0xff]
  %v1121 = vld [vmem:[%s1064 + $0x1c0] sm:$0xff]
  %v1122 = vld [vmem:[%s1064 + $0x1c8] sm:$0xff]
  %v1123 = vld [vmem:[%s1064 + $0x1d0] sm:$0xff]
  %v1124 = vld [vmem:[%s1064 + $0x1d8] sm:$0xff]
  %v1125 = vld [vmem:[%s1064 + $0x1e0] sm:$0xff]
  %v1126 = vld [vmem:[%s1064 + $0x1e8] sm:$0xff]
  %v1127 = vld [vmem:[%s1064 + $0x1f0] sm:$0xff]
  %v1128 = vld [vmem:[%s1064 + $0x1f8] sm:$0xff]
  %v1129 = vld [vmem:[%s1064 + $0x200] sm:$0xff]
  %v1130 = vld [vmem:[%s1064 + $0x208] sm:$0xff]
  %v1131 = vld [vmem:[%s1064 + $0x210] sm:$0xff]
  %v1132 = vld [vmem:[%s1064 + $0x218] sm:$0xff]
  %v1133 = vld [vmem:[%s1064 + $0x220] sm:$0xff]
  %v1134 = vld [vmem:[%s1064 + $0x228] sm:$0xff]
  %v1135 = vld [vmem:[%s1064 + $0x230] sm:$0xff]
  %v1136 = vld [vmem:[%s1064 + $0x238] sm:$0xff]
  %v1137 = vld [vmem:[%s1064 + $0x240] sm:$0xff]
  %v1138 = vld [vmem:[%s1064 + $0x248] sm:$0xff]
  %v1139 = vld [vmem:[%s1064 + $0x250] sm:$0xff]
  %v1140 = vld [vmem:[%s1064 + $0x258] sm:$0xff]
  %v1141 = vld [vmem:[%s1064 + $0x260] sm:$0xff]
  %v1142 = vld [vmem:[%s1064 + $0x268] sm:$0xff]
  %v1143 = vld [vmem:[%s1064 + $0x270] sm:$0xff]
  %v1144 = vld [vmem:[%s1064 + $0x278] sm:$0xff]
  %v1145 = vld [vmem:[%s1064 + $0x280] sm:$0xff]
  %v1146 = vld [vmem:[%s1064 + $0x288] sm:$0xff]
  %v1147 = vld [vmem:[%s1064 + $0x290] sm:$0xff]
  %v1148 = vld [vmem:[%s1064 + $0x298] sm:$0xff]
  %v1149 = vld [vmem:[%s1064 + $0x2a0] sm:$0xff]
  %v1150 = vld [vmem:[%s1064 + $0x2a8] sm:$0xff]
  %v1151 = vld [vmem:[%s1064 + $0x2b0] sm:$0xff]
  %v1152 = vld [vmem:[%s1064 + $0x2b8] sm:$0xff]
  %v1153 = vld [vmem:[%s1064 + $0x2c0] sm:$0xff]
  %v1154 = vld [vmem:[%s1064 + $0x2c8] sm:$0xff]
  %v1155 = vld [vmem:[%s1064 + $0x2d0] sm:$0xff]
  %v1156 = vld [vmem:[%s1064 + $0x2d8] sm:$0xff]
  %v1157 = vld [vmem:[%s1064 + $0x2e0] sm:$0xff]
  %v1158 = vld [vmem:[%s1064 + $0x2e8] sm:$0xff]
  %v1159 = vld [vmem:[%s1064 + $0x2f0] sm:$0xff]
  %v1160 = vld [vmem:[%s1064 + $0x2f8] sm:$0xff]
  %v1161 = vld [vmem:[%s1064 + $0x300] sm:$0xf]
  %v1162 = vld [vmem:[%s1064 + $0x308] sm:$0xf]
  %v1163 = vld [vmem:[%s1064 + $0x310] sm:$0xf]
  %v1164 = vld [vmem:[%s1064 + $0x318] sm:$0xf]
  %v1166 = vsel %vm891, %v1161, 0
  %v1169 = vsel %vm891, %v1162, 0
  %v1172 = vsel %vm891, %v1163, 0
  %v1175 = vsel %vm891, %v1164, 0
  %1177 = vmatpush.msra.mxu0 %v1125
  %1178 = vmatpush.msra.mxu0 %v1121
  %1179 = vmatpush.msra.mxu0 %v1117
  %1180 = vmatpush.msra.mxu0 %v1113
  %1181 = vmatpush.msra.mxu0 %v1109
  %1182 = vmatpush.msra.mxu0 %v1105
  %1183 = vmatpush.msra.mxu0 %v1101
  %1184 = vmatpush.msra.mxu0 %v1097
  %1185 = vmatpush.msra.mxu0 %v1093
  %1186 = vmatpush.msra.mxu0 %v1089
  %1187 = vmatpush.msra.mxu0 %v1085
  %1188 = vmatpush.msra.mxu0 %v1081
  %1189 = vmatpush.msra.mxu0 %v1077
  %1190 = vmatpush.msra.mxu0 %v1073
  %1191 = vmatpush.msra.mxu0 %v1069
  %1192 = vmatpush.msra.mxu0 %v1065
  %1193 = vmatmul.f32.gmra.mxu0 %v765
  %v1194 = vpop.f32.mrf.mxu0
  %v1195 = vadd.f32 0.0, %v1194
  %1196 = vdwg.mxu0
  %1197 = vmatpush.msra.mxu0 0.0
  %1198 = vmatpush.msra.mxu0 0.0
  %1199 = vmatpush.msra.mxu0 0.0
  %1200 = vmatpush.msra.mxu0 0.0
  %1201 = vmatpush.msra.mxu0 0.0
  %1202 = vmatpush.msra.mxu0 0.0
  %1203 = vmatpush.msra.mxu0 0.0
  %1204 = vmatpush.msra.mxu0 %v1166
  %1205 = vmatpush.msra.mxu0 %v1157
  %1206 = vmatpush.msra.mxu0 %v1153
  %1207 = vmatpush.msra.mxu0 %v1149
  %1208 = vmatpush.msra.mxu0 %v1145
  %1209 = vmatpush.msra.mxu0 %v1141
  %1210 = vmatpush.msra.mxu0 %v1137
  %1211 = vmatpush.msra.mxu0 %v1133
  %1212 = vmatpush.msra.mxu0 %v1129
  %1213 = vmatmul.f32.gmra.mxu0 %v889
  %v1214 = vpop.f32.mrf.mxu0
  %v1215 = vadd.f32 %v1195, %v1214
  %1216 = vdwg.mxu0
  %1217 = vmatpush.msra.mxu0 %v1126
  %1218 = vmatpush.msra.mxu0 %v1122
  %1219 = vmatpush.msra.mxu0 %v1118
  %1220 = vmatpush.msra.mxu0 %v1114
  %1221 = vmatpush.msra.mxu0 %v1110
  %1222 = vmatpush.msra.mxu0 %v1106
  %1223 = vmatpush.msra.mxu0 %v1102
  %1224 = vmatpush.msra.mxu0 %v1098
  %1225 = vmatpush.msra.mxu0 %v1094
  %1226 = vmatpush.msra.mxu0 %v1090
  %1227 = vmatpush.msra.mxu0 %v1086
  %1228 = vmatpush.msra.mxu0 %v1082
  %1229 = vmatpush.msra.mxu0 %v1078
  %1230 = vmatpush.msra.mxu0 %v1074
  %1231 = vmatpush.msra.mxu0 %v1070
  %1232 = vmatpush.msra.mxu0 %v1066
  %1233 = vmatmul.f32.gmra.mxu0 %v765
  %v1234 = vpop.f32.mrf.mxu0
  %v1235 = vadd.f32 0.0, %v1234
  %1236 = vdwg.mxu0
  %1237 = vmatpush.msra.mxu0 0.0
  %1238 = vmatpush.msra.mxu0 0.0
  %1239 = vmatpush.msra.mxu0 0.0
  %1240 = vmatpush.msra.mxu0 0.0
  %1241 = vmatpush.msra.mxu0 0.0
  %1242 = vmatpush.msra.mxu0 0.0
  %1243 = vmatpush.msra.mxu0 0.0
  %1244 = vmatpush.msra.mxu0 %v1169
  %1245 = vmatpush.msra.mxu0 %v1158
  %1246 = vmatpush.msra.mxu0 %v1154
  %1247 = vmatpush.msra.mxu0 %v1150
  %1248 = vmatpush.msra.mxu0 %v1146
  %1249 = vmatpush.msra.mxu0 %v1142
  %1250 = vmatpush.msra.mxu0 %v1138
  %1251 = vmatpush.msra.mxu0 %v1134
  %1252 = vmatpush.msra.mxu0 %v1130
  %1253 = vmatmul.f32.gmra.mxu0 %v889
  %v1254 = vpop.f32.mrf.mxu0
  %v1255 = vadd.f32 %v1235, %v1254
  %1256 = vdwg.mxu0
  %1257 = vmatpush.msra.mxu0 %v1127
  %1258 = vmatpush.msra.mxu0 %v1123
  %1259 = vmatpush.msra.mxu0 %v1119
  %1260 = vmatpush.msra.mxu0 %v1115
  %1261 = vmatpush.msra.mxu0 %v1111
  %1262 = vmatpush.msra.mxu0 %v1107
  %1263 = vmatpush.msra.mxu0 %v1103
  %1264 = vmatpush.msra.mxu0 %v1099
  %1265 = vmatpush.msra.mxu0 %v1095
  %1266 = vmatpush.msra.mxu0 %v1091
  %1267 = vmatpush.msra.mxu0 %v1087
  %1268 = vmatpush.msra.mxu0 %v1083
  %1269 = vmatpush.msra.mxu0 %v1079
  %1270 = vmatpush.msra.mxu0 %v1075
  %1271 = vmatpush.msra.mxu0 %v1071
  %1272 = vmatpush.msra.mxu0 %v1067
  %1273 = vmatmul.f32.gmra.mxu0 %v765
  %v1274 = vpop.f32.mrf.mxu0
  %v1275 = vadd.f32 0.0, %v1274
  %1276 = vdwg.mxu0
  %1277 = vmatpush.msra.mxu0 0.0
  %1278 = vmatpush.msra.mxu0 0.0
  %1279 = vmatpush.msra.mxu0 0.0
  %1280 = vmatpush.msra.mxu0 0.0
  %1281 = vmatpush.msra.mxu0 0.0
  %1282 = vmatpush.msra.mxu0 0.0
  %1283 = vmatpush.msra.mxu0 0.0
  %1284 = vmatpush.msra.mxu0 %v1172
  %1285 = vmatpush.msra.mxu0 %v1159
  %1286 = vmatpush.msra.mxu0 %v1155
  %1287 = vmatpush.msra.mxu0 %v1151
  %1288 = vmatpush.msra.mxu0 %v1147
  %1289 = vmatpush.msra.mxu0 %v1143
  %1290 = vmatpush.msra.mxu0 %v1139
  %1291 = vmatpush.msra.mxu0 %v1135
  %1292 = vmatpush.msra.mxu0 %v1131
  %1293 = vmatmul.f32.gmra.mxu0 %v889
  %v1294 = vpop.f32.mrf.mxu0
  %v1295 = vadd.f32 %v1275, %v1294
  %1296 = vdwg.mxu0
  %1297 = vmatpush.msra.mxu0 %v1128
  %1298 = vmatpush.msra.mxu0 %v1124
  %1299 = vmatpush.msra.mxu0 %v1120
  %1300 = vmatpush.msra.mxu0 %v1116
  %1301 = vmatpush.msra.mxu0 %v1112
  %1302 = vmatpush.msra.mxu0 %v1108
  %1303 = vmatpush.msra.mxu0 %v1104
  %1304 = vmatpush.msra.mxu0 %v1100
  %1305 = vmatpush.msra.mxu0 %v1096
  %1306 = vmatpush.msra.mxu0 %v1092
  %1307 = vmatpush.msra.mxu0 %v1088
  %1308 = vmatpush.msra.mxu0 %v1084
  %1309 = vmatpush.msra.mxu0 %v1080
  %1310 = vmatpush.msra.mxu0 %v1076
  %1311 = vmatpush.msra.mxu0 %v1072
  %1312 = vmatpush.msra.mxu0 %v1068
  %1313 = vmatmul.f32.gmra.mxu0 %v765
  %v1314 = vpop.f32.mrf.mxu0
  %v1315 = vadd.f32 0.0, %v1314
  %1316 = vdwg.mxu0
  %1317 = vmatpush.msra.mxu0 0.0
  %1318 = vmatpush.msra.mxu0 0.0
  %1319 = vmatpush.msra.mxu0 0.0
  %1320 = vmatpush.msra.mxu0 0.0
  %1321 = vmatpush.msra.mxu0 0.0
  %1322 = vmatpush.msra.mxu0 0.0
  %1323 = vmatpush.msra.mxu0 0.0
  %1324 = vmatpush.msra.mxu0 %v1175
  %1325 = vmatpush.msra.mxu0 %v1160
  %1326 = vmatpush.msra.mxu0 %v1156
  %1327 = vmatpush.msra.mxu0 %v1152
  %1328 = vmatpush.msra.mxu0 %v1148
  %1329 = vmatpush.msra.mxu0 %v1144
  %1330 = vmatpush.msra.mxu0 %v1140
  %1331 = vmatpush.msra.mxu0 %v1136
  %1332 = vmatpush.msra.mxu0 %v1132
  %1333 = vmatmul.f32.gmra.mxu0 %v889
  %v1334 = vpop.f32.mrf.mxu0
  %v1335 = vadd.f32 %v1315, %v1334
  %1336 = vdwg.mxu0
  %s1337 = scalar_lea.vmem %s10, 1600
  %v1338 = vld [vmem:[%s1337] sm:$0xff]
  %v1339 = vld [vmem:[%s1337 + $0x8] sm:$0xff]
  %v1340 = vld [vmem:[%s1337 + $0x10] sm:$0xff]
  %v1341 = vld [vmem:[%s1337 + $0x18] sm:$0xff]
  %v1342 = vld [vmem:[%s1337 + $0x20] sm:$0xff]
  %v1343 = vld [vmem:[%s1337 + $0x28] sm:$0xff]
  %v1344 = vld [vmem:[%s1337 + $0x30] sm:$0xff]
  %v1345 = vld [vmem:[%s1337 + $0x38] sm:$0xff]
  %v1346 = vld [vmem:[%s1337 + $0x40] sm:$0xff]
  %v1347 = vld [vmem:[%s1337 + $0x48] sm:$0xff]
  %v1348 = vld [vmem:[%s1337 + $0x50] sm:$0xff]
  %v1349 = vld [vmem:[%s1337 + $0x58] sm:$0xff]
  %v1350 = vld [vmem:[%s1337 + $0x60] sm:$0xff]
  %v1351 = vld [vmem:[%s1337 + $0x68] sm:$0xff]
  %v1352 = vld [vmem:[%s1337 + $0x70] sm:$0xff]
  %v1353 = vld [vmem:[%s1337 + $0x78] sm:$0xff]
  %v1354 = vld [vmem:[%s1337 + $0x80] sm:$0xff]
  %v1355 = vld [vmem:[%s1337 + $0x88] sm:$0xff]
  %v1356 = vld [vmem:[%s1337 + $0x90] sm:$0xff]
  %v1357 = vld [vmem:[%s1337 + $0x98] sm:$0xff]
  %v1358 = vld [vmem:[%s1337 + $0xa0] sm:$0xff]
  %v1359 = vld [vmem:[%s1337 + $0xa8] sm:$0xff]
  %v1360 = vld [vmem:[%s1337 + $0xb0] sm:$0xff]
  %v1361 = vld [vmem:[%s1337 + $0xb8] sm:$0xff]
  %v1362 = vld [vmem:[%s1337 + $0xc0] sm:$0xff]
  %v1363 = vld [vmem:[%s1337 + $0xc8] sm:$0xff]
  %v1364 = vld [vmem:[%s1337 + $0xd0] sm:$0xff]
  %v1365 = vld [vmem:[%s1337 + $0xd8] sm:$0xff]
  %v1366 = vld [vmem:[%s1337 + $0xe0] sm:$0xff]
  %v1367 = vld [vmem:[%s1337 + $0xe8] sm:$0xff]
  %v1368 = vld [vmem:[%s1337 + $0xf0] sm:$0xff]
  %v1369 = vld [vmem:[%s1337 + $0xf8] sm:$0xff]
  %v1370 = vld [vmem:[%s1337 + $0x100] sm:$0xff]
  %v1371 = vld [vmem:[%s1337 + $0x108] sm:$0xff]
  %v1372 = vld [vmem:[%s1337 + $0x110] sm:$0xff]
  %v1373 = vld [vmem:[%s1337 + $0x118] sm:$0xff]
  %v1374 = vld [vmem:[%s1337 + $0x120] sm:$0xff]
  %v1375 = vld [vmem:[%s1337 + $0x128] sm:$0xff]
  %v1376 = vld [vmem:[%s1337 + $0x130] sm:$0xff]
  %v1377 = vld [vmem:[%s1337 + $0x138] sm:$0xff]
  %v1378 = vld [vmem:[%s1337 + $0x140] sm:$0xff]
  %v1379 = vld [vmem:[%s1337 + $0x148] sm:$0xff]
  %v1380 = vld [vmem:[%s1337 + $0x150] sm:$0xff]
  %v1381 = vld [vmem:[%s1337 + $0x158] sm:$0xff]
  %v1382 = vld [vmem:[%s1337 + $0x160] sm:$0xff]
  %v1383 = vld [vmem:[%s1337 + $0x168] sm:$0xff]
  %v1384 = vld [vmem:[%s1337 + $0x170] sm:$0xff]
  %v1385 = vld [vmem:[%s1337 + $0x178] sm:$0xff]
  %v1386 = vld [vmem:[%s1337 + $0x180] sm:$0xff]
  %v1387 = vld [vmem:[%s1337 + $0x188] sm:$0xff]
  %v1388 = vld [vmem:[%s1337 + $0x190] sm:$0xff]
  %v1389 = vld [vmem:[%s1337 + $0x198] sm:$0xff]
  %v1390 = vld [vmem:[%s1337 + $0x1a0] sm:$0xff]
  %v1391 = vld [vmem:[%s1337 + $0x1a8] sm:$0xff]
  %v1392 = vld [vmem:[%s1337 + $0x1b0] sm:$0xff]
  %v1393 = vld [vmem:[%s1337 + $0x1b8] sm:$0xff]
  %v1394 = vld [vmem:[%s1337 + $0x1c0] sm:$0xff]
  %v1395 = vld [vmem:[%s1337 + $0x1c8] sm:$0xff]
  %v1396 = vld [vmem:[%s1337 + $0x1d0] sm:$0xff]
  %v1397 = vld [vmem:[%s1337 + $0x1d8] sm:$0xff]
  %v1398 = vld [vmem:[%s1337 + $0x1e0] sm:$0xff]
  %v1399 = vld [vmem:[%s1337 + $0x1e8] sm:$0xff]
  %v1400 = vld [vmem:[%s1337 + $0x1f0] sm:$0xff]
  %v1401 = vld [vmem:[%s1337 + $0x1f8] sm:$0xff]
  %v1402 = vld [vmem:[%s1337 + $0x200] sm:$0xff]
  %v1403 = vld [vmem:[%s1337 + $0x208] sm:$0xff]
  %v1404 = vld [vmem:[%s1337 + $0x210] sm:$0xff]
  %v1405 = vld [vmem:[%s1337 + $0x218] sm:$0xff]
  %v1406 = vld [vmem:[%s1337 + $0x220] sm:$0xff]
  %v1407 = vld [vmem:[%s1337 + $0x228] sm:$0xff]
  %v1408 = vld [vmem:[%s1337 + $0x230] sm:$0xff]
  %v1409 = vld [vmem:[%s1337 + $0x238] sm:$0xff]
  %v1410 = vld [vmem:[%s1337 + $0x240] sm:$0xff]
  %v1411 = vld [vmem:[%s1337 + $0x248] sm:$0xff]
  %v1412 = vld [vmem:[%s1337 + $0x250] sm:$0xff]
  %v1413 = vld [vmem:[%s1337 + $0x258] sm:$0xff]
  %v1414 = vld [vmem:[%s1337 + $0x260] sm:$0xff]
  %v1415 = vld [vmem:[%s1337 + $0x268] sm:$0xff]
  %v1416 = vld [vmem:[%s1337 + $0x270] sm:$0xff]
  %v1417 = vld [vmem:[%s1337 + $0x278] sm:$0xff]
  %v1418 = vld [vmem:[%s1337 + $0x280] sm:$0xff]
  %v1419 = vld [vmem:[%s1337 + $0x288] sm:$0xff]
  %v1420 = vld [vmem:[%s1337 + $0x290] sm:$0xff]
  %v1421 = vld [vmem:[%s1337 + $0x298] sm:$0xff]
  %v1422 = vld [vmem:[%s1337 + $0x2a0] sm:$0xff]
  %v1423 = vld [vmem:[%s1337 + $0x2a8] sm:$0xff]
  %v1424 = vld [vmem:[%s1337 + $0x2b0] sm:$0xff]
  %v1425 = vld [vmem:[%s1337 + $0x2b8] sm:$0xff]
  %v1426 = vld [vmem:[%s1337 + $0x2c0] sm:$0xff]
  %v1427 = vld [vmem:[%s1337 + $0x2c8] sm:$0xff]
  %v1428 = vld [vmem:[%s1337 + $0x2d0] sm:$0xff]
  %v1429 = vld [vmem:[%s1337 + $0x2d8] sm:$0xff]
  %v1430 = vld [vmem:[%s1337 + $0x2e0] sm:$0xff]
  %v1431 = vld [vmem:[%s1337 + $0x2e8] sm:$0xff]
  %v1432 = vld [vmem:[%s1337 + $0x2f0] sm:$0xff]
  %v1433 = vld [vmem:[%s1337 + $0x2f8] sm:$0xff]
  %v1434 = vld [vmem:[%s1337 + $0x300] sm:$0xf]
  %v1435 = vld [vmem:[%s1337 + $0x308] sm:$0xf]
  %v1436 = vld [vmem:[%s1337 + $0x310] sm:$0xf]
  %v1437 = vld [vmem:[%s1337 + $0x318] sm:$0xf]
  %v1439 = vsel %vm891, %v1434, 0
  %v1442 = vsel %vm891, %v1435, 0
  %v1445 = vsel %vm891, %v1436, 0
  %v1448 = vsel %vm891, %v1437, 0
  %1450 = vmatpush.msra.mxu0 %v1398
  %1451 = vmatpush.msra.mxu0 %v1394
  %1452 = vmatpush.msra.mxu0 %v1390
  %1453 = vmatpush.msra.mxu0 %v1386
  %1454 = vmatpush.msra.mxu0 %v1382
  %1455 = vmatpush.msra.mxu0 %v1378
  %1456 = vmatpush.msra.mxu0 %v1374
  %1457 = vmatpush.msra.mxu0 %v1370
  %1458 = vmatpush.msra.mxu0 %v1366
  %1459 = vmatpush.msra.mxu0 %v1362
  %1460 = vmatpush.msra.mxu0 %v1358
  %1461 = vmatpush.msra.mxu0 %v1354
  %1462 = vmatpush.msra.mxu0 %v1350
  %1463 = vmatpush.msra.mxu0 %v1346
  %1464 = vmatpush.msra.mxu0 %v1342
  %1465 = vmatpush.msra.mxu0 %v1338
  %1466 = vmatmul.f32.gmra.mxu0 %v765
  %v1467 = vpop.f32.mrf.mxu0
  %v1468 = vadd.f32 0.0, %v1467
  %1469 = vdwg.mxu0
  %1470 = vmatpush.msra.mxu0 0.0
  %1471 = vmatpush.msra.mxu0 0.0
  %1472 = vmatpush.msra.mxu0 0.0
  %1473 = vmatpush.msra.mxu0 0.0
  %1474 = vmatpush.msra.mxu0 0.0
  %1475 = vmatpush.msra.mxu0 0.0
  %1476 = vmatpush.msra.mxu0 0.0
  %1477 = vmatpush.msra.mxu0 %v1439
  %1478 = vmatpush.msra.mxu0 %v1430
  %1479 = vmatpush.msra.mxu0 %v1426
  %1480 = vmatpush.msra.mxu0 %v1422
  %1481 = vmatpush.msra.mxu0 %v1418
  %1482 = vmatpush.msra.mxu0 %v1414
  %1483 = vmatpush.msra.mxu0 %v1410
  %1484 = vmatpush.msra.mxu0 %v1406
  %1485 = vmatpush.msra.mxu0 %v1402
  %1486 = vmatmul.f32.gmra.mxu0 %v889
  %v1487 = vpop.f32.mrf.mxu0
  %v1488 = vadd.f32 %v1468, %v1487
  %1489 = vdwg.mxu0
  %1490 = vmatpush.msra.mxu0 %v1399
  %1491 = vmatpush.msra.mxu0 %v1395
  %1492 = vmatpush.msra.mxu0 %v1391
  %1493 = vmatpush.msra.mxu0 %v1387
  %1494 = vmatpush.msra.mxu0 %v1383
  %1495 = vmatpush.msra.mxu0 %v1379
  %1496 = vmatpush.msra.mxu0 %v1375
  %1497 = vmatpush.msra.mxu0 %v1371
  %1498 = vmatpush.msra.mxu0 %v1367
  %1499 = vmatpush.msra.mxu0 %v1363
  %1500 = vmatpush.msra.mxu0 %v1359
  %1501 = vmatpush.msra.mxu0 %v1355
  %1502 = vmatpush.msra.mxu0 %v1351
  %1503 = vmatpush.msra.mxu0 %v1347
  %1504 = vmatpush.msra.mxu0 %v1343
  %1505 = vmatpush.msra.mxu0 %v1339
  %1506 = vmatmul.f32.gmra.mxu0 %v765
  %v1507 = vpop.f32.mrf.mxu0
  %v1508 = vadd.f32 0.0, %v1507
  %1509 = vdwg.mxu0
  %1510 = vmatpush.msra.mxu0 0.0
  %1511 = vmatpush.msra.mxu0 0.0
  %1512 = vmatpush.msra.mxu0 0.0
  %1513 = vmatpush.msra.mxu0 0.0
  %1514 = vmatpush.msra.mxu0 0.0
  %1515 = vmatpush.msra.mxu0 0.0
  %1516 = vmatpush.msra.mxu0 0.0
  %1517 = vmatpush.msra.mxu0 %v1442
  %1518 = vmatpush.msra.mxu0 %v1431
  %1519 = vmatpush.msra.mxu0 %v1427
  %1520 = vmatpush.msra.mxu0 %v1423
  %1521 = vmatpush.msra.mxu0 %v1419
  %1522 = vmatpush.msra.mxu0 %v1415
  %1523 = vmatpush.msra.mxu0 %v1411
  %1524 = vmatpush.msra.mxu0 %v1407
  %1525 = vmatpush.msra.mxu0 %v1403
  %1526 = vmatmul.f32.gmra.mxu0 %v889
  %v1527 = vpop.f32.mrf.mxu0
  %v1528 = vadd.f32 %v1508, %v1527
  %1529 = vdwg.mxu0
  %1530 = vmatpush.msra.mxu0 %v1400
  %1531 = vmatpush.msra.mxu0 %v1396
  %1532 = vmatpush.msra.mxu0 %v1392
  %1533 = vmatpush.msra.mxu0 %v1388
  %1534 = vmatpush.msra.mxu0 %v1384
  %1535 = vmatpush.msra.mxu0 %v1380
  %1536 = vmatpush.msra.mxu0 %v1376
  %1537 = vmatpush.msra.mxu0 %v1372
  %1538 = vmatpush.msra.mxu0 %v1368
  %1539 = vmatpush.msra.mxu0 %v1364
  %1540 = vmatpush.msra.mxu0 %v1360
  %1541 = vmatpush.msra.mxu0 %v1356
  %1542 = vmatpush.msra.mxu0 %v1352
  %1543 = vmatpush.msra.mxu0 %v1348
  %1544 = vmatpush.msra.mxu0 %v1344
  %1545 = vmatpush.msra.mxu0 %v1340
  %1546 = vmatmul.f32.gmra.mxu0 %v765
  %v1547 = vpop.f32.mrf.mxu0
  %v1548 = vadd.f32 0.0, %v1547
  %1549 = vdwg.mxu0
  %1550 = vmatpush.msra.mxu0 0.0
  %1551 = vmatpush.msra.mxu0 0.0
  %1552 = vmatpush.msra.mxu0 0.0
  %1553 = vmatpush.msra.mxu0 0.0
  %1554 = vmatpush.msra.mxu0 0.0
  %1555 = vmatpush.msra.mxu0 0.0
  %1556 = vmatpush.msra.mxu0 0.0
  %1557 = vmatpush.msra.mxu0 %v1445
  %1558 = vmatpush.msra.mxu0 %v1432
  %1559 = vmatpush.msra.mxu0 %v1428
  %1560 = vmatpush.msra.mxu0 %v1424
  %1561 = vmatpush.msra.mxu0 %v1420
  %1562 = vmatpush.msra.mxu0 %v1416
  %1563 = vmatpush.msra.mxu0 %v1412
  %1564 = vmatpush.msra.mxu0 %v1408
  %1565 = vmatpush.msra.mxu0 %v1404
  %1566 = vmatmul.f32.gmra.mxu0 %v889
  %v1567 = vpop.f32.mrf.mxu0
  %v1568 = vadd.f32 %v1548, %v1567
  %1569 = vdwg.mxu0
  %1570 = vmatpush.msra.mxu0 %v1401
  %1571 = vmatpush.msra.mxu0 %v1397
  %1572 = vmatpush.msra.mxu0 %v1393
  %1573 = vmatpush.msra.mxu0 %v1389
  %1574 = vmatpush.msra.mxu0 %v1385
  %1575 = vmatpush.msra.mxu0 %v1381
  %1576 = vmatpush.msra.mxu0 %v1377
  %1577 = vmatpush.msra.mxu0 %v1373
  %1578 = vmatpush.msra.mxu0 %v1369
  %1579 = vmatpush.msra.mxu0 %v1365
  %1580 = vmatpush.msra.mxu0 %v1361
  %1581 = vmatpush.msra.mxu0 %v1357
  %1582 = vmatpush.msra.mxu0 %v1353
  %1583 = vmatpush.msra.mxu0 %v1349
  %1584 = vmatpush.msra.mxu0 %v1345
  %1585 = vmatpush.msra.mxu0 %v1341
  %1586 = vmatmul.f32.gmra.mxu0 %v765
  %v1587 = vpop.f32.mrf.mxu0
  %v1588 = vadd.f32 0.0, %v1587
  %1589 = vdwg.mxu0
  %1590 = vmatpush.msra.mxu0 0.0
  %1591 = vmatpush.msra.mxu0 0.0
  %1592 = vmatpush.msra.mxu0 0.0
  %1593 = vmatpush.msra.mxu0 0.0
  %1594 = vmatpush.msra.mxu0 0.0
  %1595 = vmatpush.msra.mxu0 0.0
  %1596 = vmatpush.msra.mxu0 0.0
  %1597 = vmatpush.msra.mxu0 %v1448
  %1598 = vmatpush.msra.mxu0 %v1433
  %1599 = vmatpush.msra.mxu0 %v1429
  %1600 = vmatpush.msra.mxu0 %v1425
  %1601 = vmatpush.msra.mxu0 %v1421
  %1602 = vmatpush.msra.mxu0 %v1417
  %1603 = vmatpush.msra.mxu0 %v1413
  %1604 = vmatpush.msra.mxu0 %v1409
  %1605 = vmatpush.msra.mxu0 %v1405
  %1606 = vmatmul.f32.gmra.mxu0 %v889
  %v1607 = vpop.f32.mrf.mxu0
  %v1608 = vadd.f32 %v1588, %v1607
  %1609 = vdwg.mxu0
  %s1610 = scalar_lea.vmem %s10, 2400
  %v1611 = vld [vmem:[%s1610] sm:$0xff]
  %v1612 = vld [vmem:[%s1610 + $0x8] sm:$0xff]
  %v1613 = vld [vmem:[%s1610 + $0x10] sm:$0xff]
  %v1614 = vld [vmem:[%s1610 + $0x18] sm:$0xff]
  %v1615 = vld [vmem:[%s1610 + $0x20] sm:$0xff]
  %v1616 = vld [vmem:[%s1610 + $0x28] sm:$0xff]
  %v1617 = vld [vmem:[%s1610 + $0x30] sm:$0xff]
  %v1618 = vld [vmem:[%s1610 + $0x38] sm:$0xff]
  %v1619 = vld [vmem:[%s1610 + $0x40] sm:$0xff]
  %v1620 = vld [vmem:[%s1610 + $0x48] sm:$0xff]
  %v1621 = vld [vmem:[%s1610 + $0x50] sm:$0xff]
  %v1622 = vld [vmem:[%s1610 + $0x58] sm:$0xff]
  %v1623 = vld [vmem:[%s1610 + $0x60] sm:$0xff]
  %v1624 = vld [vmem:[%s1610 + $0x68] sm:$0xff]
  %v1625 = vld [vmem:[%s1610 + $0x70] sm:$0xff]
  %v1626 = vld [vmem:[%s1610 + $0x78] sm:$0xff]
  %v1627 = vld [vmem:[%s1610 + $0x80] sm:$0xff]
  %v1628 = vld [vmem:[%s1610 + $0x88] sm:$0xff]
  %v1629 = vld [vmem:[%s1610 + $0x90] sm:$0xff]
  %v1630 = vld [vmem:[%s1610 + $0x98] sm:$0xff]
  %v1631 = vld [vmem:[%s1610 + $0xa0] sm:$0xff]
  %v1632 = vld [vmem:[%s1610 + $0xa8] sm:$0xff]
  %v1633 = vld [vmem:[%s1610 + $0xb0] sm:$0xff]
  %v1634 = vld [vmem:[%s1610 + $0xb8] sm:$0xff]
  %v1635 = vld [vmem:[%s1610 + $0xc0] sm:$0xff]
  %v1636 = vld [vmem:[%s1610 + $0xc8] sm:$0xff]
  %v1637 = vld [vmem:[%s1610 + $0xd0] sm:$0xff]
  %v1638 = vld [vmem:[%s1610 + $0xd8] sm:$0xff]
  %v1639 = vld [vmem:[%s1610 + $0xe0] sm:$0xff]
  %v1640 = vld [vmem:[%s1610 + $0xe8] sm:$0xff]
  %v1641 = vld [vmem:[%s1610 + $0xf0] sm:$0xff]
  %v1642 = vld [vmem:[%s1610 + $0xf8] sm:$0xff]
  %v1643 = vld [vmem:[%s1610 + $0x100] sm:$0xff]
  %v1644 = vld [vmem:[%s1610 + $0x108] sm:$0xff]
  %v1645 = vld [vmem:[%s1610 + $0x110] sm:$0xff]
  %v1646 = vld [vmem:[%s1610 + $0x118] sm:$0xff]
  %v1647 = vld [vmem:[%s1610 + $0x120] sm:$0xff]
  %v1648 = vld [vmem:[%s1610 + $0x128] sm:$0xff]
  %v1649 = vld [vmem:[%s1610 + $0x130] sm:$0xff]
  %v1650 = vld [vmem:[%s1610 + $0x138] sm:$0xff]
  %v1651 = vld [vmem:[%s1610 + $0x140] sm:$0xff]
  %v1652 = vld [vmem:[%s1610 + $0x148] sm:$0xff]
  %v1653 = vld [vmem:[%s1610 + $0x150] sm:$0xff]
  %v1654 = vld [vmem:[%s1610 + $0x158] sm:$0xff]
  %v1655 = vld [vmem:[%s1610 + $0x160] sm:$0xff]
  %v1656 = vld [vmem:[%s1610 + $0x168] sm:$0xff]
  %v1657 = vld [vmem:[%s1610 + $0x170] sm:$0xff]
  %v1658 = vld [vmem:[%s1610 + $0x178] sm:$0xff]
  %v1659 = vld [vmem:[%s1610 + $0x180] sm:$0xff]
  %v1660 = vld [vmem:[%s1610 + $0x188] sm:$0xff]
  %v1661 = vld [vmem:[%s1610 + $0x190] sm:$0xff]
  %v1662 = vld [vmem:[%s1610 + $0x198] sm:$0xff]
  %v1663 = vld [vmem:[%s1610 + $0x1a0] sm:$0xff]
  %v1664 = vld [vmem:[%s1610 + $0x1a8] sm:$0xff]
  %v1665 = vld [vmem:[%s1610 + $0x1b0] sm:$0xff]
  %v1666 = vld [vmem:[%s1610 + $0x1b8] sm:$0xff]
  %v1667 = vld [vmem:[%s1610 + $0x1c0] sm:$0xff]
  %v1668 = vld [vmem:[%s1610 + $0x1c8] sm:$0xff]
  %v1669 = vld [vmem:[%s1610 + $0x1d0] sm:$0xff]
  %v1670 = vld [vmem:[%s1610 + $0x1d8] sm:$0xff]
  %v1671 = vld [vmem:[%s1610 + $0x1e0] sm:$0xff]
  %v1672 = vld [vmem:[%s1610 + $0x1e8] sm:$0xff]
  %v1673 = vld [vmem:[%s1610 + $0x1f0] sm:$0xff]
  %v1674 = vld [vmem:[%s1610 + $0x1f8] sm:$0xff]
  %v1675 = vld [vmem:[%s1610 + $0x200] sm:$0xff]
  %v1676 = vld [vmem:[%s1610 + $0x208] sm:$0xff]
  %v1677 = vld [vmem:[%s1610 + $0x210] sm:$0xff]
  %v1678 = vld [vmem:[%s1610 + $0x218] sm:$0xff]
  %v1679 = vld [vmem:[%s1610 + $0x220] sm:$0xff]
  %v1680 = vld [vmem:[%s1610 + $0x228] sm:$0xff]
  %v1681 = vld [vmem:[%s1610 + $0x230] sm:$0xff]
  %v1682 = vld [vmem:[%s1610 + $0x238] sm:$0xff]
  %v1683 = vld [vmem:[%s1610 + $0x240] sm:$0xff]
  %v1684 = vld [vmem:[%s1610 + $0x248] sm:$0xff]
  %v1685 = vld [vmem:[%s1610 + $0x250] sm:$0xff]
  %v1686 = vld [vmem:[%s1610 + $0x258] sm:$0xff]
  %v1687 = vld [vmem:[%s1610 + $0x260] sm:$0xff]
  %v1688 = vld [vmem:[%s1610 + $0x268] sm:$0xff]
  %v1689 = vld [vmem:[%s1610 + $0x270] sm:$0xff]
  %v1690 = vld [vmem:[%s1610 + $0x278] sm:$0xff]
  %v1691 = vld [vmem:[%s1610 + $0x280] sm:$0xff]
  %v1692 = vld [vmem:[%s1610 + $0x288] sm:$0xff]
  %v1693 = vld [vmem:[%s1610 + $0x290] sm:$0xff]
  %v1694 = vld [vmem:[%s1610 + $0x298] sm:$0xff]
  %v1695 = vld [vmem:[%s1610 + $0x2a0] sm:$0xff]
  %v1696 = vld [vmem:[%s1610 + $0x2a8] sm:$0xff]
  %v1697 = vld [vmem:[%s1610 + $0x2b0] sm:$0xff]
  %v1698 = vld [vmem:[%s1610 + $0x2b8] sm:$0xff]
  %v1699 = vld [vmem:[%s1610 + $0x2c0] sm:$0xff]
  %v1700 = vld [vmem:[%s1610 + $0x2c8] sm:$0xff]
  %v1701 = vld [vmem:[%s1610 + $0x2d0] sm:$0xff]
  %v1702 = vld [vmem:[%s1610 + $0x2d8] sm:$0xff]
  %v1703 = vld [vmem:[%s1610 + $0x2e0] sm:$0xff]
  %v1704 = vld [vmem:[%s1610 + $0x2e8] sm:$0xff]
  %v1705 = vld [vmem:[%s1610 + $0x2f0] sm:$0xff]
  %v1706 = vld [vmem:[%s1610 + $0x2f8] sm:$0xff]
  %v1707 = vld [vmem:[%s1610 + $0x300] sm:$0xf]
  %v1708 = vld [vmem:[%s1610 + $0x308] sm:$0xf]
  %v1709 = vld [vmem:[%s1610 + $0x310] sm:$0xf]
  %v1710 = vld [vmem:[%s1610 + $0x318] sm:$0xf]
  %v1712 = vsel %vm891, %v1707, 0
  %v1715 = vsel %vm891, %v1708, 0
  %v1718 = vsel %vm891, %v1709, 0
  %v1721 = vsel %vm891, %v1710, 0
  %1723 = vmatpush.msra.mxu0 %v1671
  %1724 = vmatpush.msra.mxu0 %v1667
  %1725 = vmatpush.msra.mxu0 %v1663
  %1726 = vmatpush.msra.mxu0 %v1659
  %1727 = vmatpush.msra.mxu0 %v1655
  %1728 = vmatpush.msra.mxu0 %v1651
  %1729 = vmatpush.msra.mxu0 %v1647
  %1730 = vmatpush.msra.mxu0 %v1643
  %1731 = vmatpush.msra.mxu0 %v1639
  %1732 = vmatpush.msra.mxu0 %v1635
  %1733 = vmatpush.msra.mxu0 %v1631
  %1734 = vmatpush.msra.mxu0 %v1627
  %1735 = vmatpush.msra.mxu0 %v1623
  %1736 = vmatpush.msra.mxu0 %v1619
  %1737 = vmatpush.msra.mxu0 %v1615
  %1738 = vmatpush.msra.mxu0 %v1611
  %1739 = vmatmul.f32.gmra.mxu0 %v765
  %v1740 = vpop.f32.mrf.mxu0
  %v1741 = vadd.f32 0.0, %v1740
  %1742 = vdwg.mxu0
  %1743 = vmatpush.msra.mxu0 0.0
  %1744 = vmatpush.msra.mxu0 0.0
  %1745 = vmatpush.msra.mxu0 0.0
  %1746 = vmatpush.msra.mxu0 0.0
  %1747 = vmatpush.msra.mxu0 0.0
  %1748 = vmatpush.msra.mxu0 0.0
  %1749 = vmatpush.msra.mxu0 0.0
  %1750 = vmatpush.msra.mxu0 %v1712
  %1751 = vmatpush.msra.mxu0 %v1703
  %1752 = vmatpush.msra.mxu0 %v1699
  %1753 = vmatpush.msra.mxu0 %v1695
  %1754 = vmatpush.msra.mxu0 %v1691
  %1755 = vmatpush.msra.mxu0 %v1687
  %1756 = vmatpush.msra.mxu0 %v1683
  %1757 = vmatpush.msra.mxu0 %v1679
  %1758 = vmatpush.msra.mxu0 %v1675
  %1759 = vmatmul.f32.gmra.mxu0 %v889
  %v1760 = vpop.f32.mrf.mxu0
  %v1761 = vadd.f32 %v1741, %v1760
  %1762 = vdwg.mxu0
  %1763 = vmatpush.msra.mxu0 %v1672
  %1764 = vmatpush.msra.mxu0 %v1668
  %1765 = vmatpush.msra.mxu0 %v1664
  %1766 = vmatpush.msra.mxu0 %v1660
  %1767 = vmatpush.msra.mxu0 %v1656
  %1768 = vmatpush.msra.mxu0 %v1652
  %1769 = vmatpush.msra.mxu0 %v1648
  %1770 = vmatpush.msra.mxu0 %v1644
  %1771 = vmatpush.msra.mxu0 %v1640
  %1772 = vmatpush.msra.mxu0 %v1636
  %1773 = vmatpush.msra.mxu0 %v1632
  %1774 = vmatpush.msra.mxu0 %v1628
  %1775 = vmatpush.msra.mxu0 %v1624
  %1776 = vmatpush.msra.mxu0 %v1620
  %1777 = vmatpush.msra.mxu0 %v1616
  %1778 = vmatpush.msra.mxu0 %v1612
  %1779 = vmatmul.f32.gmra.mxu0 %v765
  %v1780 = vpop.f32.mrf.mxu0
  %v1781 = vadd.f32 0.0, %v1780
  %1782 = vdwg.mxu0
  %1783 = vmatpush.msra.mxu0 0.0
  %1784 = vmatpush.msra.mxu0 0.0
  %1785 = vmatpush.msra.mxu0 0.0
  %1786 = vmatpush.msra.mxu0 0.0
  %1787 = vmatpush.msra.mxu0 0.0
  %1788 = vmatpush.msra.mxu0 0.0
  %1789 = vmatpush.msra.mxu0 0.0
  %1790 = vmatpush.msra.mxu0 %v1715
  %1791 = vmatpush.msra.mxu0 %v1704
  %1792 = vmatpush.msra.mxu0 %v1700
  %1793 = vmatpush.msra.mxu0 %v1696
  %1794 = vmatpush.msra.mxu0 %v1692
  %1795 = vmatpush.msra.mxu0 %v1688
  %1796 = vmatpush.msra.mxu0 %v1684
  %1797 = vmatpush.msra.mxu0 %v1680
  %1798 = vmatpush.msra.mxu0 %v1676
  %1799 = vmatmul.f32.gmra.mxu0 %v889
  %v1800 = vpop.f32.mrf.mxu0
  %v1801 = vadd.f32 %v1781, %v1800
  %1802 = vdwg.mxu0
  %1803 = vmatpush.msra.mxu0 %v1673
  %1804 = vmatpush.msra.mxu0 %v1669
  %1805 = vmatpush.msra.mxu0 %v1665
  %1806 = vmatpush.msra.mxu0 %v1661
  %1807 = vmatpush.msra.mxu0 %v1657
  %1808 = vmatpush.msra.mxu0 %v1653
  %1809 = vmatpush.msra.mxu0 %v1649
  %1810 = vmatpush.msra.mxu0 %v1645
  %1811 = vmatpush.msra.mxu0 %v1641
  %1812 = vmatpush.msra.mxu0 %v1637
  %1813 = vmatpush.msra.mxu0 %v1633
  %1814 = vmatpush.msra.mxu0 %v1629
  %1815 = vmatpush.msra.mxu0 %v1625
  %1816 = vmatpush.msra.mxu0 %v1621
  %1817 = vmatpush.msra.mxu0 %v1617
  %1818 = vmatpush.msra.mxu0 %v1613
  %1819 = vmatmul.f32.gmra.mxu0 %v765
  %v1820 = vpop.f32.mrf.mxu0
  %v1821 = vadd.f32 0.0, %v1820
  %1822 = vdwg.mxu0
  %1823 = vmatpush.msra.mxu0 0.0
  %1824 = vmatpush.msra.mxu0 0.0
  %1825 = vmatpush.msra.mxu0 0.0
  %1826 = vmatpush.msra.mxu0 0.0
  %1827 = vmatpush.msra.mxu0 0.0
  %1828 = vmatpush.msra.mxu0 0.0
  %1829 = vmatpush.msra.mxu0 0.0
  %1830 = vmatpush.msra.mxu0 %v1718
  %1831 = vmatpush.msra.mxu0 %v1705
  %1832 = vmatpush.msra.mxu0 %v1701
  %1833 = vmatpush.msra.mxu0 %v1697
  %1834 = vmatpush.msra.mxu0 %v1693
  %1835 = vmatpush.msra.mxu0 %v1689
  %1836 = vmatpush.msra.mxu0 %v1685
  %1837 = vmatpush.msra.mxu0 %v1681
  %1838 = vmatpush.msra.mxu0 %v1677
  %1839 = vmatmul.f32.gmra.mxu0 %v889
  %v1840 = vpop.f32.mrf.mxu0
  %v1841 = vadd.f32 %v1821, %v1840
  %1842 = vdwg.mxu0
  %1843 = vmatpush.msra.mxu0 %v1674
  %1844 = vmatpush.msra.mxu0 %v1670
  %1845 = vmatpush.msra.mxu0 %v1666
  %1846 = vmatpush.msra.mxu0 %v1662
  %1847 = vmatpush.msra.mxu0 %v1658
  %1848 = vmatpush.msra.mxu0 %v1654
  %1849 = vmatpush.msra.mxu0 %v1650
  %1850 = vmatpush.msra.mxu0 %v1646
  %1851 = vmatpush.msra.mxu0 %v1642
  %1852 = vmatpush.msra.mxu0 %v1638
  %1853 = vmatpush.msra.mxu0 %v1634
  %1854 = vmatpush.msra.mxu0 %v1630
  %1855 = vmatpush.msra.mxu0 %v1626
  %1856 = vmatpush.msra.mxu0 %v1622
  %1857 = vmatpush.msra.mxu0 %v1618
  %1858 = vmatpush.msra.mxu0 %v1614
  %1859 = vmatmul.f32.gmra.mxu0 %v765
  %v1860 = vpop.f32.mrf.mxu0
  %v1861 = vadd.f32 0.0, %v1860
  %1862 = vdwg.mxu0
  %1863 = vmatpush.msra.mxu0 0.0
  %1864 = vmatpush.msra.mxu0 0.0
  %1865 = vmatpush.msra.mxu0 0.0
  %1866 = vmatpush.msra.mxu0 0.0
  %1867 = vmatpush.msra.mxu0 0.0
  %1868 = vmatpush.msra.mxu0 0.0
  %1869 = vmatpush.msra.mxu0 0.0
  %1870 = vmatpush.msra.mxu0 %v1721
  %1871 = vmatpush.msra.mxu0 %v1706
  %1872 = vmatpush.msra.mxu0 %v1702
  %1873 = vmatpush.msra.mxu0 %v1698
  %1874 = vmatpush.msra.mxu0 %v1694
  %1875 = vmatpush.msra.mxu0 %v1690
  %1876 = vmatpush.msra.mxu0 %v1686
  %1877 = vmatpush.msra.mxu0 %v1682
  %1878 = vmatpush.msra.mxu0 %v1678
  %1879 = vmatmul.f32.gmra.mxu0 %v889
  %v1880 = vpop.f32.mrf.mxu0
  %v1881 = vadd.f32 %v1861, %v1880
  %1882 = vdwg.mxu0
  %v1887 = vrot.slane %v1215, 6
  %v1888 = vrot.slane %v1255, 6
  %v1889 = vrot.slane %v1295, 6
  %v1890 = vrot.slane %v1335, 6
  %v1899 = vrot.slane %v1488, 4
  %v1900 = vrot.slane %v1528, 4
  %v1901 = vrot.slane %v1568, 4
  %v1902 = vrot.slane %v1608, 4
  %v1911 = vrot.slane %v1761, 2
  %v1912 = vrot.slane %v1801, 2
  %v1913 = vrot.slane %v1841, 2
  %v1914 = vrot.slane %v1881, 2
  %vm1919 = vcmask 1041408
  %v1920 = vsel %vm1919, %v942, %v1887
  %v1921 = vsel %vm1919, %v982, %v1888
  %v1922 = vsel %vm1919, %v1022, %v1889
  %v1923 = vsel %vm1919, %v1062, %v1890
  %v1924 = vsel %vm891, %v1920, %v1899
  %v1925 = vsel %vm891, %v1921, %v1900
  %v1926 = vsel %vm891, %v1922, %v1901
  %v1927 = vsel %vm891, %v1923, %v1902
  %vm1928 = vcmask 1045504
  %v1929 = vsel %vm1928, %v1924, %v1911
  %v1930 = vsel %vm1928, %v1925, %v1912
  %v1931 = vsel %vm1928, %v1926, %v1913
  %v1932 = vsel %vm1928, %v1927, %v1914
  %v1933 = vld [vmem:[%s11] sm:$0xf]
  %v1935 = vperm.slane %v1933, 0
  %v1936 = vperm.slane %v1933, 1
  %v1937 = vperm.slane %v1933, 2
  %v1938 = vperm.slane %v1933, 3
  %v1943 = vadd.f32 %v1929, %v1935
  %v1944 = vadd.f32 %v1930, %v1936
  %v1945 = vadd.f32 %v1931, %v1937
  %v1946 = vadd.f32 %v1932, %v1938
  %v1947 = vrot.slane %v1943, 4
  %v1948 = vadd.f32 %v1943, %v1947
  %v1949 = vrot.slane %v1948, 2
  %v1950 = vadd.f32 %v1948, %v1949
  %v1951 = vrot.slane %v1950, 1
  %v1952 = vadd.f32 %v1950, %v1951
  %v1953 = vrot.slane %v1944, 4
  %v1954 = vadd.f32 %v1944, %v1953
  %v1955 = vrot.slane %v1954, 2
  %v1956 = vadd.f32 %v1954, %v1955
  %v1957 = vrot.slane %v1956, 1
  %v1958 = vadd.f32 %v1956, %v1957
  %v1959 = vrot.slane %v1945, 4
  %v1960 = vadd.f32 %v1945, %v1959
  %v1961 = vrot.slane %v1960, 2
  %v1962 = vadd.f32 %v1960, %v1961
  %v1963 = vrot.slane %v1962, 1
  %v1964 = vadd.f32 %v1962, %v1963
  %v1965 = vrot.slane %v1946, 4
  %v1966 = vadd.f32 %v1946, %v1965
  %v1967 = vrot.slane %v1966, 2
  %v1968 = vadd.f32 %v1966, %v1967
  %v1969 = vrot.slane %v1968, 1
  %v1970 = vadd.f32 %v1968, %v1969
  %v1971 = vmul.f32 %v1943, %v1943
  %v1972 = vmul.f32 %v1944, %v1944
  %v1973 = vmul.f32 %v1945, %v1945
  %v1974 = vmul.f32 %v1946, %v1946
  %v1975 = vrot.slane %v1971, 4
  %v1976 = vadd.f32 %v1971, %v1975
  %v1977 = vrot.slane %v1976, 2
  %v1978 = vadd.f32 %v1976, %v1977
  %v1979 = vrot.slane %v1978, 1
  %v1980 = vadd.f32 %v1978, %v1979
  %v1981 = vrot.slane %v1972, 4
  %v1982 = vadd.f32 %v1972, %v1981
  %v1983 = vrot.slane %v1982, 2
  %v1984 = vadd.f32 %v1982, %v1983
  %v1985 = vrot.slane %v1984, 1
  %v1986 = vadd.f32 %v1984, %v1985
  %v1987 = vrot.slane %v1973, 4
  %v1988 = vadd.f32 %v1973, %v1987
  %v1989 = vrot.slane %v1988, 2
  %v1990 = vadd.f32 %v1988, %v1989
  %v1991 = vrot.slane %v1990, 1
  %v1992 = vadd.f32 %v1990, %v1991
  %v1993 = vrot.slane %v1974, 4
  %v1994 = vadd.f32 %v1974, %v1993
  %v1995 = vrot.slane %v1994, 2
  %v1996 = vadd.f32 %v1994, %v1995
  %v1997 = vrot.slane %v1996, 1
  %v1998 = vadd.f32 %v1996, %v1997
  %v1999 = vadd.f32 %v1952, %v1958
  %v2000 = vadd.f32 %v1999, %v1964
  %v2001 = vadd.f32 %v2000, %v1970
  %v2002 = vadd.f32 %v1980, %v1986
  %v2003 = vadd.f32 %v2002, %v1992
  %v2004 = vadd.f32 %v2003, %v1998
  %v2005 = vmul.f32 %v2001, 0.03125
  %v2006 = vmul.f32 %v2004, 0.03125
  %v2007 = vmul.f32 %v2005, %v2005
  %v2008 = vsub.f32 %v2006, %v2007
  %v2009 = vld [vmem:[%s12] sm:$0x1]
  %v2010 = vadd.f32 %v2008, 1e-05
  %v2011 = vrsqrt.pop %v2010
  %v2012 = vmul.f32 %v2011, %v2010
  %v2013 = vmul.f32 %v2012, %v2011
  %v2014 = vmul.f32 0.5, %v2013
  %v2015 = vsub.f32 1.5, %v2014
  %v2016 = vmul.f32 %v2011, %v2015
  %vm2017 = vweird.f32 %v2010
  %vm2018 = vweird.f32 %v2011
  %vm2019 = vmor %vm2017, %vm2018
  %v2020 = vsel %vm2019, %v2011, %v2016
  %v2021 = vmul.f32 %v2009, %v2020
  %v2022 = vld [vmem:[%s13] sm:$0x1]
  %v2023 = vmul.f32 %v2005, %v2021
  %v2024 = vsub.f32 %v2022, %v2023
  %v2025 = vperm.slane %v2021, 0
  %v2026 = vmul.f32 %v1943, %v2025
  %v2027 = vmul.f32 %v1944, %v2025
  %v2028 = vmul.f32 %v1945, %v2025
  %v2029 = vmul.f32 %v1946, %v2025
  %v2030 = vperm.slane %v2024, 0
  %v2031 = vadd.f32 %v2026, %v2030
  %v2032 = vadd.f32 %v2027, %v2030
  %v2033 = vadd.f32 %v2028, %v2030
  %v2034 = vadd.f32 %v2029, %v2030
  %v2035 = vmax.f32 %v2031, 0.0
  %v2036 = vmax.f32 %v2032, 0.0
  %v2037 = vmax.f32 %v2033, 0.0
  %v2038 = vmax.f32 %v2034, 0.0
  %2039 = vst [vmem:[#allocation2] sm:$0xff] 0.0
  %vm2040 = vcmask 785408
  %2041 = vst.msk [vmem:[#allocation2 + $0x8] sm:$0xff] %vm2040, 0.0
  %2042 = vst [vmem:[#allocation2 + $0x10] sm:$0x3f] 0.0
  %vm2043 = vcmask 783360
  %2044 = vst.msk [vmem:[#allocation2 + $0x18] sm:$0x3f] %vm2043, 0.0
  %v2045 = vld [vmem:[%s14] sm:$0xff]
  %v2046 = vld [vmem:[%s14 + $0x8] sm:$0xff]
  %v2047 = vld [vmem:[%s14 + $0x10] sm:$0xff]
  %v2048 = vld [vmem:[%s14 + $0x18] sm:$0xff]
  %v2049 = vld [vmem:[%s14 + $0x20] sm:$0xff]
  %v2050 = vld [vmem:[%s14 + $0x28] sm:$0xff]
  %v2051 = vld [vmem:[%s14 + $0x30] sm:$0xff]
  %v2052 = vld [vmem:[%s14 + $0x38] sm:$0xff]
  %v2053 = vld [vmem:[%s14 + $0x40] sm:$0xff]
  %v2054 = vld [vmem:[%s14 + $0x48] sm:$0xff]
  %v2055 = vld [vmem:[%s14 + $0x50] sm:$0xff]
  %v2056 = vld [vmem:[%s14 + $0x58] sm:$0xff]
  %v2057 = vld [vmem:[%s14 + $0x60] sm:$0xff]
  %v2058 = vld [vmem:[%s14 + $0x68] sm:$0xff]
  %v2059 = vld [vmem:[%s14 + $0x70] sm:$0xff]
  %v2060 = vld [vmem:[%s14 + $0x78] sm:$0xff]
  %v2061 = vld [vmem:[%s14 + $0x80] sm:$0xff]
  %v2062 = vld [vmem:[%s14 + $0x88] sm:$0xff]
  %v2063 = vld [vmem:[%s14 + $0x90] sm:$0xff]
  %v2064 = vld [vmem:[%s14 + $0x98] sm:$0xff]
  %v2065 = vld [vmem:[%s14 + $0xa0] sm:$0xff]
  %v2066 = vld [vmem:[%s14 + $0xa8] sm:$0xff]
  %v2067 = vld [vmem:[%s14 + $0xb0] sm:$0xff]
  %v2068 = vld [vmem:[%s14 + $0xb8] sm:$0xff]
  %v2069 = vld [vmem:[%s14 + $0xc0] sm:$0xff]
  %v2070 = vld [vmem:[%s14 + $0xc8] sm:$0xff]
  %v2071 = vld [vmem:[%s14 + $0xd0] sm:$0xff]
  %v2072 = vld [vmem:[%s14 + $0xd8] sm:$0xff]
  %v2073 = vld [vmem:[%s14 + $0xe0] sm:$0xff]
  %v2074 = vld [vmem:[%s14 + $0xe8] sm:$0xff]
  %v2075 = vld [vmem:[%s14 + $0xf0] sm:$0xff]
  %v2076 = vld [vmem:[%s14 + $0xf8] sm:$0xff]
  %v2077 = vld [vmem:[%s14 + $0x100] sm:$0xff]
  %v2078 = vld [vmem:[%s14 + $0x108] sm:$0xff]
  %v2079 = vld [vmem:[%s14 + $0x110] sm:$0xff]
  %v2080 = vld [vmem:[%s14 + $0x118] sm:$0xff]
  %v2081 = vld [vmem:[%s14 + $0x120] sm:$0xff]
  %v2082 = vld [vmem:[%s14 + $0x128] sm:$0xff]
  %v2083 = vld [vmem:[%s14 + $0x130] sm:$0xff]
  %v2084 = vld [vmem:[%s14 + $0x138] sm:$0xff]
  %v2085 = vld [vmem:[%s14 + $0x140] sm:$0xff]
  %v2086 = vld [vmem:[%s14 + $0x148] sm:$0xff]
  %v2087 = vld [vmem:[%s14 + $0x150] sm:$0xff]
  %v2088 = vld [vmem:[%s14 + $0x158] sm:$0xff]
  %v2089 = vld [vmem:[%s14 + $0x160] sm:$0xff]
  %v2090 = vld [vmem:[%s14 + $0x168] sm:$0xff]
  %v2091 = vld [vmem:[%s14 + $0x170] sm:$0xff]
  %v2092 = vld [vmem:[%s14 + $0x178] sm:$0xff]
  %v2093 = vld [vmem:[%s14 + $0x180] sm:$0xff]
  %v2094 = vld [vmem:[%s14 + $0x188] sm:$0xff]
  %v2095 = vld [vmem:[%s14 + $0x190] sm:$0xff]
  %v2096 = vld [vmem:[%s14 + $0x198] sm:$0xff]
  %v2097 = vld [vmem:[%s14 + $0x1a0] sm:$0xff]
  %v2098 = vld [vmem:[%s14 + $0x1a8] sm:$0xff]
  %v2099 = vld [vmem:[%s14 + $0x1b0] sm:$0xff]
  %v2100 = vld [vmem:[%s14 + $0x1b8] sm:$0xff]
  %v2101 = vld [vmem:[%s14 + $0x1c0] sm:$0xff]
  %v2102 = vld [vmem:[%s14 + $0x1c8] sm:$0xff]
  %v2103 = vld [vmem:[%s14 + $0x1d0] sm:$0xff]
  %v2104 = vld [vmem:[%s14 + $0x1d8] sm:$0xff]
  %v2105 = vld [vmem:[%s14 + $0x1e0] sm:$0xff]
  %v2106 = vld [vmem:[%s14 + $0x1e8] sm:$0xff]
  %v2107 = vld [vmem:[%s14 + $0x1f0] sm:$0xff]
  %v2108 = vld [vmem:[%s14 + $0x1f8] sm:$0xff]
  %v2109 = vld [vmem:[%s14 + $0x200] sm:$0xff]
  %v2110 = vld [vmem:[%s14 + $0x208] sm:$0xff]
  %v2111 = vld [vmem:[%s14 + $0x210] sm:$0xff]
  %v2112 = vld [vmem:[%s14 + $0x218] sm:$0xff]
  %v2113 = vld [vmem:[%s14 + $0x220] sm:$0xff]
  %v2114 = vld [vmem:[%s14 + $0x228] sm:$0xff]
  %v2115 = vld [vmem:[%s14 + $0x230] sm:$0xff]
  %v2116 = vld [vmem:[%s14 + $0x238] sm:$0xff]
  %v2117 = vld [vmem:[%s14 + $0x240] sm:$0xff]
  %v2118 = vld [vmem:[%s14 + $0x248] sm:$0xff]
  %v2119 = vld [vmem:[%s14 + $0x250] sm:$0xff]
  %v2120 = vld [vmem:[%s14 + $0x258] sm:$0xff]
  %v2121 = vld [vmem:[%s14 + $0x260] sm:$0xff]
  %v2122 = vld [vmem:[%s14 + $0x268] sm:$0xff]
  %v2123 = vld [vmem:[%s14 + $0x270] sm:$0xff]
  %v2124 = vld [vmem:[%s14 + $0x278] sm:$0xff]
  %v2125 = vld [vmem:[%s14 + $0x280] sm:$0xff]
  %v2126 = vld [vmem:[%s14 + $0x288] sm:$0xff]
  %v2127 = vld [vmem:[%s14 + $0x290] sm:$0xff]
  %v2128 = vld [vmem:[%s14 + $0x298] sm:$0xff]
  %v2129 = vld [vmem:[%s14 + $0x2a0] sm:$0xff]
  %v2130 = vld [vmem:[%s14 + $0x2a8] sm:$0xff]
  %v2131 = vld [vmem:[%s14 + $0x2b0] sm:$0xff]
  %v2132 = vld [vmem:[%s14 + $0x2b8] sm:$0xff]
  %v2133 = vld [vmem:[%s14 + $0x2c0] sm:$0xff]
  %v2134 = vld [vmem:[%s14 + $0x2c8] sm:$0xff]
  %v2135 = vld [vmem:[%s14 + $0x2d0] sm:$0xff]
  %v2136 = vld [vmem:[%s14 + $0x2d8] sm:$0xff]
  %v2137 = vld [vmem:[%s14 + $0x2e0] sm:$0xff]
  %v2138 = vld [vmem:[%s14 + $0x2e8] sm:$0xff]
  %v2139 = vld [vmem:[%s14 + $0x2f0] sm:$0xff]
  %v2140 = vld [vmem:[%s14 + $0x2f8] sm:$0xff]
  %v2141 = vld [vmem:[%s14 + $0x300] sm:$0xff]
  %v2142 = vld [vmem:[%s14 + $0x308] sm:$0xff]
  %v2143 = vld [vmem:[%s14 + $0x310] sm:$0xff]
  %v2144 = vld [vmem:[%s14 + $0x318] sm:$0xff]
  %v2145 = vld [vmem:[%s14 + $0x320] sm:$0xff]
  %v2146 = vld [vmem:[%s14 + $0x328] sm:$0xff]
  %v2147 = vld [vmem:[%s14 + $0x330] sm:$0xff]
  %v2148 = vld [vmem:[%s14 + $0x338] sm:$0xff]
  %v2149 = vld [vmem:[%s14 + $0x340] sm:$0xff]
  %v2150 = vld [vmem:[%s14 + $0x348] sm:$0xff]
  %v2151 = vld [vmem:[%s14 + $0x350] sm:$0xff]
  %v2152 = vld [vmem:[%s14 + $0x358] sm:$0xff]
  %v2153 = vld [vmem:[%s14 + $0x360] sm:$0xff]
  %v2154 = vld [vmem:[%s14 + $0x368] sm:$0xff]
  %v2155 = vld [vmem:[%s14 + $0x370] sm:$0xff]
  %v2156 = vld [vmem:[%s14 + $0x378] sm:$0xff]
  %v2157 = vld [vmem:[%s14 + $0x380] sm:$0xff]
  %v2158 = vld [vmem:[%s14 + $0x388] sm:$0xff]
  %v2159 = vld [vmem:[%s14 + $0x390] sm:$0xff]
  %v2160 = vld [vmem:[%s14 + $0x398] sm:$0xff]
  %v2161 = vld [vmem:[%s14 + $0x3a0] sm:$0xff]
  %v2162 = vld [vmem:[%s14 + $0x3a8] sm:$0xff]
  %v2163 = vld [vmem:[%s14 + $0x3b0] sm:$0xff]
  %v2164 = vld [vmem:[%s14 + $0x3b8] sm:$0xff]
  %v2165 = vld [vmem:[%s14 + $0x3c0] sm:$0xff]
  %v2166 = vld [vmem:[%s14 + $0x3c8] sm:$0xff]
  %v2167 = vld [vmem:[%s14 + $0x3d0] sm:$0xff]
  %v2168 = vld [vmem:[%s14 + $0x3d8] sm:$0xff]
  %v2169 = vld [vmem:[%s14 + $0x3e0] sm:$0xff]
  %v2170 = vld [vmem:[%s14 + $0x3e8] sm:$0xff]
  %v2171 = vld [vmem:[%s14 + $0x3f0] sm:$0xff]
  %v2172 = vld [vmem:[%s14 + $0x3f8] sm:$0xff]
  %2173 = vmatpush.msra.mxu0 %v2075
  %2174 = vmatpush.msra.mxu0 %v2073
  %2175 = vmatpush.msra.mxu0 %v2071
  %2176 = vmatpush.msra.mxu0 %v2069
  %2177 = vmatpush.msra.mxu0 %v2067
  %2178 = vmatpush.msra.mxu0 %v2065
  %2179 = vmatpush.msra.mxu0 %v2063
  %2180 = vmatpush.msra.mxu0 %v2061
  %2181 = vmatpush.msra.mxu0 %v2059
  %2182 = vmatpush.msra.mxu0 %v2057
  %2183 = vmatpush.msra.mxu0 %v2055
  %2184 = vmatpush.msra.mxu0 %v2053
  %2185 = vmatpush.msra.mxu0 %v2051
  %2186 = vmatpush.msra.mxu0 %v2049
  %2187 = vmatpush.msra.mxu0 %v2047
  %2188 = vmatpush.msra.mxu0 %v2045
  %2189 = vmatmul.f32.gmra.mxu0 %v2035
  %v2190 = vpop.f32.mrf.mxu0
  %v2191 = vadd.f32 0.0, %v2190
  %2192 = vdwg.mxu0
  %2193 = vmatpush.msra.mxu0 %v2107
  %2194 = vmatpush.msra.mxu0 %v2105
  %2195 = vmatpush.msra.mxu0 %v2103
  %2196 = vmatpush.msra.mxu0 %v2101
  %2197 = vmatpush.msra.mxu0 %v2099
  %2198 = vmatpush.msra.mxu0 %v2097
  %2199 = vmatpush.msra.mxu0 %v2095
  %2200 = vmatpush.msra.mxu0 %v2093
  %2201 = vmatpush.msra.mxu0 %v2091
  %2202 = vmatpush.msra.mxu0 %v2089
  %2203 = vmatpush.msra.mxu0 %v2087
  %2204 = vmatpush.msra.mxu0 %v2085
  %2205 = vmatpush.msra.mxu0 %v2083
  %2206 = vmatpush.msra.mxu0 %v2081
  %2207 = vmatpush.msra.mxu0 %v2079
  %2208 = vmatpush.msra.mxu0 %v2077
  %2209 = vmatmul.f32.gmra.mxu0 %v2036
  %v2210 = vpop.f32.mrf.mxu0
  %v2211 = vadd.f32 %v2191, %v2210
  %2212 = vdwg.mxu0
  %2213 = vmatpush.msra.mxu0 %v2139
  %2214 = vmatpush.msra.mxu0 %v2137
  %2215 = vmatpush.msra.mxu0 %v2135
  %2216 = vmatpush.msra.mxu0 %v2133
  %2217 = vmatpush.msra.mxu0 %v2131
  %2218 = vmatpush.msra.mxu0 %v2129
  %2219 = vmatpush.msra.mxu0 %v2127
  %2220 = vmatpush.msra.mxu0 %v2125
  %2221 = vmatpush.msra.mxu0 %v2123
  %2222 = vmatpush.msra.mxu0 %v2121
  %2223 = vmatpush.msra.mxu0 %v2119
  %2224 = vmatpush.msra.mxu0 %v2117
  %2225 = vmatpush.msra.mxu0 %v2115
  %2226 = vmatpush.msra.mxu0 %v2113
  %2227 = vmatpush.msra.mxu0 %v2111
  %2228 = vmatpush.msra.mxu0 %v2109
  %2229 = vmatmul.f32.gmra.mxu0 %v2037
  %v2230 = vpop.f32.mrf.mxu0
  %v2231 = vadd.f32 %v2211, %v2230
  %2232 = vdwg.mxu0
  %2233 = vmatpush.msra.mxu0 %v2171
  %2234 = vmatpush.msra.mxu0 %v2169
  %2235 = vmatpush.msra.mxu0 %v2167
  %2236 = vmatpush.msra.mxu0 %v2165
  %2237 = vmatpush.msra.mxu0 %v2163
  %2238 = vmatpush.msra.mxu0 %v2161
  %2239 = vmatpush.msra.mxu0 %v2159
  %2240 = vmatpush.msra.mxu0 %v2157
  %2241 = vmatpush.msra.mxu0 %v2155
  %2242 = vmatpush.msra.mxu0 %v2153
  %2243 = vmatpush.msra.mxu0 %v2151
  %2244 = vmatpush.msra.mxu0 %v2149
  %2245 = vmatpush.msra.mxu0 %v2147
  %2246 = vmatpush.msra.mxu0 %v2145
  %2247 = vmatpush.msra.mxu0 %v2143
  %2248 = vmatpush.msra.mxu0 %v2141
  %2249 = vmatmul.f32.gmra.mxu0 %v2038
  %v2250 = vpop.f32.mrf.mxu0
  %v2251 = vadd.f32 %v2231, %v2250
  %2252 = vdwg.mxu0
  %2253 = vmatpush.msra.mxu0 %v2076
  %2254 = vmatpush.msra.mxu0 %v2074
  %2255 = vmatpush.msra.mxu0 %v2072
  %2256 = vmatpush.msra.mxu0 %v2070
  %2257 = vmatpush.msra.mxu0 %v2068
  %2258 = vmatpush.msra.mxu0 %v2066
  %2259 = vmatpush.msra.mxu0 %v2064
  %2260 = vmatpush.msra.mxu0 %v2062
  %2261 = vmatpush.msra.mxu0 %v2060
  %2262 = vmatpush.msra.mxu0 %v2058
  %2263 = vmatpush.msra.mxu0 %v2056
  %2264 = vmatpush.msra.mxu0 %v2054
  %2265 = vmatpush.msra.mxu0 %v2052
  %2266 = vmatpush.msra.mxu0 %v2050
  %2267 = vmatpush.msra.mxu0 %v2048
  %2268 = vmatpush.msra.mxu0 %v2046
  %2269 = vmatmul.f32.gmra.mxu0 %v2035
  %v2270 = vpop.f32.mrf.mxu0
  %v2271 = vadd.f32 0.0, %v2270
  %2272 = vdwg.mxu0
  %2273 = vmatpush.msra.mxu0 %v2108
  %2274 = vmatpush.msra.mxu0 %v2106
  %2275 = vmatpush.msra.mxu0 %v2104
  %2276 = vmatpush.msra.mxu0 %v2102
  %2277 = vmatpush.msra.mxu0 %v2100
  %2278 = vmatpush.msra.mxu0 %v2098
  %2279 = vmatpush.msra.mxu0 %v2096
  %2280 = vmatpush.msra.mxu0 %v2094
  %2281 = vmatpush.msra.mxu0 %v2092
  %2282 = vmatpush.msra.mxu0 %v2090
  %2283 = vmatpush.msra.mxu0 %v2088
  %2284 = vmatpush.msra.mxu0 %v2086
  %2285 = vmatpush.msra.mxu0 %v2084
  %2286 = vmatpush.msra.mxu0 %v2082
  %2287 = vmatpush.msra.mxu0 %v2080
  %2288 = vmatpush.msra.mxu0 %v2078
  %2289 = vmatmul.f32.gmra.mxu0 %v2036
  %v2290 = vpop.f32.mrf.mxu0
  %v2291 = vadd.f32 %v2271, %v2290
  %2292 = vdwg.mxu0
  %2293 = vmatpush.msra.mxu0 %v2140
  %2294 = vmatpush.msra.mxu0 %v2138
  %2295 = vmatpush.msra.mxu0 %v2136
  %2296 = vmatpush.msra.mxu0 %v2134
  %2297 = vmatpush.msra.mxu0 %v2132
  %2298 = vmatpush.msra.mxu0 %v2130
  %2299 = vmatpush.msra.mxu0 %v2128
  %2300 = vmatpush.msra.mxu0 %v2126
  %2301 = vmatpush.msra.mxu0 %v2124
  %2302 = vmatpush.msra.mxu0 %v2122
  %2303 = vmatpush.msra.mxu0 %v2120
  %2304 = vmatpush.msra.mxu0 %v2118
  %2305 = vmatpush.msra.mxu0 %v2116
  %2306 = vmatpush.msra.mxu0 %v2114
  %2307 = vmatpush.msra.mxu0 %v2112
  %2308 = vmatpush.msra.mxu0 %v2110
  %2309 = vmatmul.f32.gmra.mxu0 %v2037
  %v2310 = vpop.f32.mrf.mxu0
  %v2311 = vadd.f32 %v2291, %v2310
  %2312 = vdwg.mxu0
  %2313 = vmatpush.msra.mxu0 %v2172
  %2314 = vmatpush.msra.mxu0 %v2170
  %2315 = vmatpush.msra.mxu0 %v2168
  %2316 = vmatpush.msra.mxu0 %v2166
  %2317 = vmatpush.msra.mxu0 %v2164
  %2318 = vmatpush.msra.mxu0 %v2162
  %2319 = vmatpush.msra.mxu0 %v2160
  %2320 = vmatpush.msra.mxu0 %v2158
  %2321 = vmatpush.msra.mxu0 %v2156
  %2322 = vmatpush.msra.mxu0 %v2154
  %2323 = vmatpush.msra.mxu0 %v2152
  %2324 = vmatpush.msra.mxu0 %v2150
  %2325 = vmatpush.msra.mxu0 %v2148
  %2326 = vmatpush.msra.mxu0 %v2146
  %2327 = vmatpush.msra.mxu0 %v2144
  %2328 = vmatpush.msra.mxu0 %v2142
  %2329 = vmatmul.f32.gmra.mxu0 %v2038
  %v2330 = vpop.f32.mrf.mxu0
  %v2331 = vadd.f32 %v2311, %v2330
  %2332 = vdwg.mxu0
  %v2333 = vld [vmem:[#allocation2] sm:$0xff]
  %v2334 = vld [vmem:[#allocation2 + $0x8] sm:$0xff]
  %v2335 = vadd.f32 %v2333, %v2251
  %v2336 = vadd.f32 %v2334, %v2331
  %2337 = vst [vmem:[#allocation2] sm:$0xff] %v2335
  %2338 = vst.msk [vmem:[#allocation2 + $0x8] sm:$0xff] %vm2040, %v2336
  %s2339 = scalar_lea.vmem %s14, 1024
  %v2340 = vld [vmem:[%s2339] sm:$0xff]
  %v2341 = vld [vmem:[%s2339 + $0x8] sm:$0xff]
  %v2342 = vld [vmem:[%s2339 + $0x10] sm:$0xff]
  %v2343 = vld [vmem:[%s2339 + $0x18] sm:$0xff]
  %v2344 = vld [vmem:[%s2339 + $0x20] sm:$0xff]
  %v2345 = vld [vmem:[%s2339 + $0x28] sm:$0xff]
  %v2346 = vld [vmem:[%s2339 + $0x30] sm:$0xff]
  %v2347 = vld [vmem:[%s2339 + $0x38] sm:$0xff]
  %v2348 = vld [vmem:[%s2339 + $0x40] sm:$0xff]
  %v2349 = vld [vmem:[%s2339 + $0x48] sm:$0xff]
  %v2350 = vld [vmem:[%s2339 + $0x50] sm:$0xff]
  %v2351 = vld [vmem:[%s2339 + $0x58] sm:$0xff]
  %v2352 = vld [vmem:[%s2339 + $0x60] sm:$0xff]
  %v2353 = vld [vmem:[%s2339 + $0x68] sm:$0xff]
  %v2354 = vld [vmem:[%s2339 + $0x70] sm:$0xff]
  %v2355 = vld [vmem:[%s2339 + $0x78] sm:$0xff]
  %v2356 = vld [vmem:[%s2339 + $0x80] sm:$0xff]
  %v2357 = vld [vmem:[%s2339 + $0x88] sm:$0xff]
  %v2358 = vld [vmem:[%s2339 + $0x90] sm:$0xff]
  %v2359 = vld [vmem:[%s2339 + $0x98] sm:$0xff]
  %v2360 = vld [vmem:[%s2339 + $0xa0] sm:$0xff]
  %v2361 = vld [vmem:[%s2339 + $0xa8] sm:$0xff]
  %v2362 = vld [vmem:[%s2339 + $0xb0] sm:$0xff]
  %v2363 = vld [vmem:[%s2339 + $0xb8] sm:$0xff]
  %v2364 = vld [vmem:[%s2339 + $0xc0] sm:$0xff]
  %v2365 = vld [vmem:[%s2339 + $0xc8] sm:$0xff]
  %v2366 = vld [vmem:[%s2339 + $0xd0] sm:$0xff]
  %v2367 = vld [vmem:[%s2339 + $0xd8] sm:$0xff]
  %v2368 = vld [vmem:[%s2339 + $0xe0] sm:$0xff]
  %v2369 = vld [vmem:[%s2339 + $0xe8] sm:$0xff]
  %v2370 = vld [vmem:[%s2339 + $0xf0] sm:$0xff]
  %v2371 = vld [vmem:[%s2339 + $0xf8] sm:$0xff]
  %v2372 = vld [vmem:[%s2339 + $0x100] sm:$0xff]
  %v2373 = vld [vmem:[%s2339 + $0x108] sm:$0xff]
  %v2374 = vld [vmem:[%s2339 + $0x110] sm:$0xff]
  %v2375 = vld [vmem:[%s2339 + $0x118] sm:$0xff]
  %v2376 = vld [vmem:[%s2339 + $0x120] sm:$0xff]
  %v2377 = vld [vmem:[%s2339 + $0x128] sm:$0xff]
  %v2378 = vld [vmem:[%s2339 + $0x130] sm:$0xff]
  %v2379 = vld [vmem:[%s2339 + $0x138] sm:$0xff]
  %v2380 = vld [vmem:[%s2339 + $0x140] sm:$0xff]
  %v2381 = vld [vmem:[%s2339 + $0x148] sm:$0xff]
  %v2382 = vld [vmem:[%s2339 + $0x150] sm:$0xff]
  %v2383 = vld [vmem:[%s2339 + $0x158] sm:$0xff]
  %v2384 = vld [vmem:[%s2339 + $0x160] sm:$0xff]
  %v2385 = vld [vmem:[%s2339 + $0x168] sm:$0xff]
  %v2386 = vld [vmem:[%s2339 + $0x170] sm:$0xff]
  %v2387 = vld [vmem:[%s2339 + $0x178] sm:$0xff]
  %v2388 = vld [vmem:[%s2339 + $0x180] sm:$0xff]
  %v2389 = vld [vmem:[%s2339 + $0x188] sm:$0xff]
  %v2390 = vld [vmem:[%s2339 + $0x190] sm:$0xff]
  %v2391 = vld [vmem:[%s2339 + $0x198] sm:$0xff]
  %v2392 = vld [vmem:[%s2339 + $0x1a0] sm:$0xff]
  %v2393 = vld [vmem:[%s2339 + $0x1a8] sm:$0xff]
  %v2394 = vld [vmem:[%s2339 + $0x1b0] sm:$0xff]
  %v2395 = vld [vmem:[%s2339 + $0x1b8] sm:$0xff]
  %v2396 = vld [vmem:[%s2339 + $0x1c0] sm:$0xff]
  %v2397 = vld [vmem:[%s2339 + $0x1c8] sm:$0xff]
  %v2398 = vld [vmem:[%s2339 + $0x1d0] sm:$0xff]
  %v2399 = vld [vmem:[%s2339 + $0x1d8] sm:$0xff]
  %v2400 = vld [vmem:[%s2339 + $0x1e0] sm:$0xff]
  %v2401 = vld [vmem:[%s2339 + $0x1e8] sm:$0xff]
  %v2402 = vld [vmem:[%s2339 + $0x1f0] sm:$0xff]
  %v2403 = vld [vmem:[%s2339 + $0x1f8] sm:$0xff]
  %v2404 = vld [vmem:[%s2339 + $0x200] sm:$0xff]
  %v2405 = vld [vmem:[%s2339 + $0x208] sm:$0xff]
  %v2406 = vld [vmem:[%s2339 + $0x210] sm:$0xff]
  %v2407 = vld [vmem:[%s2339 + $0x218] sm:$0xff]
  %v2408 = vld [vmem:[%s2339 + $0x220] sm:$0xff]
  %v2409 = vld [vmem:[%s2339 + $0x228] sm:$0xff]
  %v2410 = vld [vmem:[%s2339 + $0x230] sm:$0xff]
  %v2411 = vld [vmem:[%s2339 + $0x238] sm:$0xff]
  %v2412 = vld [vmem:[%s2339 + $0x240] sm:$0xff]
  %v2413 = vld [vmem:[%s2339 + $0x248] sm:$0xff]
  %v2414 = vld [vmem:[%s2339 + $0x250] sm:$0xff]
  %v2415 = vld [vmem:[%s2339 + $0x258] sm:$0xff]
  %v2416 = vld [vmem:[%s2339 + $0x260] sm:$0xff]
  %v2417 = vld [vmem:[%s2339 + $0x268] sm:$0xff]
  %v2418 = vld [vmem:[%s2339 + $0x270] sm:$0xff]
  %v2419 = vld [vmem:[%s2339 + $0x278] sm:$0xff]
  %v2420 = vld [vmem:[%s2339 + $0x280] sm:$0xff]
  %v2421 = vld [vmem:[%s2339 + $0x288] sm:$0xff]
  %v2422 = vld [vmem:[%s2339 + $0x290] sm:$0xff]
  %v2423 = vld [vmem:[%s2339 + $0x298] sm:$0xff]
  %v2424 = vld [vmem:[%s2339 + $0x2a0] sm:$0xff]
  %v2425 = vld [vmem:[%s2339 + $0x2a8] sm:$0xff]
  %v2426 = vld [vmem:[%s2339 + $0x2b0] sm:$0xff]
  %v2427 = vld [vmem:[%s2339 + $0x2b8] sm:$0xff]
  %v2428 = vld [vmem:[%s2339 + $0x2c0] sm:$0xff]
  %v2429 = vld [vmem:[%s2339 + $0x2c8] sm:$0xff]
  %v2430 = vld [vmem:[%s2339 + $0x2d0] sm:$0xff]
  %v2431 = vld [vmem:[%s2339 + $0x2d8] sm:$0xff]
  %v2432 = vld [vmem:[%s2339 + $0x2e0] sm:$0xff]
  %v2433 = vld [vmem:[%s2339 + $0x2e8] sm:$0xff]
  %v2434 = vld [vmem:[%s2339 + $0x2f0] sm:$0xff]
  %v2435 = vld [vmem:[%s2339 + $0x2f8] sm:$0xff]
  %v2436 = vld [vmem:[%s2339 + $0x300] sm:$0xff]
  %v2437 = vld [vmem:[%s2339 + $0x308] sm:$0xff]
  %v2438 = vld [vmem:[%s2339 + $0x310] sm:$0xff]
  %v2439 = vld [vmem:[%s2339 + $0x318] sm:$0xff]
  %v2440 = vld [vmem:[%s2339 + $0x320] sm:$0xff]
  %v2441 = vld [vmem:[%s2339 + $0x328] sm:$0xff]
  %v2442 = vld [vmem:[%s2339 + $0x330] sm:$0xff]
  %v2443 = vld [vmem:[%s2339 + $0x338] sm:$0xff]
  %v2444 = vld [vmem:[%s2339 + $0x340] sm:$0xff]
  %v2445 = vld [vmem:[%s2339 + $0x348] sm:$0xff]
  %v2446 = vld [vmem:[%s2339 + $0x350] sm:$0xff]
  %v2447 = vld [vmem:[%s2339 + $0x358] sm:$0xff]
  %v2448 = vld [vmem:[%s2339 + $0x360] sm:$0xff]
  %v2449 = vld [vmem:[%s2339 + $0x368] sm:$0xff]
  %v2450 = vld [vmem:[%s2339 + $0x370] sm:$0xff]
  %v2451 = vld [vmem:[%s2339 + $0x378] sm:$0xff]
  %v2452 = vld [vmem:[%s2339 + $0x380] sm:$0xff]
  %v2453 = vld [vmem:[%s2339 + $0x388] sm:$0xff]
  %v2454 = vld [vmem:[%s2339 + $0x390] sm:$0xff]
  %v2455 = vld [vmem:[%s2339 + $0x398] sm:$0xff]
  %v2456 = vld [vmem:[%s2339 + $0x3a0] sm:$0xff]
  %v2457 = vld [vmem:[%s2339 + $0x3a8] sm:$0xff]
  %v2458 = vld [vmem:[%s2339 + $0x3b0] sm:$0xff]
  %v2459 = vld [vmem:[%s2339 + $0x3b8] sm:$0xff]
  %v2460 = vld [vmem:[%s2339 + $0x3c0] sm:$0xff]
  %v2461 = vld [vmem:[%s2339 + $0x3c8] sm:$0xff]
  %v2462 = vld [vmem:[%s2339 + $0x3d0] sm:$0xff]
  %v2463 = vld [vmem:[%s2339 + $0x3d8] sm:$0xff]
  %v2464 = vld [vmem:[%s2339 + $0x3e0] sm:$0xff]
  %v2465 = vld [vmem:[%s2339 + $0x3e8] sm:$0xff]
  %v2466 = vld [vmem:[%s2339 + $0x3f0] sm:$0xff]
  %v2467 = vld [vmem:[%s2339 + $0x3f8] sm:$0xff]
  %2468 = vmatpush.msra.mxu0 %v2370
  %2469 = vmatpush.msra.mxu0 %v2368
  %2470 = vmatpush.msra.mxu0 %v2366
  %2471 = vmatpush.msra.mxu0 %v2364
  %2472 = vmatpush.msra.mxu0 %v2362
  %2473 = vmatpush.msra.mxu0 %v2360
  %2474 = vmatpush.msra.mxu0 %v2358
  %2475 = vmatpush.msra.mxu0 %v2356
  %2476 = vmatpush.msra.mxu0 %v2354
  %2477 = vmatpush.msra.mxu0 %v2352
  %2478 = vmatpush.msra.mxu0 %v2350
  %2479 = vmatpush.msra.mxu0 %v2348
  %2480 = vmatpush.msra.mxu0 %v2346
  %2481 = vmatpush.msra.mxu0 %v2344
  %2482 = vmatpush.msra.mxu0 %v2342
  %2483 = vmatpush.msra.mxu0 %v2340
  %2484 = vmatmul.f32.gmra.mxu0 %v2035
  %v2485 = vpop.f32.mrf.mxu0
  %v2486 = vadd.f32 0.0, %v2485
  %2487 = vdwg.mxu0
  %2488 = vmatpush.msra.mxu0 %v2402
  %2489 = vmatpush.msra.mxu0 %v2400
  %2490 = vmatpush.msra.mxu0 %v2398
  %2491 = vmatpush.msra.mxu0 %v2396
  %2492 = vmatpush.msra.mxu0 %v2394
  %2493 = vmatpush.msra.mxu0 %v2392
  %2494 = vmatpush.msra.mxu0 %v2390
  %2495 = vmatpush.msra.mxu0 %v2388
  %2496 = vmatpush.msra.mxu0 %v2386
  %2497 = vmatpush.msra.mxu0 %v2384
  %2498 = vmatpush.msra.mxu0 %v2382
  %2499 = vmatpush.msra.mxu0 %v2380
  %2500 = vmatpush.msra.mxu0 %v2378
  %2501 = vmatpush.msra.mxu0 %v2376
  %2502 = vmatpush.msra.mxu0 %v2374
  %2503 = vmatpush.msra.mxu0 %v2372
  %2504 = vmatmul.f32.gmra.mxu0 %v2036
  %v2505 = vpop.f32.mrf.mxu0
  %v2506 = vadd.f32 %v2486, %v2505
  %2507 = vdwg.mxu0
  %2508 = vmatpush.msra.mxu0 %v2434
  %2509 = vmatpush.msra.mxu0 %v2432
  %2510 = vmatpush.msra.mxu0 %v2430
  %2511 = vmatpush.msra.mxu0 %v2428
  %2512 = vmatpush.msra.mxu0 %v2426
  %2513 = vmatpush.msra.mxu0 %v2424
  %2514 = vmatpush.msra.mxu0 %v2422
  %2515 = vmatpush.msra.mxu0 %v2420
  %2516 = vmatpush.msra.mxu0 %v2418
  %2517 = vmatpush.msra.mxu0 %v2416
  %2518 = vmatpush.msra.mxu0 %v2414
  %2519 = vmatpush.msra.mxu0 %v2412
  %2520 = vmatpush.msra.mxu0 %v2410
  %2521 = vmatpush.msra.mxu0 %v2408
  %2522 = vmatpush.msra.mxu0 %v2406
  %2523 = vmatpush.msra.mxu0 %v2404
  %2524 = vmatmul.f32.gmra.mxu0 %v2037
  %v2525 = vpop.f32.mrf.mxu0
  %v2526 = vadd.f32 %v2506, %v2525
  %2527 = vdwg.mxu0
  %2528 = vmatpush.msra.mxu0 %v2466
  %2529 = vmatpush.msra.mxu0 %v2464
  %2530 = vmatpush.msra.mxu0 %v2462
  %2531 = vmatpush.msra.mxu0 %v2460
  %2532 = vmatpush.msra.mxu0 %v2458
  %2533 = vmatpush.msra.mxu0 %v2456
  %2534 = vmatpush.msra.mxu0 %v2454
  %2535 = vmatpush.msra.mxu0 %v2452
  %2536 = vmatpush.msra.mxu0 %v2450
  %2537 = vmatpush.msra.mxu0 %v2448
  %2538 = vmatpush.msra.mxu0 %v2446
  %2539 = vmatpush.msra.mxu0 %v2444
  %2540 = vmatpush.msra.mxu0 %v2442
  %2541 = vmatpush.msra.mxu0 %v2440
  %2542 = vmatpush.msra.mxu0 %v2438
  %2543 = vmatpush.msra.mxu0 %v2436
  %2544 = vmatmul.f32.gmra.mxu0 %v2038
  %v2545 = vpop.f32.mrf.mxu0
  %v2546 = vadd.f32 %v2526, %v2545
  %2547 = vdwg.mxu0
  %2548 = vmatpush.msra.mxu0 %v2371
  %2549 = vmatpush.msra.mxu0 %v2369
  %2550 = vmatpush.msra.mxu0 %v2367
  %2551 = vmatpush.msra.mxu0 %v2365
  %2552 = vmatpush.msra.mxu0 %v2363
  %2553 = vmatpush.msra.mxu0 %v2361
  %2554 = vmatpush.msra.mxu0 %v2359
  %2555 = vmatpush.msra.mxu0 %v2357
  %2556 = vmatpush.msra.mxu0 %v2355
  %2557 = vmatpush.msra.mxu0 %v2353
  %2558 = vmatpush.msra.mxu0 %v2351
  %2559 = vmatpush.msra.mxu0 %v2349
  %2560 = vmatpush.msra.mxu0 %v2347
  %2561 = vmatpush.msra.mxu0 %v2345
  %2562 = vmatpush.msra.mxu0 %v2343
  %2563 = vmatpush.msra.mxu0 %v2341
  %2564 = vmatmul.f32.gmra.mxu0 %v2035
  %v2565 = vpop.f32.mrf.mxu0
  %v2566 = vadd.f32 0.0, %v2565
  %2567 = vdwg.mxu0
  %2568 = vmatpush.msra.mxu0 %v2403
  %2569 = vmatpush.msra.mxu0 %v2401
  %2570 = vmatpush.msra.mxu0 %v2399
  %2571 = vmatpush.msra.mxu0 %v2397
  %2572 = vmatpush.msra.mxu0 %v2395
  %2573 = vmatpush.msra.mxu0 %v2393
  %2574 = vmatpush.msra.mxu0 %v2391
  %2575 = vmatpush.msra.mxu0 %v2389
  %2576 = vmatpush.msra.mxu0 %v2387
  %2577 = vmatpush.msra.mxu0 %v2385
  %2578 = vmatpush.msra.mxu0 %v2383
  %2579 = vmatpush.msra.mxu0 %v2381
  %2580 = vmatpush.msra.mxu0 %v2379
  %2581 = vmatpush.msra.mxu0 %v2377
  %2582 = vmatpush.msra.mxu0 %v2375
  %2583 = vmatpush.msra.mxu0 %v2373
  %2584 = vmatmul.f32.gmra.mxu0 %v2036
  %v2585 = vpop.f32.mrf.mxu0
  %v2586 = vadd.f32 %v2566, %v2585
  %2587 = vdwg.mxu0
  %2588 = vmatpush.msra.mxu0 %v2435
  %2589 = vmatpush.msra.mxu0 %v2433
  %2590 = vmatpush.msra.mxu0 %v2431
  %2591 = vmatpush.msra.mxu0 %v2429
  %2592 = vmatpush.msra.mxu0 %v2427
  %2593 = vmatpush.msra.mxu0 %v2425
  %2594 = vmatpush.msra.mxu0 %v2423
  %2595 = vmatpush.msra.mxu0 %v2421
  %2596 = vmatpush.msra.mxu0 %v2419
  %2597 = vmatpush.msra.mxu0 %v2417
  %2598 = vmatpush.msra.mxu0 %v2415
  %2599 = vmatpush.msra.mxu0 %v2413
  %2600 = vmatpush.msra.mxu0 %v2411
  %2601 = vmatpush.msra.mxu0 %v2409
  %2602 = vmatpush.msra.mxu0 %v2407
  %2603 = vmatpush.msra.mxu0 %v2405
  %2604 = vmatmul.f32.gmra.mxu0 %v2037
  %v2605 = vpop.f32.mrf.mxu0
  %v2606 = vadd.f32 %v2586, %v2605
  %2607 = vdwg.mxu0
  %2608 = vmatpush.msra.mxu0 %v2467
  %2609 = vmatpush.msra.mxu0 %v2465
  %2610 = vmatpush.msra.mxu0 %v2463
  %2611 = vmatpush.msra.mxu0 %v2461
  %2612 = vmatpush.msra.mxu0 %v2459
  %2613 = vmatpush.msra.mxu0 %v2457
  %2614 = vmatpush.msra.mxu0 %v2455
  %2615 = vmatpush.msra.mxu0 %v2453
  %2616 = vmatpush.msra.mxu0 %v2451
  %2617 = vmatpush.msra.mxu0 %v2449
  %2618 = vmatpush.msra.mxu0 %v2447
  %2619 = vmatpush.msra.mxu0 %v2445
  %2620 = vmatpush.msra.mxu0 %v2443
  %2621 = vmatpush.msra.mxu0 %v2441
  %2622 = vmatpush.msra.mxu0 %v2439
  %2623 = vmatpush.msra.mxu0 %v2437
  %2624 = vmatmul.f32.gmra.mxu0 %v2038
  %v2625 = vpop.f32.mrf.mxu0
  %v2626 = vadd.f32 %v2606, %v2625
  %2627 = vdwg.mxu0
  %v2628 = vld [vmem:[#allocation2] sm:$0xfc]
  %v2629 = vld [vmem:[#allocation2 + $0x8] sm:$0xfc]
  %v2630 = vld [vmem:[#allocation2 + $0x10] sm:$0x3]
  %v2631 = vld [vmem:[#allocation2 + $0x18] sm:$0x3]
  %v2634 = vrot.slane %v2546, 6
  %v2635 = vrot.slane %v2626, 6
  %v2638 = vadd.f32 %v2628, %v2634
  %v2639 = vadd.f32 %v2629, %v2635
  %v2640 = vadd.f32 %v2630, %v2634
  %v2641 = vadd.f32 %v2631, %v2635
  %2642 = vst [vmem:[#allocation2] sm:$0xfc] %v2638
  %vm2643 = vcmask 785410
  %2644 = vst.msk [vmem:[#allocation2 + $0x8] sm:$0xfc] %vm2643, %v2639
  %2645 = vst [vmem:[#allocation2 + $0x10] sm:$0x3] %v2640
  %vm2646 = vcmask 779264
  %2647 = vst.msk [vmem:[#allocation2 + $0x18] sm:$0x3] %vm2646, %v2641
  %s2648 = scalar_lea.vmem %s14, 2048
  %v2649 = vld [vmem:[%s2648] sm:$0xff]
  %v2650 = vld [vmem:[%s2648 + $0x8] sm:$0xff]
  %v2651 = vld [vmem:[%s2648 + $0x10] sm:$0xff]
  %v2652 = vld [vmem:[%s2648 + $0x18] sm:$0xff]
  %v2653 = vld [vmem:[%s2648 + $0x20] sm:$0xff]
  %v2654 = vld [vmem:[%s2648 + $0x28] sm:$0xff]
  %v2655 = vld [vmem:[%s2648 + $0x30] sm:$0xff]
  %v2656 = vld [vmem:[%s2648 + $0x38] sm:$0xff]
  %v2657 = vld [vmem:[%s2648 + $0x40] sm:$0xff]
  %v2658 = vld [vmem:[%s2648 + $0x48] sm:$0xff]
  %v2659 = vld [vmem:[%s2648 + $0x50] sm:$0xff]
  %v2660 = vld [vmem:[%s2648 + $0x58] sm:$0xff]
  %v2661 = vld [vmem:[%s2648 + $0x60] sm:$0xff]
  %v2662 = vld [vmem:[%s2648 + $0x68] sm:$0xff]
  %v2663 = vld [vmem:[%s2648 + $0x70] sm:$0xff]
  %v2664 = vld [vmem:[%s2648 + $0x78] sm:$0xff]
  %v2665 = vld [vmem:[%s2648 + $0x80] sm:$0xff]
  %v2666 = vld [vmem:[%s2648 + $0x88] sm:$0xff]
  %v2667 = vld [vmem:[%s2648 + $0x90] sm:$0xff]
  %v2668 = vld [vmem:[%s2648 + $0x98] sm:$0xff]
  %v2669 = vld [vmem:[%s2648 + $0xa0] sm:$0xff]
  %v2670 = vld [vmem:[%s2648 + $0xa8] sm:$0xff]
  %v2671 = vld [vmem:[%s2648 + $0xb0] sm:$0xff]
  %v2672 = vld [vmem:[%s2648 + $0xb8] sm:$0xff]
  %v2673 = vld [vmem:[%s2648 + $0xc0] sm:$0xff]
  %v2674 = vld [vmem:[%s2648 + $0xc8] sm:$0xff]
  %v2675 = vld [vmem:[%s2648 + $0xd0] sm:$0xff]
  %v2676 = vld [vmem:[%s2648 + $0xd8] sm:$0xff]
  %v2677 = vld [vmem:[%s2648 + $0xe0] sm:$0xff]
  %v2678 = vld [vmem:[%s2648 + $0xe8] sm:$0xff]
  %v2679 = vld [vmem:[%s2648 + $0xf0] sm:$0xff]
  %v2680 = vld [vmem:[%s2648 + $0xf8] sm:$0xff]
  %v2681 = vld [vmem:[%s2648 + $0x100] sm:$0xff]
  %v2682 = vld [vmem:[%s2648 + $0x108] sm:$0xff]
  %v2683 = vld [vmem:[%s2648 + $0x110] sm:$0xff]
  %v2684 = vld [vmem:[%s2648 + $0x118] sm:$0xff]
  %v2685 = vld [vmem:[%s2648 + $0x120] sm:$0xff]
  %v2686 = vld [vmem:[%s2648 + $0x128] sm:$0xff]
  %v2687 = vld [vmem:[%s2648 + $0x130] sm:$0xff]
  %v2688 = vld [vmem:[%s2648 + $0x138] sm:$0xff]
  %v2689 = vld [vmem:[%s2648 + $0x140] sm:$0xff]
  %v2690 = vld [vmem:[%s2648 + $0x148] sm:$0xff]
  %v2691 = vld [vmem:[%s2648 + $0x150] sm:$0xff]
  %v2692 = vld [vmem:[%s2648 + $0x158] sm:$0xff]
  %v2693 = vld [vmem:[%s2648 + $0x160] sm:$0xff]
  %v2694 = vld [vmem:[%s2648 + $0x168] sm:$0xff]
  %v2695 = vld [vmem:[%s2648 + $0x170] sm:$0xff]
  %v2696 = vld [vmem:[%s2648 + $0x178] sm:$0xff]
  %v2697 = vld [vmem:[%s2648 + $0x180] sm:$0xff]
  %v2698 = vld [vmem:[%s2648 + $0x188] sm:$0xff]
  %v2699 = vld [vmem:[%s2648 + $0x190] sm:$0xff]
  %v2700 = vld [vmem:[%s2648 + $0x198] sm:$0xff]
  %v2701 = vld [vmem:[%s2648 + $0x1a0] sm:$0xff]
  %v2702 = vld [vmem:[%s2648 + $0x1a8] sm:$0xff]
  %v2703 = vld [vmem:[%s2648 + $0x1b0] sm:$0xff]
  %v2704 = vld [vmem:[%s2648 + $0x1b8] sm:$0xff]
  %v2705 = vld [vmem:[%s2648 + $0x1c0] sm:$0xff]
  %v2706 = vld [vmem:[%s2648 + $0x1c8] sm:$0xff]
  %v2707 = vld [vmem:[%s2648 + $0x1d0] sm:$0xff]
  %v2708 = vld [vmem:[%s2648 + $0x1d8] sm:$0xff]
  %v2709 = vld [vmem:[%s2648 + $0x1e0] sm:$0xff]
  %v2710 = vld [vmem:[%s2648 + $0x1e8] sm:$0xff]
  %v2711 = vld [vmem:[%s2648 + $0x1f0] sm:$0xff]
  %v2712 = vld [vmem:[%s2648 + $0x1f8] sm:$0xff]
  %v2713 = vld [vmem:[%s2648 + $0x200] sm:$0xff]
  %v2714 = vld [vmem:[%s2648 + $0x208] sm:$0xff]
  %v2715 = vld [vmem:[%s2648 + $0x210] sm:$0xff]
  %v2716 = vld [vmem:[%s2648 + $0x218] sm:$0xff]
  %v2717 = vld [vmem:[%s2648 + $0x220] sm:$0xff]
  %v2718 = vld [vmem:[%s2648 + $0x228] sm:$0xff]
  %v2719 = vld [vmem:[%s2648 + $0x230] sm:$0xff]
  %v2720 = vld [vmem:[%s2648 + $0x238] sm:$0xff]
  %v2721 = vld [vmem:[%s2648 + $0x240] sm:$0xff]
  %v2722 = vld [vmem:[%s2648 + $0x248] sm:$0xff]
  %v2723 = vld [vmem:[%s2648 + $0x250] sm:$0xff]
  %v2724 = vld [vmem:[%s2648 + $0x258] sm:$0xff]
  %v2725 = vld [vmem:[%s2648 + $0x260] sm:$0xff]
  %v2726 = vld [vmem:[%s2648 + $0x268] sm:$0xff]
  %v2727 = vld [vmem:[%s2648 + $0x270] sm:$0xff]
  %v2728 = vld [vmem:[%s2648 + $0x278] sm:$0xff]
  %v2729 = vld [vmem:[%s2648 + $0x280] sm:$0xff]
  %v2730 = vld [vmem:[%s2648 + $0x288] sm:$0xff]
  %v2731 = vld [vmem:[%s2648 + $0x290] sm:$0xff]
  %v2732 = vld [vmem:[%s2648 + $0x298] sm:$0xff]
  %v2733 = vld [vmem:[%s2648 + $0x2a0] sm:$0xff]
  %v2734 = vld [vmem:[%s2648 + $0x2a8] sm:$0xff]
  %v2735 = vld [vmem:[%s2648 + $0x2b0] sm:$0xff]
  %v2736 = vld [vmem:[%s2648 + $0x2b8] sm:$0xff]
  %v2737 = vld [vmem:[%s2648 + $0x2c0] sm:$0xff]
  %v2738 = vld [vmem:[%s2648 + $0x2c8] sm:$0xff]
  %v2739 = vld [vmem:[%s2648 + $0x2d0] sm:$0xff]
  %v2740 = vld [vmem:[%s2648 + $0x2d8] sm:$0xff]
  %v2741 = vld [vmem:[%s2648 + $0x2e0] sm:$0xff]
  %v2742 = vld [vmem:[%s2648 + $0x2e8] sm:$0xff]
  %v2743 = vld [vmem:[%s2648 + $0x2f0] sm:$0xff]
  %v2744 = vld [vmem:[%s2648 + $0x2f8] sm:$0xff]
  %v2745 = vld [vmem:[%s2648 + $0x300] sm:$0xff]
  %v2746 = vld [vmem:[%s2648 + $0x308] sm:$0xff]
  %v2747 = vld [vmem:[%s2648 + $0x310] sm:$0xff]
  %v2748 = vld [vmem:[%s2648 + $0x318] sm:$0xff]
  %v2749 = vld [vmem:[%s2648 + $0x320] sm:$0xff]
  %v2750 = vld [vmem:[%s2648 + $0x328] sm:$0xff]
  %v2751 = vld [vmem:[%s2648 + $0x330] sm:$0xff]
  %v2752 = vld [vmem:[%s2648 + $0x338] sm:$0xff]
  %v2753 = vld [vmem:[%s2648 + $0x340] sm:$0xff]
  %v2754 = vld [vmem:[%s2648 + $0x348] sm:$0xff]
  %v2755 = vld [vmem:[%s2648 + $0x350] sm:$0xff]
  %v2756 = vld [vmem:[%s2648 + $0x358] sm:$0xff]
  %v2757 = vld [vmem:[%s2648 + $0x360] sm:$0xff]
  %v2758 = vld [vmem:[%s2648 + $0x368] sm:$0xff]
  %v2759 = vld [vmem:[%s2648 + $0x370] sm:$0xff]
  %v2760 = vld [vmem:[%s2648 + $0x378] sm:$0xff]
  %v2761 = vld [vmem:[%s2648 + $0x380] sm:$0xff]
  %v2762 = vld [vmem:[%s2648 + $0x388] sm:$0xff]
  %v2763 = vld [vmem:[%s2648 + $0x390] sm:$0xff]
  %v2764 = vld [vmem:[%s2648 + $0x398] sm:$0xff]
  %v2765 = vld [vmem:[%s2648 + $0x3a0] sm:$0xff]
  %v2766 = vld [vmem:[%s2648 + $0x3a8] sm:$0xff]
  %v2767 = vld [vmem:[%s2648 + $0x3b0] sm:$0xff]
  %v2768 = vld [vmem:[%s2648 + $0x3b8] sm:$0xff]
  %v2769 = vld [vmem:[%s2648 + $0x3c0] sm:$0xff]
  %v2770 = vld [vmem:[%s2648 + $0x3c8] sm:$0xff]
  %v2771 = vld [vmem:[%s2648 + $0x3d0] sm:$0xff]
  %v2772 = vld [vmem:[%s2648 + $0x3d8] sm:$0xff]
  %v2773 = vld [vmem:[%s2648 + $0x3e0] sm:$0xff]
  %v2774 = vld [vmem:[%s2648 + $0x3e8] sm:$0xff]
  %v2775 = vld [vmem:[%s2648 + $0x3f0] sm:$0xff]
  %v2776 = vld [vmem:[%s2648 + $0x3f8] sm:$0xff]
  %2777 = vmatpush.msra.mxu0 %v2679
  %2778 = vmatpush.msra.mxu0 %v2677
  %2779 = vmatpush.msra.mxu0 %v2675
  %2780 = vmatpush.msra.mxu0 %v2673
  %2781 = vmatpush.msra.mxu0 %v2671
  %2782 = vmatpush.msra.mxu0 %v2669
  %2783 = vmatpush.msra.mxu0 %v2667
  %2784 = vmatpush.msra.mxu0 %v2665
  %2785 = vmatpush.msra.mxu0 %v2663
  %2786 = vmatpush.msra.mxu0 %v2661
  %2787 = vmatpush.msra.mxu0 %v2659
  %2788 = vmatpush.msra.mxu0 %v2657
  %2789 = vmatpush.msra.mxu0 %v2655
  %2790 = vmatpush.msra.mxu0 %v2653
  %2791 = vmatpush.msra.mxu0 %v2651
  %2792 = vmatpush.msra.mxu0 %v2649
  %2793 = vmatmul.f32.gmra.mxu0 %v2035
  %v2794 = vpop.f32.mrf.mxu0
  %v2795 = vadd.f32 0.0, %v2794
  %2796 = vdwg.mxu0
  %2797 = vmatpush.msra.mxu0 %v2711
  %2798 = vmatpush.msra.mxu0 %v2709
  %2799 = vmatpush.msra.mxu0 %v2707
  %2800 = vmatpush.msra.mxu0 %v2705
  %2801 = vmatpush.msra.mxu0 %v2703
  %2802 = vmatpush.msra.mxu0 %v2701
  %2803 = vmatpush.msra.mxu0 %v2699
  %2804 = vmatpush.msra.mxu0 %v2697
  %2805 = vmatpush.msra.mxu0 %v2695
  %2806 = vmatpush.msra.mxu0 %v2693
  %2807 = vmatpush.msra.mxu0 %v2691
  %2808 = vmatpush.msra.mxu0 %v2689
  %2809 = vmatpush.msra.mxu0 %v2687
  %2810 = vmatpush.msra.mxu0 %v2685
  %2811 = vmatpush.msra.mxu0 %v2683
  %2812 = vmatpush.msra.mxu0 %v2681
  %2813 = vmatmul.f32.gmra.mxu0 %v2036
  %v2814 = vpop.f32.mrf.mxu0
  %v2815 = vadd.f32 %v2795, %v2814
  %2816 = vdwg.mxu0
  %2817 = vmatpush.msra.mxu0 %v2743
  %2818 = vmatpush.msra.mxu0 %v2741
  %2819 = vmatpush.msra.mxu0 %v2739
  %2820 = vmatpush.msra.mxu0 %v2737
  %2821 = vmatpush.msra.mxu0 %v2735
  %2822 = vmatpush.msra.mxu0 %v2733
  %2823 = vmatpush.msra.mxu0 %v2731
  %2824 = vmatpush.msra.mxu0 %v2729
  %2825 = vmatpush.msra.mxu0 %v2727
  %2826 = vmatpush.msra.mxu0 %v2725
  %2827 = vmatpush.msra.mxu0 %v2723
  %2828 = vmatpush.msra.mxu0 %v2721
  %2829 = vmatpush.msra.mxu0 %v2719
  %2830 = vmatpush.msra.mxu0 %v2717
  %2831 = vmatpush.msra.mxu0 %v2715
  %2832 = vmatpush.msra.mxu0 %v2713
  %2833 = vmatmul.f32.gmra.mxu0 %v2037
  %v2834 = vpop.f32.mrf.mxu0
  %v2835 = vadd.f32 %v2815, %v2834
  %2836 = vdwg.mxu0
  %2837 = vmatpush.msra.mxu0 %v2775
  %2838 = vmatpush.msra.mxu0 %v2773
  %2839 = vmatpush.msra.mxu0 %v2771
  %2840 = vmatpush.msra.mxu0 %v2769
  %2841 = vmatpush.msra.mxu0 %v2767
  %2842 = vmatpush.msra.mxu0 %v2765
  %2843 = vmatpush.msra.mxu0 %v2763
  %2844 = vmatpush.msra.mxu0 %v2761
  %2845 = vmatpush.msra.mxu0 %v2759
  %2846 = vmatpush.msra.mxu0 %v2757
  %2847 = vmatpush.msra.mxu0 %v2755
  %2848 = vmatpush.msra.mxu0 %v2753
  %2849 = vmatpush.msra.mxu0 %v2751
  %2850 = vmatpush.msra.mxu0 %v2749
  %2851 = vmatpush.msra.mxu0 %v2747
  %2852 = vmatpush.msra.mxu0 %v2745
  %2853 = vmatmul.f32.gmra.mxu0 %v2038
  %v2854 = vpop.f32.mrf.mxu0
  %v2855 = vadd.f32 %v2835, %v2854
  %2856 = vdwg.mxu0
  %2857 = vmatpush.msra.mxu0 %v2680
  %2858 = vmatpush.msra.mxu0 %v2678
  %2859 = vmatpush.msra.mxu0 %v2676
  %2860 = vmatpush.msra.mxu0 %v2674
  %2861 = vmatpush.msra.mxu0 %v2672
  %2862 = vmatpush.msra.mxu0 %v2670
  %2863 = vmatpush.msra.mxu0 %v2668
  %2864 = vmatpush.msra.mxu0 %v2666
  %2865 = vmatpush.msra.mxu0 %v2664
  %2866 = vmatpush.msra.mxu0 %v2662
  %2867 = vmatpush.msra.mxu0 %v2660
  %2868 = vmatpush.msra.mxu0 %v2658
  %2869 = vmatpush.msra.mxu0 %v2656
  %2870 = vmatpush.msra.mxu0 %v2654
  %2871 = vmatpush.msra.mxu0 %v2652
  %2872 = vmatpush.msra.mxu0 %v2650
  %2873 = vmatmul.f32.gmra.mxu0 %v2035
  %v2874 = vpop.f32.mrf.mxu0
  %v2875 = vadd.f32 0.0, %v2874
  %2876 = vdwg.mxu0
  %2877 = vmatpush.msra.mxu0 %v2712
  %2878 = vmatpush.msra.mxu0 %v2710
  %2879 = vmatpush.msra.mxu0 %v2708
  %2880 = vmatpush.msra.mxu0 %v2706
  %2881 = vmatpush.msra.mxu0 %v2704
  %2882 = vmatpush.msra.mxu0 %v2702
  %2883 = vmatpush.msra.mxu0 %v2700
  %2884 = vmatpush.msra.mxu0 %v2698
  %2885 = vmatpush.msra.mxu0 %v2696
  %2886 = vmatpush.msra.mxu0 %v2694
  %2887 = vmatpush.msra.mxu0 %v2692
  %2888 = vmatpush.msra.mxu0 %v2690
  %2889 = vmatpush.msra.mxu0 %v2688
  %2890 = vmatpush.msra.mxu0 %v2686
  %2891 = vmatpush.msra.mxu0 %v2684
  %2892 = vmatpush.msra.mxu0 %v2682
  %2893 = vmatmul.f32.gmra.mxu0 %v2036
  %v2894 = vpop.f32.mrf.mxu0
  %v2895 = vadd.f32 %v2875, %v2894
  %2896 = vdwg.mxu0
  %2897 = vmatpush.msra.mxu0 %v2744
  %2898 = vmatpush.msra.mxu0 %v2742
  %2899 = vmatpush.msra.mxu0 %v2740
  %2900 = vmatpush.msra.mxu0 %v2738
  %2901 = vmatpush.msra.mxu0 %v2736
  %2902 = vmatpush.msra.mxu0 %v2734
  %2903 = vmatpush.msra.mxu0 %v2732
  %2904 = vmatpush.msra.mxu0 %v2730
  %2905 = vmatpush.msra.mxu0 %v2728
  %2906 = vmatpush.msra.mxu0 %v2726
  %2907 = vmatpush.msra.mxu0 %v2724
  %2908 = vmatpush.msra.mxu0 %v2722
  %2909 = vmatpush.msra.mxu0 %v2720
  %2910 = vmatpush.msra.mxu0 %v2718
  %2911 = vmatpush.msra.mxu0 %v2716
  %2912 = vmatpush.msra.mxu0 %v2714
  %2913 = vmatmul.f32.gmra.mxu0 %v2037
  %v2914 = vpop.f32.mrf.mxu0
  %v2915 = vadd.f32 %v2895, %v2914
  %2916 = vdwg.mxu0
  %2917 = vmatpush.msra.mxu0 %v2776
  %2918 = vmatpush.msra.mxu0 %v2774
  %2919 = vmatpush.msra.mxu0 %v2772
  %2920 = vmatpush.msra.mxu0 %v2770
  %2921 = vmatpush.msra.mxu0 %v2768
  %2922 = vmatpush.msra.mxu0 %v2766
  %2923 = vmatpush.msra.mxu0 %v2764
  %2924 = vmatpush.msra.mxu0 %v2762
  %2925 = vmatpush.msra.mxu0 %v2760
  %2926 = vmatpush.msra.mxu0 %v2758
  %2927 = vmatpush.msra.mxu0 %v2756
  %2928 = vmatpush.msra.mxu0 %v2754
  %2929 = vmatpush.msra.mxu0 %v2752
  %2930 = vmatpush.msra.mxu0 %v2750
  %2931 = vmatpush.msra.mxu0 %v2748
  %2932 = vmatpush.msra.mxu0 %v2746
  %2933 = vmatmul.f32.gmra.mxu0 %v2038
  %v2934 = vpop.f32.mrf.mxu0
  %v2935 = vadd.f32 %v2915, %v2934
  %2936 = vdwg.mxu0
  %v2937 = vld [vmem:[#allocation2] sm:$0xf0]
  %v2938 = vld [vmem:[#allocation2 + $0x8] sm:$0xf0]
  %v2939 = vld [vmem:[#allocation2 + $0x10] sm:$0xf]
  %v2940 = vld [vmem:[#allocation2 + $0x18] sm:$0xf]
  %v2943 = vrot.slane %v2855, 4
  %v2944 = vrot.slane %v2935, 4
  %v2947 = vadd.f32 %v2937, %v2943
  %v2948 = vadd.f32 %v2938, %v2944
  %v2949 = vadd.f32 %v2939, %v2943
  %v2950 = vadd.f32 %v2940, %v2944
  %2951 = vst [vmem:[#allocation2] sm:$0xf0] %v2947
  %vm2952 = vcmask 785412
  %2953 = vst.msk [vmem:[#allocation2 + $0x8] sm:$0xf0] %vm2952, %v2948
  %2954 = vst [vmem:[#allocation2 + $0x10] sm:$0xf] %v2949
  %vm2955 = vcmask 781312
  %2956 = vst.msk [vmem:[#allocation2 + $0x18] sm:$0xf] %vm2955, %v2950
  %s2957 = scalar_lea.vmem %s14, 3072
  %v2958 = vld [vmem:[%s2957] sm:$0xff]
  %v2959 = vld [vmem:[%s2957 + $0x8] sm:$0xff]
  %v2960 = vld [vmem:[%s2957 + $0x10] sm:$0xff]
  %v2961 = vld [vmem:[%s2957 + $0x18] sm:$0xff]
  %v2962 = vld [vmem:[%s2957 + $0x20] sm:$0xff]
  %v2963 = vld [vmem:[%s2957 + $0x28] sm:$0xff]
  %v2964 = vld [vmem:[%s2957 + $0x30] sm:$0xff]
  %v2965 = vld [vmem:[%s2957 + $0x38] sm:$0xff]
  %v2966 = vld [vmem:[%s2957 + $0x40] sm:$0xff]
  %v2967 = vld [vmem:[%s2957 + $0x48] sm:$0xff]
  %v2968 = vld [vmem:[%s2957 + $0x50] sm:$0xff]
  %v2969 = vld [vmem:[%s2957 + $0x58] sm:$0xff]
  %v2970 = vld [vmem:[%s2957 + $0x60] sm:$0xff]
  %v2971 = vld [vmem:[%s2957 + $0x68] sm:$0xff]
  %v2972 = vld [vmem:[%s2957 + $0x70] sm:$0xff]
  %v2973 = vld [vmem:[%s2957 + $0x78] sm:$0xff]
  %v2974 = vld [vmem:[%s2957 + $0x80] sm:$0xff]
  %v2975 = vld [vmem:[%s2957 + $0x88] sm:$0xff]
  %v2976 = vld [vmem:[%s2957 + $0x90] sm:$0xff]
  %v2977 = vld [vmem:[%s2957 + $0x98] sm:$0xff]
  %v2978 = vld [vmem:[%s2957 + $0xa0] sm:$0xff]
  %v2979 = vld [vmem:[%s2957 + $0xa8] sm:$0xff]
  %v2980 = vld [vmem:[%s2957 + $0xb0] sm:$0xff]
  %v2981 = vld [vmem:[%s2957 + $0xb8] sm:$0xff]
  %v2982 = vld [vmem:[%s2957 + $0xc0] sm:$0xff]
  %v2983 = vld [vmem:[%s2957 + $0xc8] sm:$0xff]
  %v2984 = vld [vmem:[%s2957 + $0xd0] sm:$0xff]
  %v2985 = vld [vmem:[%s2957 + $0xd8] sm:$0xff]
  %v2986 = vld [vmem:[%s2957 + $0xe0] sm:$0xff]
  %v2987 = vld [vmem:[%s2957 + $0xe8] sm:$0xff]
  %v2988 = vld [vmem:[%s2957 + $0xf0] sm:$0xff]
  %v2989 = vld [vmem:[%s2957 + $0xf8] sm:$0xff]
  %v2990 = vld [vmem:[%s2957 + $0x100] sm:$0xff]
  %v2991 = vld [vmem:[%s2957 + $0x108] sm:$0xff]
  %v2992 = vld [vmem:[%s2957 + $0x110] sm:$0xff]
  %v2993 = vld [vmem:[%s2957 + $0x118] sm:$0xff]
  %v2994 = vld [vmem:[%s2957 + $0x120] sm:$0xff]
  %v2995 = vld [vmem:[%s2957 + $0x128] sm:$0xff]
  %v2996 = vld [vmem:[%s2957 + $0x130] sm:$0xff]
  %v2997 = vld [vmem:[%s2957 + $0x138] sm:$0xff]
  %v2998 = vld [vmem:[%s2957 + $0x140] sm:$0xff]
  %v2999 = vld [vmem:[%s2957 + $0x148] sm:$0xff]
  %v3000 = vld [vmem:[%s2957 + $0x150] sm:$0xff]
  %v3001 = vld [vmem:[%s2957 + $0x158] sm:$0xff]
  %v3002 = vld [vmem:[%s2957 + $0x160] sm:$0xff]
  %v3003 = vld [vmem:[%s2957 + $0x168] sm:$0xff]
  %v3004 = vld [vmem:[%s2957 + $0x170] sm:$0xff]
  %v3005 = vld [vmem:[%s2957 + $0x178] sm:$0xff]
  %v3006 = vld [vmem:[%s2957 + $0x180] sm:$0xff]
  %v3007 = vld [vmem:[%s2957 + $0x188] sm:$0xff]
  %v3008 = vld [vmem:[%s2957 + $0x190] sm:$0xff]
  %v3009 = vld [vmem:[%s2957 + $0x198] sm:$0xff]
  %v3010 = vld [vmem:[%s2957 + $0x1a0] sm:$0xff]
  %v3011 = vld [vmem:[%s2957 + $0x1a8] sm:$0xff]
  %v3012 = vld [vmem:[%s2957 + $0x1b0] sm:$0xff]
  %v3013 = vld [vmem:[%s2957 + $0x1b8] sm:$0xff]
  %v3014 = vld [vmem:[%s2957 + $0x1c0] sm:$0xff]
  %v3015 = vld [vmem:[%s2957 + $0x1c8] sm:$0xff]
  %v3016 = vld [vmem:[%s2957 + $0x1d0] sm:$0xff]
  %v3017 = vld [vmem:[%s2957 + $0x1d8] sm:$0xff]
  %v3018 = vld [vmem:[%s2957 + $0x1e0] sm:$0xff]
  %v3019 = vld [vmem:[%s2957 + $0x1e8] sm:$0xff]
  %v3020 = vld [vmem:[%s2957 + $0x1f0] sm:$0xff]
  %v3021 = vld [vmem:[%s2957 + $0x1f8] sm:$0xff]
  %v3022 = vld [vmem:[%s2957 + $0x200] sm:$0xff]
  %v3023 = vld [vmem:[%s2957 + $0x208] sm:$0xff]
  %v3024 = vld [vmem:[%s2957 + $0x210] sm:$0xff]
  %v3025 = vld [vmem:[%s2957 + $0x218] sm:$0xff]
  %v3026 = vld [vmem:[%s2957 + $0x220] sm:$0xff]
  %v3027 = vld [vmem:[%s2957 + $0x228] sm:$0xff]
  %v3028 = vld [vmem:[%s2957 + $0x230] sm:$0xff]
  %v3029 = vld [vmem:[%s2957 + $0x238] sm:$0xff]
  %v3030 = vld [vmem:[%s2957 + $0x240] sm:$0xff]
  %v3031 = vld [vmem:[%s2957 + $0x248] sm:$0xff]
  %v3032 = vld [vmem:[%s2957 + $0x250] sm:$0xff]
  %v3033 = vld [vmem:[%s2957 + $0x258] sm:$0xff]
  %v3034 = vld [vmem:[%s2957 + $0x260] sm:$0xff]
  %v3035 = vld [vmem:[%s2957 + $0x268] sm:$0xff]
  %v3036 = vld [vmem:[%s2957 + $0x270] sm:$0xff]
  %v3037 = vld [vmem:[%s2957 + $0x278] sm:$0xff]
  %v3038 = vld [vmem:[%s2957 + $0x280] sm:$0xff]
  %v3039 = vld [vmem:[%s2957 + $0x288] sm:$0xff]
  %v3040 = vld [vmem:[%s2957 + $0x290] sm:$0xff]
  %v3041 = vld [vmem:[%s2957 + $0x298] sm:$0xff]
  %v3042 = vld [vmem:[%s2957 + $0x2a0] sm:$0xff]
  %v3043 = vld [vmem:[%s2957 + $0x2a8] sm:$0xff]
  %v3044 = vld [vmem:[%s2957 + $0x2b0] sm:$0xff]
  %v3045 = vld [vmem:[%s2957 + $0x2b8] sm:$0xff]
  %v3046 = vld [vmem:[%s2957 + $0x2c0] sm:$0xff]
  %v3047 = vld [vmem:[%s2957 + $0x2c8] sm:$0xff]
  %v3048 = vld [vmem:[%s2957 + $0x2d0] sm:$0xff]
  %v3049 = vld [vmem:[%s2957 + $0x2d8] sm:$0xff]
  %v3050 = vld [vmem:[%s2957 + $0x2e0] sm:$0xff]
  %v3051 = vld [vmem:[%s2957 + $0x2e8] sm:$0xff]
  %v3052 = vld [vmem:[%s2957 + $0x2f0] sm:$0xff]
  %v3053 = vld [vmem:[%s2957 + $0x2f8] sm:$0xff]
  %v3054 = vld [vmem:[%s2957 + $0x300] sm:$0xff]
  %v3055 = vld [vmem:[%s2957 + $0x308] sm:$0xff]
  %v3056 = vld [vmem:[%s2957 + $0x310] sm:$0xff]
  %v3057 = vld [vmem:[%s2957 + $0x318] sm:$0xff]
  %v3058 = vld [vmem:[%s2957 + $0x320] sm:$0xff]
  %v3059 = vld [vmem:[%s2957 + $0x328] sm:$0xff]
  %v3060 = vld [vmem:[%s2957 + $0x330] sm:$0xff]
  %v3061 = vld [vmem:[%s2957 + $0x338] sm:$0xff]
  %v3062 = vld [vmem:[%s2957 + $0x340] sm:$0xff]
  %v3063 = vld [vmem:[%s2957 + $0x348] sm:$0xff]
  %v3064 = vld [vmem:[%s2957 + $0x350] sm:$0xff]
  %v3065 = vld [vmem:[%s2957 + $0x358] sm:$0xff]
  %v3066 = vld [vmem:[%s2957 + $0x360] sm:$0xff]
  %v3067 = vld [vmem:[%s2957 + $0x368] sm:$0xff]
  %v3068 = vld [vmem:[%s2957 + $0x370] sm:$0xff]
  %v3069 = vld [vmem:[%s2957 + $0x378] sm:$0xff]
  %v3070 = vld [vmem:[%s2957 + $0x380] sm:$0xff]
  %v3071 = vld [vmem:[%s2957 + $0x388] sm:$0xff]
  %v3072 = vld [vmem:[%s2957 + $0x390] sm:$0xff]
  %v3073 = vld [vmem:[%s2957 + $0x398] sm:$0xff]
  %v3074 = vld [vmem:[%s2957 + $0x3a0] sm:$0xff]
  %v3075 = vld [vmem:[%s2957 + $0x3a8] sm:$0xff]
  %v3076 = vld [vmem:[%s2957 + $0x3b0] sm:$0xff]
  %v3077 = vld [vmem:[%s2957 + $0x3b8] sm:$0xff]
  %v3078 = vld [vmem:[%s2957 + $0x3c0] sm:$0xff]
  %v3079 = vld [vmem:[%s2957 + $0x3c8] sm:$0xff]
  %v3080 = vld [vmem:[%s2957 + $0x3d0] sm:$0xff]
  %v3081 = vld [vmem:[%s2957 + $0x3d8] sm:$0xff]
  %v3082 = vld [vmem:[%s2957 + $0x3e0] sm:$0xff]
  %v3083 = vld [vmem:[%s2957 + $0x3e8] sm:$0xff]
  %v3084 = vld [vmem:[%s2957 + $0x3f0] sm:$0xff]
  %v3085 = vld [vmem:[%s2957 + $0x3f8] sm:$0xff]
  %3086 = vmatpush.msra.mxu0 %v2988
  %3087 = vmatpush.msra.mxu0 %v2986
  %3088 = vmatpush.msra.mxu0 %v2984
  %3089 = vmatpush.msra.mxu0 %v2982
  %3090 = vmatpush.msra.mxu0 %v2980
  %3091 = vmatpush.msra.mxu0 %v2978
  %3092 = vmatpush.msra.mxu0 %v2976
  %3093 = vmatpush.msra.mxu0 %v2974
  %3094 = vmatpush.msra.mxu0 %v2972
  %3095 = vmatpush.msra.mxu0 %v2970
  %3096 = vmatpush.msra.mxu0 %v2968
  %3097 = vmatpush.msra.mxu0 %v2966
  %3098 = vmatpush.msra.mxu0 %v2964
  %3099 = vmatpush.msra.mxu0 %v2962
  %3100 = vmatpush.msra.mxu0 %v2960
  %3101 = vmatpush.msra.mxu0 %v2958
  %3102 = vmatmul.f32.gmra.mxu0 %v2035
  %v3103 = vpop.f32.mrf.mxu0
  %v3104 = vadd.f32 0.0, %v3103
  %3105 = vdwg.mxu0
  %3106 = vmatpush.msra.mxu0 %v3020
  %3107 = vmatpush.msra.mxu0 %v3018
  %3108 = vmatpush.msra.mxu0 %v3016
  %3109 = vmatpush.msra.mxu0 %v3014
  %3110 = vmatpush.msra.mxu0 %v3012
  %3111 = vmatpush.msra.mxu0 %v3010
  %3112 = vmatpush.msra.mxu0 %v3008
  %3113 = vmatpush.msra.mxu0 %v3006
  %3114 = vmatpush.msra.mxu0 %v3004
  %3115 = vmatpush.msra.mxu0 %v3002
  %3116 = vmatpush.msra.mxu0 %v3000
  %3117 = vmatpush.msra.mxu0 %v2998
  %3118 = vmatpush.msra.mxu0 %v2996
  %3119 = vmatpush.msra.mxu0 %v2994
  %3120 = vmatpush.msra.mxu0 %v2992
  %3121 = vmatpush.msra.mxu0 %v2990
  %3122 = vmatmul.f32.gmra.mxu0 %v2036
  %v3123 = vpop.f32.mrf.mxu0
  %v3124 = vadd.f32 %v3104, %v3123
  %3125 = vdwg.mxu0
  %3126 = vmatpush.msra.mxu0 %v3052
  %3127 = vmatpush.msra.mxu0 %v3050
  %3128 = vmatpush.msra.mxu0 %v3048
  %3129 = vmatpush.msra.mxu0 %v3046
  %3130 = vmatpush.msra.mxu0 %v3044
  %3131 = vmatpush.msra.mxu0 %v3042
  %3132 = vmatpush.msra.mxu0 %v3040
  %3133 = vmatpush.msra.mxu0 %v3038
  %3134 = vmatpush.msra.mxu0 %v3036
  %3135 = vmatpush.msra.mxu0 %v3034
  %3136 = vmatpush.msra.mxu0 %v3032
  %3137 = vmatpush.msra.mxu0 %v3030
  %3138 = vmatpush.msra.mxu0 %v3028
  %3139 = vmatpush.msra.mxu0 %v3026
  %3140 = vmatpush.msra.mxu0 %v3024
  %3141 = vmatpush.msra.mxu0 %v3022
  %3142 = vmatmul.f32.gmra.mxu0 %v2037
  %v3143 = vpop.f32.mrf.mxu0
  %v3144 = vadd.f32 %v3124, %v3143
  %3145 = vdwg.mxu0
  %3146 = vmatpush.msra.mxu0 %v3084
  %3147 = vmatpush.msra.mxu0 %v3082
  %3148 = vmatpush.msra.mxu0 %v3080
  %3149 = vmatpush.msra.mxu0 %v3078
  %3150 = vmatpush.msra.mxu0 %v3076
  %3151 = vmatpush.msra.mxu0 %v3074
  %3152 = vmatpush.msra.mxu0 %v3072
  %3153 = vmatpush.msra.mxu0 %v3070
  %3154 = vmatpush.msra.mxu0 %v3068
  %3155 = vmatpush.msra.mxu0 %v3066
  %3156 = vmatpush.msra.mxu0 %v3064
  %3157 = vmatpush.msra.mxu0 %v3062
  %3158 = vmatpush.msra.mxu0 %v3060
  %3159 = vmatpush.msra.mxu0 %v3058
  %3160 = vmatpush.msra.mxu0 %v3056
  %3161 = vmatpush.msra.mxu0 %v3054
  %3162 = vmatmul.f32.gmra.mxu0 %v2038
  %v3163 = vpop.f32.mrf.mxu0
  %v3164 = vadd.f32 %v3144, %v3163
  %3165 = vdwg.mxu0
  %3166 = vmatpush.msra.mxu0 %v2989
  %3167 = vmatpush.msra.mxu0 %v2987
  %3168 = vmatpush.msra.mxu0 %v2985
  %3169 = vmatpush.msra.mxu0 %v2983
  %3170 = vmatpush.msra.mxu0 %v2981
  %3171 = vmatpush.msra.mxu0 %v2979
  %3172 = vmatpush.msra.mxu0 %v2977
  %3173 = vmatpush.msra.mxu0 %v2975
  %3174 = vmatpush.msra.mxu0 %v2973
  %3175 = vmatpush.msra.mxu0 %v2971
  %3176 = vmatpush.msra.mxu0 %v2969
  %3177 = vmatpush.msra.mxu0 %v2967
  %3178 = vmatpush.msra.mxu0 %v2965
  %3179 = vmatpush.msra.mxu0 %v2963
  %3180 = vmatpush.msra.mxu0 %v2961
  %3181 = vmatpush.msra.mxu0 %v2959
  %3182 = vmatmul.f32.gmra.mxu0 %v2035
  %v3183 = vpop.f32.mrf.mxu0
  %v3184 = vadd.f32 0.0, %v3183
  %3185 = vdwg.mxu0
  %3186 = vmatpush.msra.mxu0 %v3021
  %3187 = vmatpush.msra.mxu0 %v3019
  %3188 = vmatpush.msra.mxu0 %v3017
  %3189 = vmatpush.msra.mxu0 %v3015
  %3190 = vmatpush.msra.mxu0 %v3013
  %3191 = vmatpush.msra.mxu0 %v3011
  %3192 = vmatpush.msra.mxu0 %v3009
  %3193 = vmatpush.msra.mxu0 %v3007
  %3194 = vmatpush.msra.mxu0 %v3005
  %3195 = vmatpush.msra.mxu0 %v3003
  %3196 = vmatpush.msra.mxu0 %v3001
  %3197 = vmatpush.msra.mxu0 %v2999
  %3198 = vmatpush.msra.mxu0 %v2997
  %3199 = vmatpush.msra.mxu0 %v2995
  %3200 = vmatpush.msra.mxu0 %v2993
  %3201 = vmatpush.msra.mxu0 %v2991
  %3202 = vmatmul.f32.gmra.mxu0 %v2036
  %v3203 = vpop.f32.mrf.mxu0
  %v3204 = vadd.f32 %v3184, %v3203
  %3205 = vdwg.mxu0
  %3206 = vmatpush.msra.mxu0 %v3053
  %3207 = vmatpush.msra.mxu0 %v3051
  %3208 = vmatpush.msra.mxu0 %v3049
  %3209 = vmatpush.msra.mxu0 %v3047
  %3210 = vmatpush.msra.mxu0 %v3045
  %3211 = vmatpush.msra.mxu0 %v3043
  %3212 = vmatpush.msra.mxu0 %v3041
  %3213 = vmatpush.msra.mxu0 %v3039
  %3214 = vmatpush.msra.mxu0 %v3037
  %3215 = vmatpush.msra.mxu0 %v3035
  %3216 = vmatpush.msra.mxu0 %v3033
  %3217 = vmatpush.msra.mxu0 %v3031
  %3218 = vmatpush.msra.mxu0 %v3029
  %3219 = vmatpush.msra.mxu0 %v3027
  %3220 = vmatpush.msra.mxu0 %v3025
  %3221 = vmatpush.msra.mxu0 %v3023
  %3222 = vmatmul.f32.gmra.mxu0 %v2037
  %v3223 = vpop.f32.mrf.mxu0
  %v3224 = vadd.f32 %v3204, %v3223
  %3225 = vdwg.mxu0
  %3226 = vmatpush.msra.mxu0 %v3085
  %3227 = vmatpush.msra.mxu0 %v3083
  %3228 = vmatpush.msra.mxu0 %v3081
  %3229 = vmatpush.msra.mxu0 %v3079
  %3230 = vmatpush.msra.mxu0 %v3077
  %3231 = vmatpush.msra.mxu0 %v3075
  %3232 = vmatpush.msra.mxu0 %v3073
  %3233 = vmatpush.msra.mxu0 %v3071
  %3234 = vmatpush.msra.mxu0 %v3069
  %3235 = vmatpush.msra.mxu0 %v3067
  %3236 = vmatpush.msra.mxu0 %v3065
  %3237 = vmatpush.msra.mxu0 %v3063
  %3238 = vmatpush.msra.mxu0 %v3061
  %3239 = vmatpush.msra.mxu0 %v3059
  %3240 = vmatpush.msra.mxu0 %v3057
  %3241 = vmatpush.msra.mxu0 %v3055
  %3242 = vmatmul.f32.gmra.mxu0 %v2038
  %v3243 = vpop.f32.mrf.mxu0
  %v3244 = vadd.f32 %v3224, %v3243
  %3245 = vdwg.mxu0
  %v3246 = vld [vmem:[#allocation2] sm:$0xc0]
  %v3247 = vld [vmem:[#allocation2 + $0x8] sm:$0xc0]
  %v3248 = vld [vmem:[#allocation2 + $0x10] sm:$0x3f]
  %v3249 = vld [vmem:[#allocation2 + $0x18] sm:$0x3f]
  %v3252 = vrot.slane %v3164, 2
  %v3253 = vrot.slane %v3244, 2
  %v3256 = vadd.f32 %v3246, %v3252
  %v3257 = vadd.f32 %v3247, %v3253
  %v3258 = vadd.f32 %v3248, %v3252
  %v3259 = vadd.f32 %v3249, %v3253
  %3260 = vst [vmem:[#allocation2] sm:$0xc0] %v3256
  %vm3261 = vcmask 785414
  %3262 = vst.msk [vmem:[#allocation2 + $0x8] sm:$0xc0] %vm3261, %v3257
  %3263 = vst [vmem:[#allocation2 + $0x10] sm:$0x3f] %v3258
  %3264 = vst.msk [vmem:[#allocation2 + $0x18] sm:$0x3f] %vm2043, %v3259
  %v3265 = vld [vmem:[#allocation2] sm:$0xff]
  %v3266 = vld [vmem:[#allocation2 + $0x8] sm:$0xff]
  %v3267 = vld [vmem:[#allocation2 + $0x10] sm:$0x3f]
  %v3268 = vld [vmem:[#allocation2 + $0x18] sm:$0x3f]
  %v3269 = vld [vmem:[%s15] sm:$0x3]
  %v3271 = vperm.slane %v3269, 0
  %v3272 = vperm.slane %v3269, 1
  %v3275 = vadd.f32 %v3265, %v3271
  %v3276 = vadd.f32 %v3266, %v3272
  %v3277 = vadd.f32 %v3267, %v3271
  %v3278 = vadd.f32 %v3268, %v3272
  %v3279 = vsel %vm1928, %v3277, 0.0
  %v3280 = vadd.f32 %v3275, %v3279
  %v3281 = vrot.slane %v3280, 4
  %v3282 = vadd.f32 %v3280, %v3281
  %v3283 = vrot.slane %v3282, 2
  %v3284 = vadd.f32 %v3282, %v3283
  %v3285 = vrot.slane %v3284, 1
  %v3286 = vadd.f32 %v3284, %v3285
  %v3287 = vsel %vm2040, %v3276, 0.0
  %v3288 = vsel %vm2043, %v3278, 0.0
  %v3289 = vadd.f32 %v3287, %v3288
  %v3290 = vrot.slane %v3289, 4
  %v3291 = vadd.f32 %v3289, %v3290
  %v3292 = vrot.slane %v3291, 2
  %v3293 = vadd.f32 %v3291, %v3292
  %v3294 = vrot.slane %v3293, 1
  %v3295 = vadd.f32 %v3293, %v3294
  %v3296 = vmul.f32 %v3275, %v3275
  %v3297 = vmul.f32 %v3276, %v3276
  %v3298 = vmul.f32 %v3277, %v3277
  %v3299 = vmul.f32 %v3278, %v3278
  %v3300 = vsel %vm1928, %v3298, 0.0
  %v3301 = vadd.f32 %v3296, %v3300
  %v3302 = vrot.slane %v3301, 4
  %v3303 = vadd.f32 %v3301, %v3302
  %v3304 = vrot.slane %v3303, 2
  %v3305 = vadd.f32 %v3303, %v3304
  %v3306 = vrot.slane %v3305, 1
  %v3307 = vadd.f32 %v3305, %v3306
  %v3308 = vsel %vm2040, %v3297, 0.0
  %v3309 = vsel %vm2043, %v3299, 0.0
  %v3310 = vadd.f32 %v3308, %v3309
  %v3311 = vrot.slane %v3310, 4
  %v3312 = vadd.f32 %v3310, %v3311
  %v3313 = vrot.slane %v3312, 2
  %v3314 = vadd.f32 %v3312, %v3313
  %v3315 = vrot.slane %v3314, 1
  %v3316 = vadd.f32 %v3314, %v3315
  %3318 = vrot.lane.b32.xlu0 %v3286, 96
  %v3319 = vpop.permute.xlu0 %3318
  %v3321 = vadd.f32 %v3286, %v3319
  %3323 = vrot.lane.b32.xlu0 %v3307, 96
  %v3324 = vpop.permute.xlu0 %3323
  %v3326 = vadd.f32 %v3307, %v3324
  %3327 = vrot.lane.b32.xlu0 %v3286, 64
  %v3328 = vpop.permute.xlu0 %3327
  %v3330 = vadd.f32 %v3321, %v3328
  %3331 = vrot.lane.b32.xlu0 %v3307, 64
  %v3332 = vpop.permute.xlu0 %3331
  %v3334 = vadd.f32 %v3326, %v3332
  %3335 = vrot.lane.b32.xlu0 %v3286, 32
  %v3336 = vpop.permute.xlu0 %3335
  %v3338 = vadd.f32 %v3330, %v3336
  %3339 = vrot.lane.b32.xlu0 %v3307, 32
  %v3340 = vpop.permute.xlu0 %3339
  %v3342 = vadd.f32 %v3334, %v3340
  %v3343 = vadd.f32 %v3338, %v3295
  %v3344 = vadd.f32 %v3342, %v3316
  %3346 = vrot.lane.b32.xlu0 %v3295, 96
  %v3347 = vpop.permute.xlu0 %3346
  %v3349 = vadd.f32 %v3343, %v3347
  %3351 = vrot.lane.b32.xlu0 %v3316, 96
  %v3352 = vpop.permute.xlu0 %3351
  %v3354 = vadd.f32 %v3344, %v3352
  %3355 = vrot.lane.b32.xlu0 %v3295, 64
  %v3356 = vpop.permute.xlu0 %3355
  %v3358 = vadd.f32 %v3349, %v3356
  %3359 = vrot.lane.b32.xlu0 %v3316, 64
  %v3360 = vpop.permute.xlu0 %3359
  %v3362 = vadd.f32 %v3354, %v3360
  %v3363 = vmul.f32 %v3358, 0.010204081
  %v3364 = vmul.f32 %v3362, 0.010204081
  %v3365 = vmul.f32 %v3363, %v3363
  %v3366 = vsub.f32 %v3364, %v3365
  %v3367 = vld [vmem:[%s16] sm:$0x1]
  %v3368 = vadd.f32 %v3366, 1e-05
  %v3369 = vrsqrt.pop %v3368
  %v3370 = vmul.f32 %v3369, %v3368
  %v3371 = vmul.f32 %v3370, %v3369
  %v3372 = vmul.f32 0.5, %v3371
  %v3373 = vsub.f32 1.5, %v3372
  %v3374 = vmul.f32 %v3369, %v3373
  %vm3375 = vweird.f32 %v3368
  %vm3376 = vweird.f32 %v3369
  %vm3377 = vmor %vm3375, %vm3376
  %v3378 = vsel %vm3377, %v3369, %v3374
  %v3379 = vmul.f32 %v3367, %v3378
  %v3380 = vld [vmem:[%s17] sm:$0x1]
  %v3381 = vmul.f32 %v3363, %v3379
  %v3382 = vsub.f32 %v3380, %v3381
  %v3384 = vperm.slane %v3379, 0
  %3385 = vrot.lane.b32.xlu0 %v3384, 32
  %v3386 = vpop.permute.xlu0 %3385
  %3388 = vrot.lane.b32.xlu0 %v3384, 64
  %v3389 = vpop.permute.xlu0 %3388
  %3391 = vrot.lane.b32.xlu0 %v3384, 96
  %v3392 = vpop.permute.xlu0 %3391
  %v3394 = vsel %vm138, %v3379, %v3386
  %v3395 = vsel %vm595, %v3394, %v3389
  %v3396 = vsel %vm2040, %v3395, %v3392
  %v3398 = vperm.slane %v3382, 0
  %3399 = vrot.lane.b32.xlu0 %v3398, 32
  %v3400 = vpop.permute.xlu0 %3399
  %3402 = vrot.lane.b32.xlu0 %v3398, 64
  %v3403 = vpop.permute.xlu0 %3402
  %3405 = vrot.lane.b32.xlu0 %v3398, 96
  %v3406 = vpop.permute.xlu0 %3405
  %v3408 = vsel %vm138, %v3382, %v3400
  %v3409 = vsel %vm595, %v3408, %v3403
  %v3410 = vsel %vm2040, %v3409, %v3406
  %v3411 = vperm.slane %v3396, 0
  %v3412 = vperm.slane %v3395, 0
  %v3413 = vmul.f32 %v3275, %v3411
  %v3414 = vmul.f32 %v3276, %v3412
  %v3415 = vmul.f32 %v3277, %v3411
  %v3416 = vmul.f32 %v3278, %v3412
  %v3417 = vperm.slane %v3410, 0
  %v3418 = vperm.slane %v3409, 0
  %v3419 = vadd.f32 %v3413, %v3417
  %v3420 = vadd.f32 %v3414, %v3418
  %v3421 = vadd.f32 %v3415, %v3417
  %v3422 = vadd.f32 %v3416, %v3418
  %v3423 = vmax.f32 %v3419, 0.0
  %v3424 = vmax.f32 %v3420, 0.0
  %v3425 = vmax.f32 %v3421, 0.0
  %v3426 = vmax.f32 %v3422, 0.0
  %v3427 = vld [vmem:[%s18] sm:$0xff]
  %v3428 = vld [vmem:[%s18 + $0x8] sm:$0xff]
  %v3429 = vld [vmem:[%s18 + $0x10] sm:$0xff]
  %v3430 = vld [vmem:[%s18 + $0x18] sm:$0xff]
  %v3431 = vld [vmem:[%s18 + $0x20] sm:$0xff]
  %v3432 = vld [vmem:[%s18 + $0x28] sm:$0xff]
  %v3433 = vld [vmem:[%s18 + $0x30] sm:$0xff]
  %v3434 = vld [vmem:[%s18 + $0x38] sm:$0xff]
  %v3435 = vld [vmem:[%s18 + $0x40] sm:$0xff]
  %v3436 = vld [vmem:[%s18 + $0x48] sm:$0xff]
  %v3437 = vld [vmem:[%s18 + $0x50] sm:$0xff]
  %v3438 = vld [vmem:[%s18 + $0x58] sm:$0xff]
  %v3439 = vld [vmem:[%s18 + $0x60] sm:$0xff]
  %v3440 = vld [vmem:[%s18 + $0x68] sm:$0xff]
  %v3441 = vld [vmem:[%s18 + $0x70] sm:$0xff]
  %v3442 = vld [vmem:[%s18 + $0x78] sm:$0xff]
  %v3443 = vld [vmem:[%s18 + $0x80] sm:$0xff]
  %v3444 = vld [vmem:[%s18 + $0x88] sm:$0xff]
  %v3445 = vld [vmem:[%s18 + $0x90] sm:$0xff]
  %v3446 = vld [vmem:[%s18 + $0x98] sm:$0xff]
  %v3447 = vld [vmem:[%s18 + $0xa0] sm:$0xff]
  %v3448 = vld [vmem:[%s18 + $0xa8] sm:$0xff]
  %v3449 = vld [vmem:[%s18 + $0xb0] sm:$0xff]
  %v3450 = vld [vmem:[%s18 + $0xb8] sm:$0xff]
  %v3451 = vld [vmem:[%s18 + $0xc0] sm:$0xff]
  %v3452 = vld [vmem:[%s18 + $0xc8] sm:$0xff]
  %v3453 = vld [vmem:[%s18 + $0xd0] sm:$0xff]
  %v3454 = vld [vmem:[%s18 + $0xd8] sm:$0xff]
  %v3455 = vld [vmem:[%s19] sm:$0x1]
  %v3457 = vperm.slane %v3455, 0
  %v3460 = vsel %vm2040, %v3424, 0
  %v3463 = vsel %vm2040, %v3426, 0
  %3465 = vmatpush.msra.mxu0 %v3442
  %3466 = vmatpush.msra.mxu0 %v3441
  %3467 = vmatpush.msra.mxu0 %v3440
  %3468 = vmatpush.msra.mxu0 %v3439
  %3469 = vmatpush.msra.mxu0 %v3438
  %3470 = vmatpush.msra.mxu0 %v3437
  %3471 = vmatpush.msra.mxu0 %v3436
  %3472 = vmatpush.msra.mxu0 %v3435
  %3473 = vmatpush.msra.mxu0 %v3434
  %3474 = vmatpush.msra.mxu0 %v3433
  %3475 = vmatpush.msra.mxu0 %v3432
  %3476 = vmatpush.msra.mxu0 %v3431
  %3477 = vmatpush.msra.mxu0 %v3430
  %3478 = vmatpush.msra.mxu0 %v3429
  %3479 = vmatpush.msra.mxu0 %v3428
  %3480 = vmatpush.msra.mxu0 %v3427
  %3481 = vmatmul.f32.gmra.mxu0 %v3423
  %v3482 = vpop.f32.mrf.mxu0
  %v3483 = vadd.f32 %v3457, %v3482
  %3484 = vmatmul.f32.gmra.mxu0 %v3425
  %v3485 = vpop.f32.mrf.mxu0
  %v3486 = vadd.f32 %v3457, %v3485
  %3487 = vdwg.mxu0
  %3488 = vmatpush.msra.mxu0 0.0
  %3489 = vmatpush.msra.mxu0 0.0
  %3490 = vmatpush.msra.mxu0 0.0
  %3491 = vmatpush.msra.mxu0 0.0
  %3492 = vmatpush.msra.mxu0 %v3454
  %3493 = vmatpush.msra.mxu0 %v3453
  %3494 = vmatpush.msra.mxu0 %v3452
  %3495 = vmatpush.msra.mxu0 %v3451
  %3496 = vmatpush.msra.mxu0 %v3450
  %3497 = vmatpush.msra.mxu0 %v3449
  %3498 = vmatpush.msra.mxu0 %v3448
  %3499 = vmatpush.msra.mxu0 %v3447
  %3500 = vmatpush.msra.mxu0 %v3446
  %3501 = vmatpush.msra.mxu0 %v3445
  %3502 = vmatpush.msra.mxu0 %v3444
  %3503 = vmatpush.msra.mxu0 %v3443
  %3504 = vmatmul.f32.gmra.mxu0 %v3460
  %v3505 = vpop.f32.mrf.mxu0
  %v3506 = vadd.f32 %v3483, %v3505
  %3507 = vmatmul.f32.gmra.mxu0 %v3463
  %v3508 = vpop.f32.mrf.mxu0
  %v3509 = vadd.f32 %v3486, %v3508
  %3510 = vdwg.mxu0
  %v3511 = vxor.u32 %v3506, 2147483648
  %v3512 = vxor.u32 %v3509, 2147483648
  %v3513 = vmul.f32 %v3511, 1.442695
  %v3514 = vpow.pop %v3513
  %v3515 = vmul.f32 %v3512, 1.442695
  %v3516 = vpow.pop %v3515
  %v3517 = vadd.f32 %v3514, 1.0
  %v3518 = vadd.f32 %v3516, 1.0
  %v3519 = vrcp.pop %v3517
  %v3520 = vmul.f32 %v3517, %v3519
  %v3521 = vsub.f32 1.0, %v3520
  %v3522 = vmul.f32 %v3519, %v3521
  %v3523 = vadd.f32 %v3519, %v3522
  %vm3524 = vweird.f32 %v3517
  %vm3525 = vweird.f32 %v3519
  %vm3526 = vmor %vm3524, %vm3525
  %v3527 = vsel %vm3526, %v3519, %v3523
  %v3528 = vand.u32 2147483647, %v3517
  %vm3529 = vcmp.eq.f32.partialorder %v3528, 8.507059e+37
  %v3530 = vand.u32 %v3517, 2147483648
  %v3531 = vor.u32 1.1754944e-38, %v3530
  %v3532 = vsel %vm3529, %v3531, %v3527
  %v3533 = vmul.f32 1.0, %v3532
  %v3534 = vrcp.pop %v3518
  %v3535 = vmul.f32 %v3518, %v3534
  %v3536 = vsub.f32 1.0, %v3535
  %v3537 = vmul.f32 %v3534, %v3536
  %v3538 = vadd.f32 %v3534, %v3537
  %vm3539 = vweird.f32 %v3518
  %vm3540 = vweird.f32 %v3534
  %vm3541 = vmor %vm3539, %vm3540
  %v3542 = vsel %vm3541, %v3534, %v3538
  %v3543 = vand.u32 2147483647, %v3518
  %vm3544 = vcmp.eq.f32.partialorder %v3543, 8.507059e+37
  %v3545 = vand.u32 %v3518, 2147483648
  %v3546 = vor.u32 1.1754944e-38, %v3545
  %v3547 = vsel %vm3544, %v3546, %v3542
  %v3548 = vmul.f32 1.0, %v3547
  %vm3549 = vcmask 228352
  %3550 = vst.msk [vmem:[%s21] sm:$0xff] %vm3549, %v3533
  %vm3551 = vcmask 226304
  %3552 = vst.msk [vmem:[%s21 + $0x8] sm:$0x3f] %vm3551, %v3548
  // Predicated region
  $region82: #{vae_pallas_forward.1} parent=0 // pred_check
    _
  $region83: #{vae_pallas_forward.1} parent=0 // pred_check_branch
    %3554 = sbr.rel (0) target = $region85
  $region84: #{vae_pallas_forward.1} parent=0 // pred_region
    _
  $region85: #{vae_pallas_forward.1} parent=0 // pred_fallthru
    _
  // Predicated region
  $region86: #{vae_pallas_forward.1} parent=0 // pred_check
    _
  $region87: #{vae_pallas_forward.1} parent=0 // pred_check_branch
    %3556 = sbr.rel (0) target = $region89
  $region88: #{vae_pallas_forward.1} parent=0 // pred_region
    _
  $region89: #{vae_pallas_forward.1} parent=0 // pred_fallthru
    _
  // Predicated region
  $region90: #{vae_pallas_forward.1} parent=0 // pred_check
    _
  $region91: #{vae_pallas_forward.1} parent=0 // pred_check_branch
    %3558 = sbr.rel (0) target = $region93
  $region92: #{vae_pallas_forward.1} parent=0 // pred_region
    _
  $region93: #{vae_pallas_forward.1} parent=0 // pred_fallthru
    _
  // Predicated region
  $region94: #{vae_pallas_forward.1} parent=0 // pred_check
    _
  $region95: #{vae_pallas_forward.1} parent=0 // pred_check_branch
    %3560 = sbr.rel (0) target = $region97
  $region96: #{vae_pallas_forward.1} parent=0 // pred_region
    _
  $region97: #{vae_pallas_forward.1} parent=0 // pred_fallthru
    _

</llo_original>
